<compile_context>
chip_gen: v6e
topology: v6e:2x2x1
jax: 0.10.0
libtpu: 0.0.40
codegen_flags: <defaults>
</compile_context>

<pallas_src>
import functools

import jax
import jax.numpy as jnp
import numpy as np
from jax import lax
from jax.experimental import pallas as pl
from jax.experimental.pallas import tpu as pltpu


def _round_up(x, m):
    return (x + m - 1) // m * m


def _vmem_estimate(tc, bp, hp, vp, csize, osize):
    """Rough per-kernel VMEM footprint (bytes) for a chunk length of `tc` steps."""
    x_buf = 2 * tc * bp * hp * csize          # double-buffered x chunk (pipelined in)
    o_buf = 2 * bp * tc * vp * osize          # double-buffered logits chunk (pipelined out)
    xp = tc * bp * 4 * hp * csize             # x-projection scratch
    hall = tc * bp * hp * csize               # per-chunk hidden outputs
    fc_tmp = tc * bp * vp * 4                 # f32 fc result before the output cast
    weights = (2 * hp * 4 * hp + hp * vp) * csize   # single-buffered weight scratch
    state = 4 * bp * hp * 4                   # h/c scratch + hn/cn output buffers
    misc = 2 * 8 * (4 * hp + vp) * 4 + (2 << 20)    # biases, gate temporaries, slack
    return x_buf + o_buf + xp + hall + fc_tmp + weights + state + misc


def _choose_chunk(T, bp, hp, vp, csize, osize, max_chunk, budget):
    """Largest multiple-of-8 chunk length <= max_chunk that fits the VMEM budget."""
    cap = min(_round_up(max(max_chunk, 8), 8), _round_up(T, 8))
    tc = 8
    for cand in range(8, cap + 1, 8):
        if _vmem_estimate(cand, bp, hp, vp, csize, osize) <= budget:
            tc = cand
    return tc


def lstm_fc_kernel(x_ref, wih_hbm, whh_hbm, b_ref, wfc_hbm, bfc_ref, h0_hbm, c0_hbm,
                   logits_ref, hn_ref, cn_ref,
                   wih_v, whh_v, wfc_v, h_sc, c_sc, xp_sc, hall_sc,
                   *, seq_len, unroll):
    """One grid step == one chunk of Tc timesteps.

    x_ref:        (Tc*Bp, H)   time-major flattened embedded inputs (pipelined chunk)
    wih/whh/wfc_hbm: HBM refs for the invariant weights (copied once to scratch)
    b_ref:        (1, 4*Hp)    b_ih + b_hh (gate-padded, f32)
    bfc_ref:      (1, Vp)      fc bias (padded, f32)
    h0/c0_hbm:    (Bp, Hp)     initial state in HBM (copied once into h_sc/c_sc)
    logits_ref:   (Bp, Tc, Vp) batch-major logits chunk (lane-dense)
    hn/cn_ref:    (Bp, Hp)     final state outputs (written on last chunk)
    wih_v/whh_v/wfc_v: single-buffered VMEM weight copies (compute dtype)
    h_sc/c_sc:    (Bp, Hp) f32 recurrent state, persists across grid steps
    xp_sc:        (Tc*Bp, 4Hp) precomputed x @ W_ih + b (compute dtype)
    hall_sc:      (Tc*Bp, Hp)  per-chunk hidden outputs (compute dtype)
    """
    i = pl.program_id(0)
    bp, hp = h_sc.shape
    tc = hall_sc.shape[0] // bp

    # One-time setup: weights -> single-buffered VMEM, state <- initial h/c.
    @pl.when(i == 0)
    def _():
        pltpu.sync_copy(wih_hbm, wih_v)
        pltpu.sync_copy(whh_hbm, whh_v)
        pltpu.sync_copy(wfc_hbm, wfc_v)
        pltpu.sync_copy(h0_hbm, h_sc)
        pltpu.sync_copy(c0_hbm, c_sc)

    # Non-recurrent input projection for the whole chunk (bias folded in):
    # one big MXU matmul, off the serial critical path.
    xp_sc[...] = (
        jnp.dot(x_ref[...], wih_v[...], preferred_element_type=jnp.float32)
        + b_ref[...]).astype(xp_sc.dtype)

    def step(t, carry):
        r = pl.multiple_of(t * bp, bp)       # Bp is a multiple of 8 -> aligned rows
        h = h_sc[...]
        c = c_sc[...]
        gates = (xp_sc[pl.ds(r, bp), :].astype(jnp.float32)
                 + jnp.dot(h.astype(whh_v.dtype), whh_v[...],
                           preferred_element_type=jnp.float32))      # (Bp, 4Hp) f32
        # Gate order i, f, g, o (PyTorch); slices land on 128-lane boundaries.
        i_g = jax.nn.sigmoid(gates[:, 0 * hp:1 * hp])
        f_g = jax.nn.sigmoid(gates[:, 1 * hp:2 * hp])
        g_g = jnp.tanh(gates[:, 2 * hp:3 * hp])
        o_g = jax.nn.sigmoid(gates[:, 3 * hp:4 * hp])
        c_new = f_g * c + i_g * g_g
        h_new = o_g * jnp.tanh(c_new)
        hall_sc[pl.ds(r, bp), :] = h_new.astype(hall_sc.dtype)
        # T is padded up to a multiple of Tc; do not advance the state on pad steps
        # so h_n / c_n are exactly the state after timestep T-1.
        @pl.when(i * tc + t < seq_len)
        def _():
            h_sc[...] = h_new
            c_sc[...] = c_new
        return carry

    lax.fori_loop(0, tc, step, 0, unroll=unroll)

    # Batched fc projection for the whole chunk (one MXU matmul), then scatter the
    # time-major rows (row = t*Bp + b) into the batch-major (Bp, Tc, Vp) block so
    # no XLA transpose of the full logits tensor is needed outside the kernel.
    chunk_logits = (
        jnp.dot(hall_sc[...], wfc_v[...], preferred_element_type=jnp.float32)
        + bfc_ref[...]).astype(logits_ref.dtype)          # (Tc*Bp, Vp)
    for t in range(tc):                                   # static, tile-aligned slices
        logits_ref[:, t:t + 1, :] = chunk_logits[t * bp:(t + 1) * bp, :][:, None, :]

    @pl.when(i == pl.num_programs(0) - 1)
    def _():
        hn_ref[...] = h_sc[...]
        cn_ref[...] = c_sc[...]


@functools.partial(jax.jit, static_argnames=("max_chunk", "compute_dtype",
                                              "out_dtype", "vmem_budget_bytes"))
def char_lstm_forward(tokens, params, h0=None, c0=None, *,
                      max_chunk=32, compute_dtype=jnp.bfloat16,
                      out_dtype=jnp.float32, vmem_budget_bytes=48 << 20):
    """JAX wrapper reproducing CharLSTM.forward.

    tokens: (B, T) int32
    returns: logits (B, T, V) out_dtype, hidden = (h_n, c_n) each (1, B, H) f32

    compute_dtype (default bf16) is used for the matmul operands only;
    accumulation, gate math and the h/c state remain float32.
    """
    B, T = tokens.shape
    H = params["embed"].shape[1]
    V = params["w_fc"].shape[1]

    Hp = _round_up(H, 128)          # lane-aligned gate width
    Vp = _round_up(V, 128)          # lane-dense logits width
    Bp = _round_up(B, 8)            # sublane-aligned batch

    csize = jnp.dtype(compute_dtype).itemsize
    osize = jnp.dtype(out_dtype).itemsize
    Tc = _choose_chunk(T, Bp, Hp, Vp, csize, osize, max_chunk, vmem_budget_bytes)
    Tp = _round_up(T, Tc)           # padded sequence length (tail masked in-kernel)
    n_chunks = Tp // Tc
    vmem_limit = int(min(max(_vmem_estimate(Tc, Bp, Hp, Vp, csize, osize) * 3 // 2,
                             32 << 20), 120 << 20))

    f32 = jnp.float32

    # ---- parameter padding so gate blocks land on 128-lane boundaries ------
    # (In a real model this prep would be done once, not per forward call.)
    def pad_gate_cols(w):           # (rows, 4H) -> (rows, 4Hp)
        r = w.shape[0]
        return jnp.pad(w.reshape(r, 4, H),
                       ((0, 0), (0, 0), (0, Hp - H))).reshape(r, 4 * Hp)

    w_ih = pad_gate_cols(params["w_ih"].astype(f32)).astype(compute_dtype)   # (H, 4Hp)
    w_hh = jnp.pad(pad_gate_cols(params["w_hh"].astype(f32)),
                   ((0, Hp - H), (0, 0))).astype(compute_dtype)              # (Hp, 4Hp)
    b = pad_gate_cols(params["b"].astype(f32))                               # (1, 4Hp)
    w_fc = jnp.pad(params["w_fc"].astype(f32),
                   ((0, Hp - H), (0, Vp - V))).astype(compute_dtype)         # (Hp, Vp)
    b_fc = jnp.pad(params["b_fc"].astype(f32), ((0, 0), (0, Vp - V)))        # (1, Vp)

    # ---- embedding gather directly into padded time-major flat layout ------
    emb_tm = jnp.take(params["embed"].astype(compute_dtype), tokens.T, axis=0)  # (T,B,H)
    x_flat = jnp.pad(emb_tm, ((0, Tp - T), (0, Bp - B), (0, 0))).reshape(Tp * Bp, H)

    if h0 is None:
        h0 = jnp.zeros((B, H), f32)
    if c0 is None:
        c0 = jnp.zeros((B, H), f32)
    if h0.ndim == 3:
        h0 = h0[0]
    if c0.ndim == 3:
        c0 = c0[0]
    h0p = jnp.pad(h0.astype(f32), ((0, Bp - B), (0, Hp - H)))
    c0p = jnp.pad(c0.astype(f32), ((0, Bp - B), (0, Hp - H)))

    pinned = lambda shape: pl.BlockSpec(shape, lambda i: (0,) * len(shape))
    anyref = lambda: pl.BlockSpec(memory_space=pl.ANY)
    kernel = functools.partial(lstm_fc_kernel, seq_len=T, unroll=8)

    logits_bt, hn, cn = pl.pallas_call(
        kernel,
        out_shape=(
            jax.ShapeDtypeStruct((Bp, Tp, Vp), out_dtype),
            jax.ShapeDtypeStruct((Bp, Hp), f32),
            jax.ShapeDtypeStruct((Bp, Hp), f32),
        ),
        grid_spec=pltpu.PrefetchScalarGridSpec(
            num_scalar_prefetch=0,
            grid=(n_chunks,),
            in_specs=[
                pl.BlockSpec((Tc * Bp, H), lambda i: (i, 0)),   # x chunk (pipelined)
                anyref(),                                       # w_ih (HBM, copied once)
                anyref(),                                       # w_hh (HBM, copied once)
                pinned((1, 4 * Hp)),                            # b_ih + b_hh
                anyref(),                                       # w_fc (HBM, copied once)
                pinned((1, Vp)),                                # b_fc
                anyref(),                                       # h0
                anyref(),                                       # c0
            ],
            out_specs=[
                pl.BlockSpec((Bp, Tc, Vp), lambda i: (0, i, 0)),  # batch-major logits
                pinned((Bp, Hp)),                                 # h_n
                pinned((Bp, Hp)),                                 # c_n
            ],
            scratch_shapes=[
                pltpu.VMEM((H, 4 * Hp), compute_dtype),         # w_ih (single-buffered)
                pltpu.VMEM((Hp, 4 * Hp), compute_dtype),        # w_hh (single-buffered)
                pltpu.VMEM((Hp, Vp), compute_dtype),            # w_fc (single-buffered)
                pltpu.VMEM((Bp, Hp), jnp.float32),              # h carry
                pltpu.VMEM((Bp, Hp), jnp.float32),              # c carry
                pltpu.VMEM((Tc * Bp, 4 * Hp), compute_dtype),   # x-projection chunk
                pltpu.VMEM((Tc * Bp, Hp), compute_dtype),       # hidden outputs chunk
            ],
        ),
        compiler_params=pltpu.CompilerParams(
            dimension_semantics=("arbitrary",),                 # sequential carry over T
            vmem_limit_bytes=vmem_limit),
    )(x_flat, w_ih, w_hh, b, w_fc, b_fc, h0p, c0p)

    logits = logits_bt[:B, :T, :V]            # contiguous padding slice, no transpose
    h_n = hn[:B, :H][None]
    c_n = cn[:B, :H][None]
    return logits, (h_n, c_n)


def init_params(key, vocab_size, hidden_size):
    """Deterministic parameter init mirroring the PyTorch module's shapes."""
    H, V = hidden_size, vocab_size
    k_embed, k_wih, k_whh, k_bih, k_bhh, k_wfc, k_bfc = jax.random.split(key, 7)
    k = 1.0 / np.sqrt(H)
    u = lambda kk, shape: jax.random.uniform(kk, shape, jnp.float32, -k, k)
    embed = jax.random.normal(k_embed, (V, H), jnp.float32)    # nn.Embedding(V, H)
    w_ih_pt = u(k_wih, (4 * H, H))                             # torch weight_ih_l0
    w_hh_pt = u(k_whh, (4 * H, H))                             # torch weight_hh_l0
    b_ih = u(k_bih, (4 * H,))
    b_hh = u(k_bhh, (4 * H,))
    w_fc_pt = u(k_wfc, (V, H))                                 # nn.Linear(H, V)
    b_fc = u(k_bfc, (V,))
    return {
        "embed": embed,
        "w_ih": w_ih_pt.T,                    # (H, 4H)
        "w_hh": w_hh_pt.T,                    # (H, 4H)
        "b": (b_ih + b_hh)[None, :],          # (1, 4H)
        "w_fc": w_fc_pt.T,                    # (H, V)
        "b_fc": b_fc[None, :],                # (1, V)
    }


def reference_forward(tokens, params):
    """Pure-JAX f32 reference of the same forward pass (for validation)."""
    H = params["embed"].shape[1]
    hi = lax.Precision.HIGHEST
    emb = jnp.take(params["embed"], tokens, axis=0)            # (B, T, H)
    B = tokens.shape[0]
    h = jnp.zeros((B, H), jnp.float32)
    c = jnp.zeros((B, H), jnp.float32)

    def step(carry, x_t):
        h, c = carry
        gates = (jnp.dot(x_t, params["w_ih"], precision=hi)
                 + jnp.dot(h, params["w_hh"], precision=hi) + params["b"])
        i_g = jax.nn.sigmoid(gates[:, 0 * H:1 * H])
        f_g = jax.nn.sigmoid(gates[:, 1 * H:2 * H])
        g_g = jnp.tanh(gates[:, 2 * H:3 * H])
        o_g = jax.nn.sigmoid(gates[:, 3 * H:4 * H])
        c_new = f_g * c + i_g * g_g
        h_new = o_g * jnp.tanh(c_new)
        return (h_new, c_new), h_new

    (h_n, c_n), hs = lax.scan(step, (h, c), jnp.transpose(emb, (1, 0, 2)))
    out = jnp.transpose(hs, (1, 0, 2))                         # (B, T, H)
    logits = jnp.dot(out, params["w_fc"], precision=hi) + params["b_fc"]
    return logits, (h_n[None], c_n[None])


if __name__ == "__main__":
    VOCAB, HIDDEN, BATCH, SEQ = 16, 32, 2, 20   # SEQ=20 with Tc=8 exercises chunk
                                                # carry AND the padded-tail masking.
    key = jax.random.PRNGKey(0)
    k_params, k_tok = jax.random.split(key)
    params = init_params(k_params, VOCAB, HIDDEN)
    tokens = jax.random.randint(k_tok, (BATCH, SEQ), 0, VOCAB, dtype=jnp.int32)

    ref_logits, (ref_h, ref_c) = reference_forward(tokens, params)

    # f32-operand path: strict numerical check against the f32 reference.
    logits32, (h32, c32) = char_lstm_forward(tokens, params, max_chunk=8,
                                             compute_dtype=jnp.float32)
    jax.block_until_ready((logits32, h32, c32))
    np.testing.assert_allclose(np.asarray(logits32), np.asarray(ref_logits),
                               rtol=1e-4, atol=1e-4)
    np.testing.assert_allclose(np.asarray(h32), np.asarray(ref_h), rtol=1e-4, atol=1e-4)
    np.testing.assert_allclose(np.asarray(c32), np.asarray(ref_c), rtol=1e-4, atol=1e-4)

    # Default path (bf16 matmul operands, f32 accumulation): loose sanity check.
    logits, (h_n, c_n) = char_lstm_forward(tokens, params, max_chunk=8)
    jax.block_until_ready((logits, h_n, c_n))
    np.testing.assert_allclose(np.asarray(logits), np.asarray(ref_logits),
                               rtol=2e-1, atol=2e-1)
    np.testing.assert_allclose(np.asarray(h_n), np.asarray(ref_h), rtol=2e-1, atol=2e-1)
    np.testing.assert_allclose(np.asarray(c_n), np.asarray(ref_c), rtol=2e-1, atol=2e-1)

    assert logits.shape == (BATCH, SEQ, VOCAB) and logits.dtype == jnp.float32
    assert h_n.shape == (1, BATCH, HIDDEN) and c_n.shape == (1, BATCH, HIDDEN)
    print("KERNEL_OK")
</pallas_src>

<mosaic_0001>
module attributes {stable_mosaic.version = 11 : i64} {
  func.func @lstm_fc_kernel(%arg0: i32, %arg1: memref<64x32xf32, #tpu.memory_space<vmem>>, %arg2: memref<32x512xf32, #tpu.memory_space<any>>, %arg3: memref<128x512xf32, #tpu.memory_space<any>>, %arg4: memref<1x512xf32, #tpu.memory_space<vmem>>, %arg5: memref<128x128xf32, #tpu.memory_space<any>>, %arg6: memref<1x128xf32, #tpu.memory_space<vmem>>, %arg7: memref<8x128xf32, #tpu.memory_space<any>>, %arg8: memref<8x128xf32, #tpu.memory_space<any>>, %arg9: memref<8x8x128xf32, #tpu.memory_space<vmem>>, %arg10: memref<8x128xf32, #tpu.memory_space<vmem>>, %arg11: memref<8x128xf32, #tpu.memory_space<vmem>>, %arg12: memref<32x512xf32, #tpu.memory_space<vmem>>, %arg13: memref<128x512xf32, #tpu.memory_space<vmem>>, %arg14: memref<128x128xf32, #tpu.memory_space<vmem>>, %arg15: memref<8x128xf32, #tpu.memory_space<vmem>>, %arg16: memref<8x128xf32, #tpu.memory_space<vmem>>, %arg17: memref<64x512xf32, #tpu.memory_space<vmem>>, %arg18: memref<64x128xf32, #tpu.memory_space<vmem>>) attributes {dimension_semantics = [#tpu.dimension_semantics<arbitrary>], iteration_bounds = array<i64: 3>, scalar_prefetch = 0 : i64, scratch_operands = 7 : i64, tpu.core_type = #tpu.core_type<tc>, window_params = [{transform_indices = @transform_0, window_bounds = array<i64: 64, 32>}, {}, {}, {pipeline_mode = #tpu.pipeline_mode<synchronous>, transform_indices = @transform_3, window_bounds = array<i64: 1, 512>}, {}, {pipeline_mode = #tpu.pipeline_mode<synchronous>, transform_indices = @transform_5, window_bounds = array<i64: 1, 128>}, {}, {}, {transform_indices = @transform_8, window_bounds = array<i64: 8, 8, 128>}, {pipeline_mode = #tpu.pipeline_mode<synchronous>, transform_indices = @transform_9, window_bounds = array<i64: 8, 128>}, {pipeline_mode = #tpu.pipeline_mode<synchronous>, transform_indices = @transform_10, window_bounds = array<i64: 8, 128>}]} {
    %c0_i32 = arith.constant 0 : i32
    %0 = arith.cmpi eq, %arg0, %c0_i32 : i32
    %1 = arith.extui %0 : i1 to i32
    %c0_i32_0 = arith.constant 0 : i32
    %2 = arith.cmpi ne, %1, %c0_i32_0 : i32
    scf.if %2 {
      "tpu.region"() ({
        %371 = tpu.sem_alloc : memref<!tpu.dma_semaphore, #tpu.memory_space<semaphore_mem>>
        tpu.enqueue_dma source(%arg2 : memref<32x512xf32, #tpu.memory_space<any>>) target(%arg12 : memref<32x512xf32, #tpu.memory_space<vmem>>) target_semaphore(%371 : memref<!tpu.dma_semaphore, #tpu.memory_space<semaphore_mem>>)
        tpu.wait_dma2 semaphore(%371 : memref<!tpu.dma_semaphore, #tpu.memory_space<semaphore_mem>>) src(%arg2 : memref<32x512xf32, #tpu.memory_space<any>>) dst(%arg12 : memref<32x512xf32, #tpu.memory_space<vmem>>)
        tpu.yield
      }) : () -> ()
      "tpu.region"() ({
        %371 = tpu.sem_alloc : memref<!tpu.dma_semaphore, #tpu.memory_space<semaphore_mem>>
        tpu.enqueue_dma source(%arg3 : memref<128x512xf32, #tpu.memory_space<any>>) target(%arg13 : memref<128x512xf32, #tpu.memory_space<vmem>>) target_semaphore(%371 : memref<!tpu.dma_semaphore, #tpu.memory_space<semaphore_mem>>)
        tpu.wait_dma2 semaphore(%371 : memref<!tpu.dma_semaphore, #tpu.memory_space<semaphore_mem>>) src(%arg3 : memref<128x512xf32, #tpu.memory_space<any>>) dst(%arg13 : memref<128x512xf32, #tpu.memory_space<vmem>>)
        tpu.yield
      }) : () -> ()
      "tpu.region"() ({
        %371 = tpu.sem_alloc : memref<!tpu.dma_semaphore, #tpu.memory_space<semaphore_mem>>
        tpu.enqueue_dma source(%arg5 : memref<128x128xf32, #tpu.memory_space<any>>) target(%arg14 : memref<128x128xf32, #tpu.memory_space<vmem>>) target_semaphore(%371 : memref<!tpu.dma_semaphore, #tpu.memory_space<semaphore_mem>>)
        tpu.wait_dma2 semaphore(%371 : memref<!tpu.dma_semaphore, #tpu.memory_space<semaphore_mem>>) src(%arg5 : memref<128x128xf32, #tpu.memory_space<any>>) dst(%arg14 : memref<128x128xf32, #tpu.memory_space<vmem>>)
        tpu.yield
      }) : () -> ()
      "tpu.region"() ({
        %371 = tpu.sem_alloc : memref<!tpu.dma_semaphore, #tpu.memory_space<semaphore_mem>>
        tpu.enqueue_dma source(%arg7 : memref<8x128xf32, #tpu.memory_space<any>>) target(%arg15 : memref<8x128xf32, #tpu.memory_space<vmem>>) target_semaphore(%371 : memref<!tpu.dma_semaphore, #tpu.memory_space<semaphore_mem>>)
        tpu.wait_dma2 semaphore(%371 : memref<!tpu.dma_semaphore, #tpu.memory_space<semaphore_mem>>) src(%arg7 : memref<8x128xf32, #tpu.memory_space<any>>) dst(%arg15 : memref<8x128xf32, #tpu.memory_space<vmem>>)
        tpu.yield
      }) : () -> ()
      "tpu.region"() ({
        %371 = tpu.sem_alloc : memref<!tpu.dma_semaphore, #tpu.memory_space<semaphore_mem>>
        tpu.enqueue_dma source(%arg8 : memref<8x128xf32, #tpu.memory_space<any>>) target(%arg16 : memref<8x128xf32, #tpu.memory_space<vmem>>) target_semaphore(%371 : memref<!tpu.dma_semaphore, #tpu.memory_space<semaphore_mem>>)
        tpu.wait_dma2 semaphore(%371 : memref<!tpu.dma_semaphore, #tpu.memory_space<semaphore_mem>>) src(%arg8 : memref<8x128xf32, #tpu.memory_space<any>>) dst(%arg16 : memref<8x128xf32, #tpu.memory_space<vmem>>)
        tpu.yield
      }) : () -> ()
    } else {
    }
    %c0 = arith.constant 0 : index
    %c0_1 = arith.constant 0 : index
    %3 = vector.load %arg1[%c0, %c0_1] : memref<64x32xf32, #tpu.memory_space<vmem>>, vector<64x32xf32>
    %c0_2 = arith.constant 0 : index
    %c0_3 = arith.constant 0 : index
    %4 = vector.load %arg12[%c0_2, %c0_3] : memref<32x512xf32, #tpu.memory_space<vmem>>, vector<32x512xf32>
    %cst = arith.constant dense<0.000000e+00> : vector<64x512xf32>
    %5 = tpu.matmul %3, %4, %cst {dimension_numbers = #tpu.dot_dimension_numbers<[1], [0], [0], [1], [0, 0, 1, 1], [], []>} : vector<64x32xf32>, vector<32x512xf32>, vector<64x512xf32> -> vector<64x512xf32>
    %c0_4 = arith.constant 0 : index
    %c0_5 = arith.constant 0 : index
    %6 = vector.load %arg4[%c0_4, %c0_5] : memref<1x512xf32, #tpu.memory_space<vmem>>, vector<1x512xf32>
    %7 = vector.broadcast %6 : vector<1x512xf32> to vector<64x512xf32>
    %8 = arith.addf %5, %7 : vector<64x512xf32>
    %c0_6 = arith.constant 0 : index
    %c0_7 = arith.constant 0 : index
    %9 = vector.load %arg17[%c0_6, %c0_7] : memref<64x512xf32, #tpu.memory_space<vmem>>, vector<64x512xf32>
    tpu.vector_store %arg17[%c0_6, %c0_7], %8 {strides = array<i32>} : memref<64x512xf32, #tpu.memory_space<vmem>>, vector<64x512xf32>,
    %c0_i32_8 = arith.constant 0 : i32
    %c8_i32 = arith.constant 8 : i32
    %10 = arith.muli %c0_i32_8, %c8_i32 : i32
    %11 = tpu.assume_multiple %10, 8 : i32
    %c0_9 = arith.constant 0 : index
    %c0_10 = arith.constant 0 : index
    %12 = vector.load %arg15[%c0_9, %c0_10] : memref<8x128xf32, #tpu.memory_space<vmem>>, vector<8x128xf32>
    %c0_11 = arith.constant 0 : index
    %c0_12 = arith.constant 0 : index
    %13 = vector.load %arg16[%c0_11, %c0_12] : memref<8x128xf32, #tpu.memory_space<vmem>>, vector<8x128xf32>
    %14 = arith.index_cast %11 : i32 to index
    %c0_13 = arith.constant 0 : index
    %15 = vector.load %arg17[%14, %c0_13] : memref<64x512xf32, #tpu.memory_space<vmem>>, vector<8x512xf32>
    %c0_14 = arith.constant 0 : index
    %c0_15 = arith.constant 0 : index
    %16 = vector.load %arg13[%c0_14, %c0_15] : memref<128x512xf32, #tpu.memory_space<vmem>>, vector<128x512xf32>
    %cst_16 = arith.constant dense<0.000000e+00> : vector<8x512xf32>
    %17 = tpu.matmul %12, %16, %cst_16 {dimension_numbers = #tpu.dot_dimension_numbers<[1], [0], [0], [1], [0, 0, 1, 1], [], []>} : vector<8x128xf32>, vector<128x512xf32>, vector<8x512xf32> -> vector<8x512xf32>
    %18 = arith.addf %15, %17 : vector<8x512xf32>
    %19 = vector.extract_strided_slice %18 {offsets = [0, 0], sizes = [8, 128], strides = [1, 1]} : vector<8x512xf32> to vector<8x128xf32>
    %20 = arith.negf %19 : vector<8x128xf32>
    %21 = math.exp %20 : vector<8x128xf32>
    %cst_17 = arith.constant 1.000000e+00 : f32
    %22 = vector.broadcast %cst_17 : f32 to vector<8x128xf32>
    %23 = arith.addf %22, %21 : vector<8x128xf32>
    %24 = arith.divf %22, %23 : vector<8x128xf32>
    %25 = vector.extract_strided_slice %18 {offsets = [0, 128], sizes = [8, 128], strides = [1, 1]} : vector<8x512xf32> to vector<8x128xf32>
    %26 = arith.negf %25 : vector<8x128xf32>
    %27 = math.exp %26 : vector<8x128xf32>
    %cst_18 = arith.constant 1.000000e+00 : f32
    %28 = vector.broadcast %cst_18 : f32 to vector<8x128xf32>
    %29 = arith.addf %28, %27 : vector<8x128xf32>
    %30 = arith.divf %28, %29 : vector<8x128xf32>
    %31 = vector.extract_strided_slice %18 {offsets = [0, 256], sizes = [8, 128], strides = [1, 1]} : vector<8x512xf32> to vector<8x128xf32>
    %32 = math.tanh %31 : vector<8x128xf32>
    %33 = vector.extract_strided_slice %18 {offsets = [0, 384], sizes = [8, 128], strides = [1, 1]} : vector<8x512xf32> to vector<8x128xf32>
    %34 = arith.negf %33 : vector<8x128xf32>
    %35 = math.exp %34 : vector<8x128xf32>
    %cst_19 = arith.constant 1.000000e+00 : f32
    %36 = vector.broadcast %cst_19 : f32 to vector<8x128xf32>
    %37 = arith.addf %36, %35 : vector<8x128xf32>
    %38 = arith.divf %36, %37 : vector<8x128xf32>
    %39 = arith.mulf %30, %13 : vector<8x128xf32>
    %40 = arith.mulf %24, %32 : vector<8x128xf32>
    %41 = arith.addf %39, %40 : vector<8x128xf32>
    %42 = math.tanh %41 : vector<8x128xf32>
    %43 = arith.mulf %38, %42 : vector<8x128xf32>
    %44 = arith.index_cast %11 : i32 to index
    %c0_20 = arith.constant 0 : index
    %45 = vector.load %arg18[%44, %c0_20] : memref<64x128xf32, #tpu.memory_space<vmem>>, vector<8x128xf32>
    tpu.vector_store %arg18[%44, %c0_20], %43 {strides = array<i32>} : memref<64x128xf32, #tpu.memory_space<vmem>>, vector<8x128xf32>,
    %c8_i32_21 = arith.constant 8 : i32
    %46 = arith.muli %arg0, %c8_i32_21 : i32
    %47 = arith.addi %46, %c0_i32_8 : i32
    %c20_i32 = arith.constant 20 : i32
    %48 = arith.cmpi slt, %47, %c20_i32 : i32
    %49 = arith.extui %48 : i1 to i32
    %c0_i32_22 = arith.constant 0 : i32
    %50 = arith.cmpi ne, %49, %c0_i32_22 : i32
    scf.if %50 {
      %c0_162 = arith.constant 0 : index
      %c0_163 = arith.constant 0 : index
      %371 = vector.load %arg15[%c0_162, %c0_163] : memref<8x128xf32, #tpu.memory_space<vmem>>, vector<8x128xf32>
      tpu.vector_store %arg15[%c0_162, %c0_163], %43 {strides = array<i32>} : memref<8x128xf32, #tpu.memory_space<vmem>>, vector<8x128xf32>,
      %c0_164 = arith.constant 0 : index
      %c0_165 = arith.constant 0 : index
      %372 = vector.load %arg16[%c0_164, %c0_165] : memref<8x128xf32, #tpu.memory_space<vmem>>, vector<8x128xf32>
      tpu.vector_store %arg16[%c0_164, %c0_165], %41 {strides = array<i32>} : memref<8x128xf32, #tpu.memory_space<vmem>>, vector<8x128xf32>,
    } else {
    }
    %c1_i32 = arith.constant 1 : i32
    %c8_i32_23 = arith.constant 8 : i32
    %51 = arith.muli %c1_i32, %c8_i32_23 : i32
    %52 = tpu.assume_multiple %51, 8 : i32
    %c0_24 = arith.constant 0 : index
    %c0_25 = arith.constant 0 : index
    %53 = vector.load %arg15[%c0_24, %c0_25] : memref<8x128xf32, #tpu.memory_space<vmem>>, vector<8x128xf32>
    %c0_26 = arith.constant 0 : index
    %c0_27 = arith.constant 0 : index
    %54 = vector.load %arg16[%c0_26, %c0_27] : memref<8x128xf32, #tpu.memory_space<vmem>>, vector<8x128xf32>
    %55 = arith.index_cast %52 : i32 to index
    %c0_28 = arith.constant 0 : index
    %56 = vector.load %arg17[%55, %c0_28] : memref<64x512xf32, #tpu.memory_space<vmem>>, vector<8x512xf32>
    %c0_29 = arith.constant 0 : index
    %c0_30 = arith.constant 0 : index
    %57 = vector.load %arg13[%c0_29, %c0_30] : memref<128x512xf32, #tpu.memory_space<vmem>>, vector<128x512xf32>
    %cst_31 = arith.constant dense<0.000000e+00> : vector<8x512xf32>
    %58 = tpu.matmul %53, %57, %cst_31 {dimension_numbers = #tpu.dot_dimension_numbers<[1], [0], [0], [1], [0, 0, 1, 1], [], []>} : vector<8x128xf32>, vector<128x512xf32>, vector<8x512xf32> -> vector<8x512xf32>
    %59 = arith.addf %56, %58 : vector<8x512xf32>
    %60 = vector.extract_strided_slice %59 {offsets = [0, 0], sizes = [8, 128], strides = [1, 1]} : vector<8x512xf32> to vector<8x128xf32>
    %61 = arith.negf %60 : vector<8x128xf32>
    %62 = math.exp %61 : vector<8x128xf32>
    %cst_32 = arith.constant 1.000000e+00 : f32
    %63 = vector.broadcast %cst_32 : f32 to vector<8x128xf32>
    %64 = arith.addf %63, %62 : vector<8x128xf32>
    %65 = arith.divf %63, %64 : vector<8x128xf32>
    %66 = vector.extract_strided_slice %59 {offsets = [0, 128], sizes = [8, 128], strides = [1, 1]} : vector<8x512xf32> to vector<8x128xf32>
    %67 = arith.negf %66 : vector<8x128xf32>
    %68 = math.exp %67 : vector<8x128xf32>
    %cst_33 = arith.constant 1.000000e+00 : f32
    %69 = vector.broadcast %cst_33 : f32 to vector<8x128xf32>
    %70 = arith.addf %69, %68 : vector<8x128xf32>
    %71 = arith.divf %69, %70 : vector<8x128xf32>
    %72 = vector.extract_strided_slice %59 {offsets = [0, 256], sizes = [8, 128], strides = [1, 1]} : vector<8x512xf32> to vector<8x128xf32>
    %73 = math.tanh %72 : vector<8x128xf32>
    %74 = vector.extract_strided_slice %59 {offsets = [0, 384], sizes = [8, 128], strides = [1, 1]} : vector<8x512xf32> to vector<8x128xf32>
    %75 = arith.negf %74 : vector<8x128xf32>
    %76 = math.exp %75 : vector<8x128xf32>
    %cst_34 = arith.constant 1.000000e+00 : f32
    %77 = vector.broadcast %cst_34 : f32 to vector<8x128xf32>
    %78 = arith.addf %77, %76 : vector<8x128xf32>
    %79 = arith.divf %77, %78 : vector<8x128xf32>
    %80 = arith.mulf %71, %54 : vector<8x128xf32>
    %81 = arith.mulf %65, %73 : vector<8x128xf32>
    %82 = arith.addf %80, %81 : vector<8x128xf32>
    %83 = math.tanh %82 : vector<8x128xf32>
    %84 = arith.mulf %79, %83 : vector<8x128xf32>
    %85 = arith.index_cast %52 : i32 to index
    %c0_35 = arith.constant 0 : index
    %86 = vector.load %arg18[%85, %c0_35] : memref<64x128xf32, #tpu.memory_space<vmem>>, vector<8x128xf32>
    tpu.vector_store %arg18[%85, %c0_35], %84 {strides = array<i32>} : memref<64x128xf32, #tpu.memory_space<vmem>>, vector<8x128xf32>,
    %c8_i32_36 = arith.constant 8 : i32
    %87 = arith.muli %arg0, %c8_i32_36 : i32
    %88 = arith.addi %87, %c1_i32 : i32
    %c20_i32_37 = arith.constant 20 : i32
    %89 = arith.cmpi slt, %88, %c20_i32_37 : i32
    %90 = arith.extui %89 : i1 to i32
    %c0_i32_38 = arith.constant 0 : i32
    %91 = arith.cmpi ne, %90, %c0_i32_38 : i32
    scf.if %91 {
      %c0_162 = arith.constant 0 : index
      %c0_163 = arith.constant 0 : index
      %371 = vector.load %arg15[%c0_162, %c0_163] : memref<8x128xf32, #tpu.memory_space<vmem>>, vector<8x128xf32>
      tpu.vector_store %arg15[%c0_162, %c0_163], %84 {strides = array<i32>} : memref<8x128xf32, #tpu.memory_space<vmem>>, vector<8x128xf32>,
      %c0_164 = arith.constant 0 : index
      %c0_165 = arith.constant 0 : index
      %372 = vector.load %arg16[%c0_164, %c0_165] : memref<8x128xf32, #tpu.memory_space<vmem>>, vector<8x128xf32>
      tpu.vector_store %arg16[%c0_164, %c0_165], %82 {strides = array<i32>} : memref<8x128xf32, #tpu.memory_space<vmem>>, vector<8x128xf32>,
    } else {
    }
    %c2_i32 = arith.constant 2 : i32
    %c8_i32_39 = arith.constant 8 : i32
    %92 = arith.muli %c2_i32, %c8_i32_39 : i32
    %93 = tpu.assume_multiple %92, 8 : i32
    %c0_40 = arith.constant 0 : index
    %c0_41 = arith.constant 0 : index
    %94 = vector.load %arg15[%c0_40, %c0_41] : memref<8x128xf32, #tpu.memory_space<vmem>>, vector<8x128xf32>
    %c0_42 = arith.constant 0 : index
    %c0_43 = arith.constant 0 : index
    %95 = vector.load %arg16[%c0_42, %c0_43] : memref<8x128xf32, #tpu.memory_space<vmem>>, vector<8x128xf32>
    %96 = arith.index_cast %93 : i32 to index
    %c0_44 = arith.constant 0 : index
    %97 = vector.load %arg17[%96, %c0_44] : memref<64x512xf32, #tpu.memory_space<vmem>>, vector<8x512xf32>
    %c0_45 = arith.constant 0 : index
    %c0_46 = arith.constant 0 : index
    %98 = vector.load %arg13[%c0_45, %c0_46] : memref<128x512xf32, #tpu.memory_space<vmem>>, vector<128x512xf32>
    %cst_47 = arith.constant dense<0.000000e+00> : vector<8x512xf32>
    %99 = tpu.matmul %94, %98, %cst_47 {dimension_numbers = #tpu.dot_dimension_numbers<[1], [0], [0], [1], [0, 0, 1, 1], [], []>} : vector<8x128xf32>, vector<128x512xf32>, vector<8x512xf32> -> vector<8x512xf32>
    %100 = arith.addf %97, %99 : vector<8x512xf32>
    %101 = vector.extract_strided_slice %100 {offsets = [0, 0], sizes = [8, 128], strides = [1, 1]} : vector<8x512xf32> to vector<8x128xf32>
    %102 = arith.negf %101 : vector<8x128xf32>
    %103 = math.exp %102 : vector<8x128xf32>
    %cst_48 = arith.constant 1.000000e+00 : f32
    %104 = vector.broadcast %cst_48 : f32 to vector<8x128xf32>
    %105 = arith.addf %104, %103 : vector<8x128xf32>
    %106 = arith.divf %104, %105 : vector<8x128xf32>
    %107 = vector.extract_strided_slice %100 {offsets = [0, 128], sizes = [8, 128], strides = [1, 1]} : vector<8x512xf32> to vector<8x128xf32>
    %108 = arith.negf %107 : vector<8x128xf32>
    %109 = math.exp %108 : vector<8x128xf32>
    %cst_49 = arith.constant 1.000000e+00 : f32
    %110 = vector.broadcast %cst_49 : f32 to vector<8x128xf32>
    %111 = arith.addf %110, %109 : vector<8x128xf32>
    %112 = arith.divf %110, %111 : vector<8x128xf32>
    %113 = vector.extract_strided_slice %100 {offsets = [0, 256], sizes = [8, 128], strides = [1, 1]} : vector<8x512xf32> to vector<8x128xf32>
    %114 = math.tanh %113 : vector<8x128xf32>
    %115 = vector.extract_strided_slice %100 {offsets = [0, 384], sizes = [8, 128], strides = [1, 1]} : vector<8x512xf32> to vector<8x128xf32>
    %116 = arith.negf %115 : vector<8x128xf32>
    %117 = math.exp %116 : vector<8x128xf32>
    %cst_50 = arith.constant 1.000000e+00 : f32
    %118 = vector.broadcast %cst_50 : f32 to vector<8x128xf32>
    %119 = arith.addf %118, %117 : vector<8x128xf32>
    %120 = arith.divf %118, %119 : vector<8x128xf32>
    %121 = arith.mulf %112, %95 : vector<8x128xf32>
    %122 = arith.mulf %106, %114 : vector<8x128xf32>
    %123 = arith.addf %121, %122 : vector<8x128xf32>
    %124 = math.tanh %123 : vector<8x128xf32>
    %125 = arith.mulf %120, %124 : vector<8x128xf32>
    %126 = arith.index_cast %93 : i32 to index
    %c0_51 = arith.constant 0 : index
    %127 = vector.load %arg18[%126, %c0_51] : memref<64x128xf32, #tpu.memory_space<vmem>>, vector<8x128xf32>
    tpu.vector_store %arg18[%126, %c0_51], %125 {strides = array<i32>} : memref<64x128xf32, #tpu.memory_space<vmem>>, vector<8x128xf32>,
    %c8_i32_52 = arith.constant 8 : i32
    %128 = arith.muli %arg0, %c8_i32_52 : i32
    %129 = arith.addi %128, %c2_i32 : i32
    %c20_i32_53 = arith.constant 20 : i32
    %130 = arith.cmpi slt, %129, %c20_i32_53 : i32
    %131 = arith.extui %130 : i1 to i32
    %c0_i32_54 = arith.constant 0 : i32
    %132 = arith.cmpi ne, %131, %c0_i32_54 : i32
    scf.if %132 {
      %c0_162 = arith.constant 0 : index
      %c0_163 = arith.constant 0 : index
      %371 = vector.load %arg15[%c0_162, %c0_163] : memref<8x128xf32, #tpu.memory_space<vmem>>, vector<8x128xf32>
      tpu.vector_store %arg15[%c0_162, %c0_163], %125 {strides = array<i32>} : memref<8x128xf32, #tpu.memory_space<vmem>>, vector<8x128xf32>,
      %c0_164 = arith.constant 0 : index
      %c0_165 = arith.constant 0 : index
      %372 = vector.load %arg16[%c0_164, %c0_165] : memref<8x128xf32, #tpu.memory_space<vmem>>, vector<8x128xf32>
      tpu.vector_store %arg16[%c0_164, %c0_165], %123 {strides = array<i32>} : memref<8x128xf32, #tpu.memory_space<vmem>>, vector<8x128xf32>,
    } else {
    }
    %c3_i32 = arith.constant 3 : i32
    %c8_i32_55 = arith.constant 8 : i32
    %133 = arith.muli %c3_i32, %c8_i32_55 : i32
    %134 = tpu.assume_multiple %133, 8 : i32
    %c0_56 = arith.constant 0 : index
    %c0_57 = arith.constant 0 : index
    %135 = vector.load %arg15[%c0_56, %c0_57] : memref<8x128xf32, #tpu.memory_space<vmem>>, vector<8x128xf32>
    %c0_58 = arith.constant 0 : index
    %c0_59 = arith.constant 0 : index
    %136 = vector.load %arg16[%c0_58, %c0_59] : memref<8x128xf32, #tpu.memory_space<vmem>>, vector<8x128xf32>
    %137 = arith.index_cast %134 : i32 to index
    %c0_60 = arith.constant 0 : index
    %138 = vector.load %arg17[%137, %c0_60] : memref<64x512xf32, #tpu.memory_space<vmem>>, vector<8x512xf32>
    %c0_61 = arith.constant 0 : index
    %c0_62 = arith.constant 0 : index
    %139 = vector.load %arg13[%c0_61, %c0_62] : memref<128x512xf32, #tpu.memory_space<vmem>>, vector<128x512xf32>
    %cst_63 = arith.constant dense<0.000000e+00> : vector<8x512xf32>
    %140 = tpu.matmul %135, %139, %cst_63 {dimension_numbers = #tpu.dot_dimension_numbers<[1], [0], [0], [1], [0, 0, 1, 1], [], []>} : vector<8x128xf32>, vector<128x512xf32>, vector<8x512xf32> -> vector<8x512xf32>
    %141 = arith.addf %138, %140 : vector<8x512xf32>
    %142 = vector.extract_strided_slice %141 {offsets = [0, 0], sizes = [8, 128], strides = [1, 1]} : vector<8x512xf32> to vector<8x128xf32>
    %143 = arith.negf %142 : vector<8x128xf32>
    %144 = math.exp %143 : vector<8x128xf32>
    %cst_64 = arith.constant 1.000000e+00 : f32
    %145 = vector.broadcast %cst_64 : f32 to vector<8x128xf32>
    %146 = arith.addf %145, %144 : vector<8x128xf32>
    %147 = arith.divf %145, %146 : vector<8x128xf32>
    %148 = vector.extract_strided_slice %141 {offsets = [0, 128], sizes = [8, 128], strides = [1, 1]} : vector<8x512xf32> to vector<8x128xf32>
    %149 = arith.negf %148 : vector<8x128xf32>
    %150 = math.exp %149 : vector<8x128xf32>
    %cst_65 = arith.constant 1.000000e+00 : f32
    %151 = vector.broadcast %cst_65 : f32 to vector<8x128xf32>
    %152 = arith.addf %151, %150 : vector<8x128xf32>
    %153 = arith.divf %151, %152 : vector<8x128xf32>
    %154 = vector.extract_strided_slice %141 {offsets = [0, 256], sizes = [8, 128], strides = [1, 1]} : vector<8x512xf32> to vector<8x128xf32>
    %155 = math.tanh %154 : vector<8x128xf32>
    %156 = vector.extract_strided_slice %141 {offsets = [0, 384], sizes = [8, 128], strides = [1, 1]} : vector<8x512xf32> to vector<8x128xf32>
    %157 = arith.negf %156 : vector<8x128xf32>
    %158 = math.exp %157 : vector<8x128xf32>
    %cst_66 = arith.constant 1.000000e+00 : f32
    %159 = vector.broadcast %cst_66 : f32 to vector<8x128xf32>
    %160 = arith.addf %159, %158 : vector<8x128xf32>
    %161 = arith.divf %159, %160 : vector<8x128xf32>
    %162 = arith.mulf %153, %136 : vector<8x128xf32>
    %163 = arith.mulf %147, %155 : vector<8x128xf32>
    %164 = arith.addf %162, %163 : vector<8x128xf32>
    %165 = math.tanh %164 : vector<8x128xf32>
    %166 = arith.mulf %161, %165 : vector<8x128xf32>
    %167 = arith.index_cast %134 : i32 to index
    %c0_67 = arith.constant 0 : index
    %168 = vector.load %arg18[%167, %c0_67] : memref<64x128xf32, #tpu.memory_space<vmem>>, vector<8x128xf32>
    tpu.vector_store %arg18[%167, %c0_67], %166 {strides = array<i32>} : memref<64x128xf32, #tpu.memory_space<vmem>>, vector<8x128xf32>,
    %c8_i32_68 = arith.constant 8 : i32
    %169 = arith.muli %arg0, %c8_i32_68 : i32
    %170 = arith.addi %169, %c3_i32 : i32
    %c20_i32_69 = arith.constant 20 : i32
    %171 = arith.cmpi slt, %170, %c20_i32_69 : i32
    %172 = arith.extui %171 : i1 to i32
    %c0_i32_70 = arith.constant 0 : i32
    %173 = arith.cmpi ne, %172, %c0_i32_70 : i32
    scf.if %173 {
      %c0_162 = arith.constant 0 : index
      %c0_163 = arith.constant 0 : index
      %371 = vector.load %arg15[%c0_162, %c0_163] : memref<8x128xf32, #tpu.memory_space<vmem>>, vector<8x128xf32>
      tpu.vector_store %arg15[%c0_162, %c0_163], %166 {strides = array<i32>} : memref<8x128xf32, #tpu.memory_space<vmem>>, vector<8x128xf32>,
      %c0_164 = arith.constant 0 : index
      %c0_165 = arith.constant 0 : index
      %372 = vector.load %arg16[%c0_164, %c0_165] : memref<8x128xf32, #tpu.memory_space<vmem>>, vector<8x128xf32>
      tpu.vector_store %arg16[%c0_164, %c0_165], %164 {strides = array<i32>} : memref<8x128xf32, #tpu.memory_space<vmem>>, vector<8x128xf32>,
    } else {
    }
    %c4_i32 = arith.constant 4 : i32
    %c8_i32_71 = arith.constant 8 : i32
    %174 = arith.muli %c4_i32, %c8_i32_71 : i32
    %175 = tpu.assume_multiple %174, 8 : i32
    %c0_72 = arith.constant 0 : index
    %c0_73 = arith.constant 0 : index
    %176 = vector.load %arg15[%c0_72, %c0_73] : memref<8x128xf32, #tpu.memory_space<vmem>>, vector<8x128xf32>
    %c0_74 = arith.constant 0 : index
    %c0_75 = arith.constant 0 : index
    %177 = vector.load %arg16[%c0_74, %c0_75] : memref<8x128xf32, #tpu.memory_space<vmem>>, vector<8x128xf32>
    %178 = arith.index_cast %175 : i32 to index
    %c0_76 = arith.constant 0 : index
    %179 = vector.load %arg17[%178, %c0_76] : memref<64x512xf32, #tpu.memory_space<vmem>>, vector<8x512xf32>
    %c0_77 = arith.constant 0 : index
    %c0_78 = arith.constant 0 : index
    %180 = vector.load %arg13[%c0_77, %c0_78] : memref<128x512xf32, #tpu.memory_space<vmem>>, vector<128x512xf32>
    %cst_79 = arith.constant dense<0.000000e+00> : vector<8x512xf32>
    %181 = tpu.matmul %176, %180, %cst_79 {dimension_numbers = #tpu.dot_dimension_numbers<[1], [0], [0], [1], [0, 0, 1, 1], [], []>} : vector<8x128xf32>, vector<128x512xf32>, vector<8x512xf32> -> vector<8x512xf32>
    %182 = arith.addf %179, %181 : vector<8x512xf32>
    %183 = vector.extract_strided_slice %182 {offsets = [0, 0], sizes = [8, 128], strides = [1, 1]} : vector<8x512xf32> to vector<8x128xf32>
    %184 = arith.negf %183 : vector<8x128xf32>
    %185 = math.exp %184 : vector<8x128xf32>
    %cst_80 = arith.constant 1.000000e+00 : f32
    %186 = vector.broadcast %cst_80 : f32 to vector<8x128xf32>
    %187 = arith.addf %186, %185 : vector<8x128xf32>
    %188 = arith.divf %186, %187 : vector<8x128xf32>
    %189 = vector.extract_strided_slice %182 {offsets = [0, 128], sizes = [8, 128], strides = [1, 1]} : vector<8x512xf32> to vector<8x128xf32>
    %190 = arith.negf %189 : vector<8x128xf32>
    %191 = math.exp %190 : vector<8x128xf32>
    %cst_81 = arith.constant 1.000000e+00 : f32
    %192 = vector.broadcast %cst_81 : f32 to vector<8x128xf32>
    %193 = arith.addf %192, %191 : vector<8x128xf32>
    %194 = arith.divf %192, %193 : vector<8x128xf32>
    %195 = vector.extract_strided_slice %182 {offsets = [0, 256], sizes = [8, 128], strides = [1, 1]} : vector<8x512xf32> to vector<8x128xf32>
    %196 = math.tanh %195 : vector<8x128xf32>
    %197 = vector.extract_strided_slice %182 {offsets = [0, 384], sizes = [8, 128], strides = [1, 1]} : vector<8x512xf32> to vector<8x128xf32>
    %198 = arith.negf %197 : vector<8x128xf32>
    %199 = math.exp %198 : vector<8x128xf32>
    %cst_82 = arith.constant 1.000000e+00 : f32
    %200 = vector.broadcast %cst_82 : f32 to vector<8x128xf32>
    %201 = arith.addf %200, %199 : vector<8x128xf32>
    %202 = arith.divf %200, %201 : vector<8x128xf32>
    %203 = arith.mulf %194, %177 : vector<8x128xf32>
    %204 = arith.mulf %188, %196 : vector<8x128xf32>
    %205 = arith.addf %203, %204 : vector<8x128xf32>
    %206 = math.tanh %205 : vector<8x128xf32>
    %207 = arith.mulf %202, %206 : vector<8x128xf32>
    %208 = arith.index_cast %175 : i32 to index
    %c0_83 = arith.constant 0 : index
    %209 = vector.load %arg18[%208, %c0_83] : memref<64x128xf32, #tpu.memory_space<vmem>>, vector<8x128xf32>
    tpu.vector_store %arg18[%208, %c0_83], %207 {strides = array<i32>} : memref<64x128xf32, #tpu.memory_space<vmem>>, vector<8x128xf32>,
    %c8_i32_84 = arith.constant 8 : i32
    %210 = arith.muli %arg0, %c8_i32_84 : i32
    %211 = arith.addi %210, %c4_i32 : i32
    %c20_i32_85 = arith.constant 20 : i32
    %212 = arith.cmpi slt, %211, %c20_i32_85 : i32
    %213 = arith.extui %212 : i1 to i32
    %c0_i32_86 = arith.constant 0 : i32
    %214 = arith.cmpi ne, %213, %c0_i32_86 : i32
    scf.if %214 {
      %c0_162 = arith.constant 0 : index
      %c0_163 = arith.constant 0 : index
      %371 = vector.load %arg15[%c0_162, %c0_163] : memref<8x128xf32, #tpu.memory_space<vmem>>, vector<8x128xf32>
      tpu.vector_store %arg15[%c0_162, %c0_163], %207 {strides = array<i32>} : memref<8x128xf32, #tpu.memory_space<vmem>>, vector<8x128xf32>,
      %c0_164 = arith.constant 0 : index
      %c0_165 = arith.constant 0 : index
      %372 = vector.load %arg16[%c0_164, %c0_165] : memref<8x128xf32, #tpu.memory_space<vmem>>, vector<8x128xf32>
      tpu.vector_store %arg16[%c0_164, %c0_165], %205 {strides = array<i32>} : memref<8x128xf32, #tpu.memory_space<vmem>>, vector<8x128xf32>,
    } else {
    }
    %c5_i32 = arith.constant 5 : i32
    %c8_i32_87 = arith.constant 8 : i32
    %215 = arith.muli %c5_i32, %c8_i32_87 : i32
    %216 = tpu.assume_multiple %215, 8 : i32
    %c0_88 = arith.constant 0 : index
    %c0_89 = arith.constant 0 : index
    %217 = vector.load %arg15[%c0_88, %c0_89] : memref<8x128xf32, #tpu.memory_space<vmem>>, vector<8x128xf32>
    %c0_90 = arith.constant 0 : index
    %c0_91 = arith.constant 0 : index
    %218 = vector.load %arg16[%c0_90, %c0_91] : memref<8x128xf32, #tpu.memory_space<vmem>>, vector<8x128xf32>
    %219 = arith.index_cast %216 : i32 to index
    %c0_92 = arith.constant 0 : index
    %220 = vector.load %arg17[%219, %c0_92] : memref<64x512xf32, #tpu.memory_space<vmem>>, vector<8x512xf32>
    %c0_93 = arith.constant 0 : index
    %c0_94 = arith.constant 0 : index
    %221 = vector.load %arg13[%c0_93, %c0_94] : memref<128x512xf32, #tpu.memory_space<vmem>>, vector<128x512xf32>
    %cst_95 = arith.constant dense<0.000000e+00> : vector<8x512xf32>
    %222 = tpu.matmul %217, %221, %cst_95 {dimension_numbers = #tpu.dot_dimension_numbers<[1], [0], [0], [1], [0, 0, 1, 1], [], []>} : vector<8x128xf32>, vector<128x512xf32>, vector<8x512xf32> -> vector<8x512xf32>
    %223 = arith.addf %220, %222 : vector<8x512xf32>
    %224 = vector.extract_strided_slice %223 {offsets = [0, 0], sizes = [8, 128], strides = [1, 1]} : vector<8x512xf32> to vector<8x128xf32>
    %225 = arith.negf %224 : vector<8x128xf32>
    %226 = math.exp %225 : vector<8x128xf32>
    %cst_96 = arith.constant 1.000000e+00 : f32
    %227 = vector.broadcast %cst_96 : f32 to vector<8x128xf32>
    %228 = arith.addf %227, %226 : vector<8x128xf32>
    %229 = arith.divf %227, %228 : vector<8x128xf32>
    %230 = vector.extract_strided_slice %223 {offsets = [0, 128], sizes = [8, 128], strides = [1, 1]} : vector<8x512xf32> to vector<8x128xf32>
    %231 = arith.negf %230 : vector<8x128xf32>
    %232 = math.exp %231 : vector<8x128xf32>
    %cst_97 = arith.constant 1.000000e+00 : f32
    %233 = vector.broadcast %cst_97 : f32 to vector<8x128xf32>
    %234 = arith.addf %233, %232 : vector<8x128xf32>
    %235 = arith.divf %233, %234 : vector<8x128xf32>
    %236 = vector.extract_strided_slice %223 {offsets = [0, 256], sizes = [8, 128], strides = [1, 1]} : vector<8x512xf32> to vector<8x128xf32>
    %237 = math.tanh %236 : vector<8x128xf32>
    %238 = vector.extract_strided_slice %223 {offsets = [0, 384], sizes = [8, 128], strides = [1, 1]} : vector<8x512xf32> to vector<8x128xf32>
    %239 = arith.negf %238 : vector<8x128xf32>
    %240 = math.exp %239 : vector<8x128xf32>
    %cst_98 = arith.constant 1.000000e+00 : f32
    %241 = vector.broadcast %cst_98 : f32 to vector<8x128xf32>
    %242 = arith.addf %241, %240 : vector<8x128xf32>
    %243 = arith.divf %241, %242 : vector<8x128xf32>
    %244 = arith.mulf %235, %218 : vector<8x128xf32>
    %245 = arith.mulf %229, %237 : vector<8x128xf32>
    %246 = arith.addf %244, %245 : vector<8x128xf32>
    %247 = math.tanh %246 : vector<8x128xf32>
    %248 = arith.mulf %243, %247 : vector<8x128xf32>
    %249 = arith.index_cast %216 : i32 to index
    %c0_99 = arith.constant 0 : index
    %250 = vector.load %arg18[%249, %c0_99] : memref<64x128xf32, #tpu.memory_space<vmem>>, vector<8x128xf32>
    tpu.vector_store %arg18[%249, %c0_99], %248 {strides = array<i32>} : memref<64x128xf32, #tpu.memory_space<vmem>>, vector<8x128xf32>,
    %c8_i32_100 = arith.constant 8 : i32
    %251 = arith.muli %arg0, %c8_i32_100 : i32
    %252 = arith.addi %251, %c5_i32 : i32
    %c20_i32_101 = arith.constant 20 : i32
    %253 = arith.cmpi slt, %252, %c20_i32_101 : i32
    %254 = arith.extui %253 : i1 to i32
    %c0_i32_102 = arith.constant 0 : i32
    %255 = arith.cmpi ne, %254, %c0_i32_102 : i32
    scf.if %255 {
      %c0_162 = arith.constant 0 : index
      %c0_163 = arith.constant 0 : index
      %371 = vector.load %arg15[%c0_162, %c0_163] : memref<8x128xf32, #tpu.memory_space<vmem>>, vector<8x128xf32>
      tpu.vector_store %arg15[%c0_162, %c0_163], %248 {strides = array<i32>} : memref<8x128xf32, #tpu.memory_space<vmem>>, vector<8x128xf32>,
      %c0_164 = arith.constant 0 : index
      %c0_165 = arith.constant 0 : index
      %372 = vector.load %arg16[%c0_164, %c0_165] : memref<8x128xf32, #tpu.memory_space<vmem>>, vector<8x128xf32>
      tpu.vector_store %arg16[%c0_164, %c0_165], %246 {strides = array<i32>} : memref<8x128xf32, #tpu.memory_space<vmem>>, vector<8x128xf32>,
    } else {
    }
    %c6_i32 = arith.constant 6 : i32
    %c8_i32_103 = arith.constant 8 : i32
    %256 = arith.muli %c6_i32, %c8_i32_103 : i32
    %257 = tpu.assume_multiple %256, 8 : i32
    %c0_104 = arith.constant 0 : index
    %c0_105 = arith.constant 0 : index
    %258 = vector.load %arg15[%c0_104, %c0_105] : memref<8x128xf32, #tpu.memory_space<vmem>>, vector<8x128xf32>
    %c0_106 = arith.constant 0 : index
    %c0_107 = arith.constant 0 : index
    %259 = vector.load %arg16[%c0_106, %c0_107] : memref<8x128xf32, #tpu.memory_space<vmem>>, vector<8x128xf32>
    %260 = arith.index_cast %257 : i32 to index
    %c0_108 = arith.constant 0 : index
    %261 = vector.load %arg17[%260, %c0_108] : memref<64x512xf32, #tpu.memory_space<vmem>>, vector<8x512xf32>
    %c0_109 = arith.constant 0 : index
    %c0_110 = arith.constant 0 : index
    %262 = vector.load %arg13[%c0_109, %c0_110] : memref<128x512xf32, #tpu.memory_space<vmem>>, vector<128x512xf32>
    %cst_111 = arith.constant dense<0.000000e+00> : vector<8x512xf32>
    %263 = tpu.matmul %258, %262, %cst_111 {dimension_numbers = #tpu.dot_dimension_numbers<[1], [0], [0], [1], [0, 0, 1, 1], [], []>} : vector<8x128xf32>, vector<128x512xf32>, vector<8x512xf32> -> vector<8x512xf32>
    %264 = arith.addf %261, %263 : vector<8x512xf32>
    %265 = vector.extract_strided_slice %264 {offsets = [0, 0], sizes = [8, 128], strides = [1, 1]} : vector<8x512xf32> to vector<8x128xf32>
    %266 = arith.negf %265 : vector<8x128xf32>
    %267 = math.exp %266 : vector<8x128xf32>
    %cst_112 = arith.constant 1.000000e+00 : f32
    %268 = vector.broadcast %cst_112 : f32 to vector<8x128xf32>
    %269 = arith.addf %268, %267 : vector<8x128xf32>
    %270 = arith.divf %268, %269 : vector<8x128xf32>
    %271 = vector.extract_strided_slice %264 {offsets = [0, 128], sizes = [8, 128], strides = [1, 1]} : vector<8x512xf32> to vector<8x128xf32>
    %272 = arith.negf %271 : vector<8x128xf32>
    %273 = math.exp %272 : vector<8x128xf32>
    %cst_113 = arith.constant 1.000000e+00 : f32
    %274 = vector.broadcast %cst_113 : f32 to vector<8x128xf32>
    %275 = arith.addf %274, %273 : vector<8x128xf32>
    %276 = arith.divf %274, %275 : vector<8x128xf32>
    %277 = vector.extract_strided_slice %264 {offsets = [0, 256], sizes = [8, 128], strides = [1, 1]} : vector<8x512xf32> to vector<8x128xf32>
    %278 = math.tanh %277 : vector<8x128xf32>
    %279 = vector.extract_strided_slice %264 {offsets = [0, 384], sizes = [8, 128], strides = [1, 1]} : vector<8x512xf32> to vector<8x128xf32>
    %280 = arith.negf %279 : vector<8x128xf32>
    %281 = math.exp %280 : vector<8x128xf32>
    %cst_114 = arith.constant 1.000000e+00 : f32
    %282 = vector.broadcast %cst_114 : f32 to vector<8x128xf32>
    %283 = arith.addf %282, %281 : vector<8x128xf32>
    %284 = arith.divf %282, %283 : vector<8x128xf32>
    %285 = arith.mulf %276, %259 : vector<8x128xf32>
    %286 = arith.mulf %270, %278 : vector<8x128xf32>
    %287 = arith.addf %285, %286 : vector<8x128xf32>
    %288 = math.tanh %287 : vector<8x128xf32>
    %289 = arith.mulf %284, %288 : vector<8x128xf32>
    %290 = arith.index_cast %257 : i32 to index
    %c0_115 = arith.constant 0 : index
    %291 = vector.load %arg18[%290, %c0_115] : memref<64x128xf32, #tpu.memory_space<vmem>>, vector<8x128xf32>
    tpu.vector_store %arg18[%290, %c0_115], %289 {strides = array<i32>} : memref<64x128xf32, #tpu.memory_space<vmem>>, vector<8x128xf32>,
    %c8_i32_116 = arith.constant 8 : i32
    %292 = arith.muli %arg0, %c8_i32_116 : i32
    %293 = arith.addi %292, %c6_i32 : i32
    %c20_i32_117 = arith.constant 20 : i32
    %294 = arith.cmpi slt, %293, %c20_i32_117 : i32
    %295 = arith.extui %294 : i1 to i32
    %c0_i32_118 = arith.constant 0 : i32
    %296 = arith.cmpi ne, %295, %c0_i32_118 : i32
    scf.if %296 {
      %c0_162 = arith.constant 0 : index
      %c0_163 = arith.constant 0 : index
      %371 = vector.load %arg15[%c0_162, %c0_163] : memref<8x128xf32, #tpu.memory_space<vmem>>, vector<8x128xf32>
      tpu.vector_store %arg15[%c0_162, %c0_163], %289 {strides = array<i32>} : memref<8x128xf32, #tpu.memory_space<vmem>>, vector<8x128xf32>,
      %c0_164 = arith.constant 0 : index
      %c0_165 = arith.constant 0 : index
      %372 = vector.load %arg16[%c0_164, %c0_165] : memref<8x128xf32, #tpu.memory_space<vmem>>, vector<8x128xf32>
      tpu.vector_store %arg16[%c0_164, %c0_165], %287 {strides = array<i32>} : memref<8x128xf32, #tpu.memory_space<vmem>>, vector<8x128xf32>,
    } else {
    }
    %c7_i32 = arith.constant 7 : i32
    %c8_i32_119 = arith.constant 8 : i32
    %297 = arith.muli %c7_i32, %c8_i32_119 : i32
    %298 = tpu.assume_multiple %297, 8 : i32
    %c0_120 = arith.constant 0 : index
    %c0_121 = arith.constant 0 : index
    %299 = vector.load %arg15[%c0_120, %c0_121] : memref<8x128xf32, #tpu.memory_space<vmem>>, vector<8x128xf32>
    %c0_122 = arith.constant 0 : index
    %c0_123 = arith.constant 0 : index
    %300 = vector.load %arg16[%c0_122, %c0_123] : memref<8x128xf32, #tpu.memory_space<vmem>>, vector<8x128xf32>
    %301 = arith.index_cast %298 : i32 to index
    %c0_124 = arith.constant 0 : index
    %302 = vector.load %arg17[%301, %c0_124] : memref<64x512xf32, #tpu.memory_space<vmem>>, vector<8x512xf32>
    %c0_125 = arith.constant 0 : index
    %c0_126 = arith.constant 0 : index
    %303 = vector.load %arg13[%c0_125, %c0_126] : memref<128x512xf32, #tpu.memory_space<vmem>>, vector<128x512xf32>
    %cst_127 = arith.constant dense<0.000000e+00> : vector<8x512xf32>
    %304 = tpu.matmul %299, %303, %cst_127 {dimension_numbers = #tpu.dot_dimension_numbers<[1], [0], [0], [1], [0, 0, 1, 1], [], []>} : vector<8x128xf32>, vector<128x512xf32>, vector<8x512xf32> -> vector<8x512xf32>
    %305 = arith.addf %302, %304 : vector<8x512xf32>
    %306 = vector.extract_strided_slice %305 {offsets = [0, 0], sizes = [8, 128], strides = [1, 1]} : vector<8x512xf32> to vector<8x128xf32>
    %307 = arith.negf %306 : vector<8x128xf32>
    %308 = math.exp %307 : vector<8x128xf32>
    %cst_128 = arith.constant 1.000000e+00 : f32
    %309 = vector.broadcast %cst_128 : f32 to vector<8x128xf32>
    %310 = arith.addf %309, %308 : vector<8x128xf32>
    %311 = arith.divf %309, %310 : vector<8x128xf32>
    %312 = vector.extract_strided_slice %305 {offsets = [0, 128], sizes = [8, 128], strides = [1, 1]} : vector<8x512xf32> to vector<8x128xf32>
    %313 = arith.negf %312 : vector<8x128xf32>
    %314 = math.exp %313 : vector<8x128xf32>
    %cst_129 = arith.constant 1.000000e+00 : f32
    %315 = vector.broadcast %cst_129 : f32 to vector<8x128xf32>
    %316 = arith.addf %315, %314 : vector<8x128xf32>
    %317 = arith.divf %315, %316 : vector<8x128xf32>
    %318 = vector.extract_strided_slice %305 {offsets = [0, 256], sizes = [8, 128], strides = [1, 1]} : vector<8x512xf32> to vector<8x128xf32>
    %319 = math.tanh %318 : vector<8x128xf32>
    %320 = vector.extract_strided_slice %305 {offsets = [0, 384], sizes = [8, 128], strides = [1, 1]} : vector<8x512xf32> to vector<8x128xf32>
    %321 = arith.negf %320 : vector<8x128xf32>
    %322 = math.exp %321 : vector<8x128xf32>
    %cst_130 = arith.constant 1.000000e+00 : f32
    %323 = vector.broadcast %cst_130 : f32 to vector<8x128xf32>
    %324 = arith.addf %323, %322 : vector<8x128xf32>
    %325 = arith.divf %323, %324 : vector<8x128xf32>
    %326 = arith.mulf %317, %300 : vector<8x128xf32>
    %327 = arith.mulf %311, %319 : vector<8x128xf32>
    %328 = arith.addf %326, %327 : vector<8x128xf32>
    %329 = math.tanh %328 : vector<8x128xf32>
    %330 = arith.mulf %325, %329 : vector<8x128xf32>
    %331 = arith.index_cast %298 : i32 to index
    %c0_131 = arith.constant 0 : index
    %332 = vector.load %arg18[%331, %c0_131] : memref<64x128xf32, #tpu.memory_space<vmem>>, vector<8x128xf32>
    tpu.vector_store %arg18[%331, %c0_131], %330 {strides = array<i32>} : memref<64x128xf32, #tpu.memory_space<vmem>>, vector<8x128xf32>,
    %c8_i32_132 = arith.constant 8 : i32
    %333 = arith.muli %arg0, %c8_i32_132 : i32
    %334 = arith.addi %333, %c7_i32 : i32
    %c20_i32_133 = arith.constant 20 : i32
    %335 = arith.cmpi slt, %334, %c20_i32_133 : i32
    %336 = arith.extui %335 : i1 to i32
    %c0_i32_134 = arith.constant 0 : i32
    %337 = arith.cmpi ne, %336, %c0_i32_134 : i32
    scf.if %337 {
      %c0_162 = arith.constant 0 : index
      %c0_163 = arith.constant 0 : index
      %371 = vector.load %arg15[%c0_162, %c0_163] : memref<8x128xf32, #tpu.memory_space<vmem>>, vector<8x128xf32>
      tpu.vector_store %arg15[%c0_162, %c0_163], %330 {strides = array<i32>} : memref<8x128xf32, #tpu.memory_space<vmem>>, vector<8x128xf32>,
      %c0_164 = arith.constant 0 : index
      %c0_165 = arith.constant 0 : index
      %372 = vector.load %arg16[%c0_164, %c0_165] : memref<8x128xf32, #tpu.memory_space<vmem>>, vector<8x128xf32>
      tpu.vector_store %arg16[%c0_164, %c0_165], %328 {strides = array<i32>} : memref<8x128xf32, #tpu.memory_space<vmem>>, vector<8x128xf32>,
    } else {
    }
    %c8_i32_135 = arith.constant 8 : i32
    %c0_136 = arith.constant 0 : index
    %c0_137 = arith.constant 0 : index
    %338 = vector.load %arg18[%c0_136, %c0_137] : memref<64x128xf32, #tpu.memory_space<vmem>>, vector<64x128xf32>
    %c0_138 = arith.constant 0 : index
    %c0_139 = arith.constant 0 : index
    %339 = vector.load %arg14[%c0_138, %c0_139] : memref<128x128xf32, #tpu.memory_space<vmem>>, vector<128x128xf32>
    %cst_140 = arith.constant dense<0.000000e+00> : vector<64x128xf32>
    %340 = tpu.matmul %338, %339, %cst_140 {dimension_numbers = #tpu.dot_dimension_numbers<[1], [0], [0], [1], [0, 0, 1, 1], [], []>} : vector<64x128xf32>, vector<128x128xf32>, vector<64x128xf32> -> vector<64x128xf32>
    %c0_141 = arith.constant 0 : index
    %c0_142 = arith.constant 0 : index
    %341 = vector.load %arg6[%c0_141, %c0_142] : memref<1x128xf32, #tpu.memory_space<vmem>>, vector<1x128xf32>
    %342 = vector.broadcast %341 : vector<1x128xf32> to vector<64x128xf32>
    %343 = arith.addf %340, %342 : vector<64x128xf32>
    %344 = vector.extract_strided_slice %343 {offsets = [0, 0], sizes = [8, 128], strides = [1, 1]} : vector<64x128xf32> to vector<8x128xf32>
    %345 = vector.shape_cast %344 : vector<8x128xf32> to vector<8x1x128xf32>
    %c0_143 = arith.constant 0 : index
    %c0_144 = arith.constant 0 : index
    %c0_145 = arith.constant 0 : index
    %346 = vector.load %arg9[%c0_143, %c0_144, %c0_145] : memref<8x8x128xf32, #tpu.memory_space<vmem>>, vector<8x1x128xf32>
    tpu.vector_store %arg9[%c0_143, %c0_144, %c0_145], %345 {strides = array<i32>} : memref<8x8x128xf32, #tpu.memory_space<vmem>>, vector<8x1x128xf32>,
    %347 = vector.extract_strided_slice %343 {offsets = [8, 0], sizes = [8, 128], strides = [1, 1]} : vector<64x128xf32> to vector<8x128xf32>
    %348 = vector.shape_cast %347 : vector<8x128xf32> to vector<8x1x128xf32>
    %c0_146 = arith.constant 0 : index
    %c1 = arith.constant 1 : index
    %c0_147 = arith.constant 0 : index
    %349 = vector.load %arg9[%c0_146, %c1, %c0_147] : memref<8x8x128xf32, #tpu.memory_space<vmem>>, vector<8x1x128xf32>
    tpu.vector_store %arg9[%c0_146, %c1, %c0_147], %348 {strides = array<i32>} : memref<8x8x128xf32, #tpu.memory_space<vmem>>, vector<8x1x128xf32>,
    %350 = vector.extract_strided_slice %343 {offsets = [16, 0], sizes = [8, 128], strides = [1, 1]} : vector<64x128xf32> to vector<8x128xf32>
    %351 = vector.shape_cast %350 : vector<8x128xf32> to vector<8x1x128xf32>
    %c0_148 = arith.constant 0 : index
    %c2 = arith.constant 2 : index
    %c0_149 = arith.constant 0 : index
    %352 = vector.load %arg9[%c0_148, %c2, %c0_149] : memref<8x8x128xf32, #tpu.memory_space<vmem>>, vector<8x1x128xf32>
    tpu.vector_store %arg9[%c0_148, %c2, %c0_149], %351 {strides = array<i32>} : memref<8x8x128xf32, #tpu.memory_space<vmem>>, vector<8x1x128xf32>,
    %353 = vector.extract_strided_slice %343 {offsets = [24, 0], sizes = [8, 128], strides = [1, 1]} : vector<64x128xf32> to vector<8x128xf32>
    %354 = vector.shape_cast %353 : vector<8x128xf32> to vector<8x1x128xf32>
    %c0_150 = arith.constant 0 : index
    %c3 = arith.constant 3 : index
    %c0_151 = arith.constant 0 : index
    %355 = vector.load %arg9[%c0_150, %c3, %c0_151] : memref<8x8x128xf32, #tpu.memory_space<vmem>>, vector<8x1x128xf32>
    tpu.vector_store %arg9[%c0_150, %c3, %c0_151], %354 {strides = array<i32>} : memref<8x8x128xf32, #tpu.memory_space<vmem>>, vector<8x1x128xf32>,
    %356 = vector.extract_strided_slice %343 {offsets = [32, 0], sizes = [8, 128], strides = [1, 1]} : vector<64x128xf32> to vector<8x128xf32>
    %357 = vector.shape_cast %356 : vector<8x128xf32> to vector<8x1x128xf32>
    %c0_152 = arith.constant 0 : index
    %c4 = arith.constant 4 : index
    %c0_153 = arith.constant 0 : index
    %358 = vector.load %arg9[%c0_152, %c4, %c0_153] : memref<8x8x128xf32, #tpu.memory_space<vmem>>, vector<8x1x128xf32>
    tpu.vector_store %arg9[%c0_152, %c4, %c0_153], %357 {strides = array<i32>} : memref<8x8x128xf32, #tpu.memory_space<vmem>>, vector<8x1x128xf32>,
    %359 = vector.extract_strided_slice %343 {offsets = [40, 0], sizes = [8, 128], strides = [1, 1]} : vector<64x128xf32> to vector<8x128xf32>
    %360 = vector.shape_cast %359 : vector<8x128xf32> to vector<8x1x128xf32>
    %c0_154 = arith.constant 0 : index
    %c5 = arith.constant 5 : index
    %c0_155 = arith.constant 0 : index
    %361 = vector.load %arg9[%c0_154, %c5, %c0_155] : memref<8x8x128xf32, #tpu.memory_space<vmem>>, vector<8x1x128xf32>
    tpu.vector_store %arg9[%c0_154, %c5, %c0_155], %360 {strides = array<i32>} : memref<8x8x128xf32, #tpu.memory_space<vmem>>, vector<8x1x128xf32>,
    %362 = vector.extract_strided_slice %343 {offsets = [48, 0], sizes = [8, 128], strides = [1, 1]} : vector<64x128xf32> to vector<8x128xf32>
    %363 = vector.shape_cast %362 : vector<8x128xf32> to vector<8x1x128xf32>
    %c0_156 = arith.constant 0 : index
    %c6 = arith.constant 6 : index
    %c0_157 = arith.constant 0 : index
    %364 = vector.load %arg9[%c0_156, %c6, %c0_157] : memref<8x8x128xf32, #tpu.memory_space<vmem>>, vector<8x1x128xf32>
    tpu.vector_store %arg9[%c0_156, %c6, %c0_157], %363 {strides = array<i32>} : memref<8x8x128xf32, #tpu.memory_space<vmem>>, vector<8x1x128xf32>,
    %365 = vector.extract_strided_slice %343 {offsets = [56, 0], sizes = [8, 128], strides = [1, 1]} : vector<64x128xf32> to vector<8x128xf32>
    %366 = vector.shape_cast %365 : vector<8x128xf32> to vector<8x1x128xf32>
    %c0_158 = arith.constant 0 : index
    %c7 = arith.constant 7 : index
    %c0_159 = arith.constant 0 : index
    %367 = vector.load %arg9[%c0_158, %c7, %c0_159] : memref<8x8x128xf32, #tpu.memory_space<vmem>>, vector<8x1x128xf32>
    tpu.vector_store %arg9[%c0_158, %c7, %c0_159], %366 {strides = array<i32>} : memref<8x8x128xf32, #tpu.memory_space<vmem>>, vector<8x1x128xf32>,
    %c2_i32_160 = arith.constant 2 : i32
    %368 = arith.cmpi eq, %arg0, %c2_i32_160 : i32
    %369 = arith.extui %368 : i1 to i32
    %c0_i32_161 = arith.constant 0 : i32
    %370 = arith.cmpi ne, %369, %c0_i32_161 : i32
    scf.if %370 {
      %c0_162 = arith.constant 0 : index
      %c0_163 = arith.constant 0 : index
      %371 = vector.load %arg15[%c0_162, %c0_163] : memref<8x128xf32, #tpu.memory_space<vmem>>, vector<8x128xf32>
      %c0_164 = arith.constant 0 : index
      %c0_165 = arith.constant 0 : index
      %372 = vector.load %arg10[%c0_164, %c0_165] : memref<8x128xf32, #tpu.memory_space<vmem>>, vector<8x128xf32>
      tpu.vector_store %arg10[%c0_164, %c0_165], %371 {strides = array<i32>} : memref<8x128xf32, #tpu.memory_space<vmem>>, vector<8x128xf32>,
      %c0_166 = arith.constant 0 : index
      %c0_167 = arith.constant 0 : index
      %373 = vector.load %arg16[%c0_166, %c0_167] : memref<8x128xf32, #tpu.memory_space<vmem>>, vector<8x128xf32>
      %c0_168 = arith.constant 0 : index
      %c0_169 = arith.constant 0 : index
      %374 = vector.load %arg11[%c0_168, %c0_169] : memref<8x128xf32, #tpu.memory_space<vmem>>, vector<8x128xf32>
      tpu.vector_store %arg11[%c0_168, %c0_169], %373 {strides = array<i32>} : memref<8x128xf32, #tpu.memory_space<vmem>>, vector<8x128xf32>,
    } else {
    }
    return
  }
  func.func @transform_0(%arg0: i32) -> (i32, i32) {
    %c0_i32 = arith.constant 0 : i32
    %c0_i32_0 = arith.constant 0 : i32
    return %arg0, %c0_i32 : i32, i32
  }
  func.func @transform_3(%arg0: i32) -> (i32, i32) {
    %c0_i32 = arith.constant 0 : i32
    %c0_i32_0 = arith.constant 0 : i32
    %c0_i32_1 = arith.constant 0 : i32
    return %c0_i32, %c0_i32_0 : i32, i32
  }
  func.func @transform_5(%arg0: i32) -> (i32, i32) {
    %c0_i32 = arith.constant 0 : i32
    %c0_i32_0 = arith.constant 0 : i32
    %c0_i32_1 = arith.constant 0 : i32
    return %c0_i32, %c0_i32_0 : i32, i32
  }
  func.func @transform_8(%arg0: i32) -> (i32, i32, i32) {
    %c0_i32 = arith.constant 0 : i32
    %c0_i32_0 = arith.constant 0 : i32
    %c0_i32_1 = arith.constant 0 : i32
    return %c0_i32, %arg0, %c0_i32_0 : i32, i32, i32
  }
  func.func @transform_9(%arg0: i32) -> (i32, i32) {
    %c0_i32 = arith.constant 0 : i32
    %c0_i32_0 = arith.constant 0 : i32
    %c0_i32_1 = arith.constant 0 : i32
    return %c0_i32, %c0_i32_0 : i32, i32
  }
  func.func @transform_10(%arg0: i32) -> (i32, i32) {
    %c0_i32 = arith.constant 0 : i32
    %c0_i32_0 = arith.constant 0 : i32
    %c0_i32_1 = arith.constant 0 : i32
    return %c0_i32, %c0_i32_0 : i32, i32
  }
}

</mosaic_0001>

<llo_original>
// kernel: char_lstm_forward.1
$region0: #{char_lstm_forward.1}
  #allocation0 [shape = 'u32[]', space=smem, size = 0x4, offset = 0x4, fixed_abs, tag = 'smem constant byte address 0x4 - core index']
  #allocation1 [shape = 'u32[144,128]{1,0:T(1,128)}', space=vmem, size = 0x12000, scoped, tag = 'internal scratch']
  #allocation2 [shape = 'f32[32,512]{1,0:T(8,128)}', space=vmem, size = 0x10000, scoped, tag = 'scratch operand']
  #allocation3 [shape = 'f32[128,512]{1,0:T(8,128)}', space=vmem, size = 0x40000, scoped, tag = 'scratch operand']
  #allocation4 [shape = 'f32[128,128]{1,0:T(8,128)}', space=vmem, size = 0x10000, scoped, tag = 'scratch operand']
  #allocation5 [shape = 'f32[8,128]{1,0:T(8,128)}', space=vmem, size = 0x1000, scoped, tag = 'scratch operand']
  #allocation6 [shape = 'f32[8,128]{1,0:T(8,128)}', space=vmem, size = 0x1000, scoped, tag = 'scratch operand']
  #allocation7 [shape = 'f32[64,512]{1,0:T(8,128)}', space=vmem, size = 0x20000, scoped, tag = 'scratch operand']
  #allocation8 [shape = 'f32[64,128]{1,0:T(8,128)}', space=vmem, size = 0x8000, scoped, tag = 'scratch operand']
  #allocation11 [shape = 's32[]', space=sflag, size = 0x4, offset = 0, fixed_abs, tag = 'sflag constant byte address 0x0 - dummy sync flag']
  #allocation13 [shape = 's32[]', space=sflag, size = 0x4, offset = 0, fixed_abs, tag = 'sflag constant byte address 0x0 - dummy sync flag']
  #allocation15 [shape = 's32[]', space=sflag, size = 0x4, offset = 0, fixed_abs, tag = 'sflag constant byte address 0x0 - dummy sync flag']
  #allocation17 [shape = 's32[]', space=sflag, size = 0x4, offset = 0, fixed_abs, tag = 'sflag constant byte address 0x0 - dummy sync flag']
  #allocation19 [shape = 's32[]', space=sflag, size = 0x4, offset = 0, fixed_abs, tag = 'sflag constant byte address 0x0 - dummy sync flag']
  %s0 = inlined_call_operand.vmem [shape: f32[192,32], index: 0, kind: input, shape index: {}]
  %s1 = inlined_call_operand.vmem [shape: f32[32,512], index: 1, kind: input, shape index: {}]
  %s2 = inlined_call_operand.vmem [shape: f32[128,512], index: 2, kind: input, shape index: {}]
  %s3 = inlined_call_operand.vmem [shape: f32[1,512], index: 3, kind: input, shape index: {}]
  %s4 = inlined_call_operand.vmem [shape: f32[128,128], index: 4, kind: input, shape index: {}]
  %s5 = inlined_call_operand.vmem [shape: f32[1,128], index: 5, kind: input, shape index: {}]
  %s6 = inlined_call_operand.vmem [shape: f32[8,128], index: 6, kind: input, shape index: {}, may-alias: {6,7}]
  %s7 = inlined_call_operand.vmem [shape: f32[8,128], index: 7, kind: input, shape index: {}, may-alias: {6,7}]
  %s8 = inlined_call_operand.vmem [shape: f32[8,24,128], index: 8, kind: output, shape index: {0}]
  %s9 = inlined_call_operand.vmem [shape: f32[8,128], index: 9, kind: output, shape index: {1}]
  %s10 = inlined_call_operand.vmem [shape: f32[8,128], index: 10, kind: output, shape index: {2}]
  %11 = xla_tuple %s8, %s9, %s10
  %s12 = sld [smem:[#allocation0]]
  $region310: #{char_lstm_forward.1} parent=0
    _
  %s14 = ssub.s32 1, %s12
  %s15 = scalar_select 0, %s14, %s12
  $region1: #{char_lstm_forward.1} parent=0
    #allocation9 [shape = 'u8[65536]{0}', space=vmem, size = 0x10000, scoped, tag = 'output window, operand 0']
    loop: start=0, step=1, limit=5
    $region2: #{char_lstm_forward.1} parent=1 // loop_pre_header
      _
    $region3: #{char_lstm_forward.1} parent=1 // loop_header
      %s17 = sphi 0, %s21
      %p18 = scmp.ge.s32.totalorder %s17, 5
      %s27 = sphi 0, %s29
      %s30 = sphi 0, %s27
      %s31 = sphi 0, %s30
      %s47 = sphi 0, %s31
      %s51 = sphi 0, %s51
      %s53 = sphi 0, %s51
      %s54 = sphi 0, %s53
      %s68 = sphi 0, %s54
      %s72 = sphi 0, %s72
      %s74 = sphi 0, %s72
      %s75 = sphi 0, %s74
      %s89 = sphi 0, %s75
      %s95 = sphi 0, %s97
      %s98 = sphi 0, %s95
      %s99 = sphi 0, %s98
      %s115 = sphi 0, %s99
      %s119 = sphi 0, %s119
      %s121 = sphi 0, %s119
      %s122 = sphi 0, %s121
      %s136 = sphi 0, %s122
      %s140 = sphi 0, %s140
      %s142 = sphi 0, %s140
      %s143 = sphi 0, %s142
      %s157 = sphi 0, %s143
    $region4: #{char_lstm_forward.1} parent=1 // loop_header_branch
      %20 = sbr.rel (%p18) target = $region8
    $region5: #{char_lstm_forward.1} parent=1 // loop_body
      %s22 = ssub.s32 %s17, 1
      %s23 = ssub.s32 %s17, 2
      %s24 = sadd.s32 %s17, 1
      %s25 = ssub.s32 %s17, %s24
      %p26 = scmp.eq.s32.totalorder %s25, 0
      %s28 = sadd.s32 %s27, 1
      %s29 = scalar_select %p26, %s27, %s28
      %p32 = pneg %p26
      %p33 = scmp.eq.s32.totalorder %s17, 2
      %p34 = por %p32, %p33
      %p35 = scmp.ne.s32.totalorder %s27, %s30
      %p36 = scmp.eq.s32.totalorder %s17, 0
      %p37 = por %p35, %p36
      %p38 = scmp.ne.s32.totalorder %s27, %s30
      %p39 = scmp.eq.s32.totalorder %s22, 2
      %p40 = por %p38, %p39
      %p41 = scmp.ne.s32.totalorder %s30, %s31
      %p42 = scmp.eq.s32.totalorder %s22, 0
      %p43 = por %p41, %p42
      %p44 = scmp.ne.s32.totalorder %s30, %s31
      %p45 = scmp.eq.s32.totalorder %s23, 2
      %p46 = por %p44, %p45
      %p48 = scmp.ne.s32.totalorder %s31, %s47
      %p49 = scmp.eq.s32.totalorder %s23, 0
      %p50 = por %p48, %p49
      %s52 = sadd.s32 %s51, 1
      %p55 = scmp.eq.s32.totalorder %s17, 2
      %p56 = scmp.ne.s32.totalorder %s51, %s53
      %p57 = scmp.eq.s32.totalorder %s17, 0
      %p58 = por %p56, %p57
      %p59 = scmp.ne.s32.totalorder %s51, %s53
      %p60 = scmp.eq.s32.totalorder %s22, 2
      %p61 = por %p59, %p60
      %p62 = scmp.ne.s32.totalorder %s53, %s54
      %p63 = scmp.eq.s32.totalorder %s22, 0
      %p64 = por %p62, %p63
      %p65 = scmp.ne.s32.totalorder %s53, %s54
      %p66 = scmp.eq.s32.totalorder %s23, 2
      %p67 = por %p65, %p66
      %p69 = scmp.ne.s32.totalorder %s54, %s68
      %p70 = scmp.eq.s32.totalorder %s23, 0
      %p71 = por %p69, %p70
      %s73 = sadd.s32 %s72, 1
      %p76 = scmp.eq.s32.totalorder %s17, 2
      %p77 = scmp.ne.s32.totalorder %s72, %s74
      %p78 = scmp.eq.s32.totalorder %s17, 0
      %p79 = por %p77, %p78
      %p80 = scmp.ne.s32.totalorder %s72, %s74
      %p81 = scmp.eq.s32.totalorder %s22, 2
      %p82 = por %p80, %p81
      %p83 = scmp.ne.s32.totalorder %s74, %s75
      %p84 = scmp.eq.s32.totalorder %s22, 0
      %p85 = por %p83, %p84
      %p86 = scmp.ne.s32.totalorder %s74, %s75
      %p87 = scmp.eq.s32.totalorder %s23, 2
      %p88 = por %p86, %p87
      %p90 = scmp.ne.s32.totalorder %s75, %s89
      %p91 = scmp.eq.s32.totalorder %s23, 0
      %p92 = por %p90, %p91
      %s93 = ssub.s32 %s17, %s24
      %p94 = scmp.eq.s32.totalorder %s93, 0
      %s96 = sadd.s32 %s95, 1
      %s97 = scalar_select %p94, %s95, %s96
      %p100 = pneg %p94
      %p101 = scmp.eq.s32.totalorder %s17, 2
      %p102 = por %p100, %p101
      %p103 = scmp.ne.s32.totalorder %s95, %s98
      %p104 = scmp.eq.s32.totalorder %s17, 0
      %p105 = por %p103, %p104
      %p106 = scmp.ne.s32.totalorder %s95, %s98
      %p107 = scmp.eq.s32.totalorder %s22, 2
      %p108 = por %p106, %p107
      %p109 = scmp.ne.s32.totalorder %s98, %s99
      %p110 = scmp.eq.s32.totalorder %s22, 0
      %p111 = por %p109, %p110
      %p112 = scmp.ne.s32.totalorder %s98, %s99
      %p113 = scmp.eq.s32.totalorder %s23, 2
      %p114 = por %p112, %p113
      %p116 = scmp.ne.s32.totalorder %s99, %s115
      %p117 = scmp.eq.s32.totalorder %s23, 0
      %p118 = por %p116, %p117
      %s120 = sadd.s32 %s119, 1
      %p123 = scmp.eq.s32.totalorder %s17, 2
      %p124 = scmp.ne.s32.totalorder %s119, %s121
      %p125 = scmp.eq.s32.totalorder %s17, 0
      %p126 = por %p124, %p125
      %p127 = scmp.ne.s32.totalorder %s119, %s121
      %p128 = scmp.eq.s32.totalorder %s22, 2
      %p129 = por %p127, %p128
      %p130 = scmp.ne.s32.totalorder %s121, %s122
      %p131 = scmp.eq.s32.totalorder %s22, 0
      %p132 = por %p130, %p131
      %p133 = scmp.ne.s32.totalorder %s121, %s122
      %p134 = scmp.eq.s32.totalorder %s23, 2
      %p135 = por %p133, %p134
      %p137 = scmp.ne.s32.totalorder %s122, %s136
      %p138 = scmp.eq.s32.totalorder %s23, 0
      %p139 = por %p137, %p138
      %s141 = sadd.s32 %s140, 1
      %p144 = scmp.eq.s32.totalorder %s17, 2
      %p145 = scmp.ne.s32.totalorder %s140, %s142
      %p146 = scmp.eq.s32.totalorder %s17, 0
      %p147 = por %p145, %p146
      %p148 = scmp.ne.s32.totalorder %s140, %s142
      %p149 = scmp.eq.s32.totalorder %s22, 2
      %p150 = por %p148, %p149
      %p151 = scmp.ne.s32.totalorder %s142, %s143
      %p152 = scmp.eq.s32.totalorder %s22, 0
      %p153 = por %p151, %p152
      %p154 = scmp.ne.s32.totalorder %s142, %s143
      %p155 = scmp.eq.s32.totalorder %s23, 2
      %p156 = por %p154, %p155
      %p158 = scmp.ne.s32.totalorder %s143, %s157
      %p159 = scmp.eq.s32.totalorder %s23, 0
      %p160 = por %p158, %p159
      %p161 = scmp.le.s32.totalorder 1, %s17
      %p162 = scmp.lt.s32.totalorder %s17, 4
      %p163 = pnand %p161, %p162
      %p164 = pneg %p163
      // Predicated region
      $region9: #{char_lstm_forward.1} parent=5 // pred_check
        _
      $region10: #{char_lstm_forward.1} parent=5 // pred_check_branch
        %166 = sbr.rel (%p163) target = $region12
      $region11: #{char_lstm_forward.1} parent=5 // pred_region
        %s167 = ssub.s32 %s17, 1
        // Predicated region
        $region13: #{char_lstm_forward.1} parent=11 // pred_check
          %p168 = pneg %p64
        $region14: #{char_lstm_forward.1} parent=11 // pred_check_branch
          %170 = sbr.rel (%p168) target = $region16
        $region15: #{char_lstm_forward.1} parent=11 // pred_region
          _
        $region16: #{char_lstm_forward.1} parent=11 // pred_fallthru
          _
        // Predicated region
        $region17: #{char_lstm_forward.1} parent=11 // pred_check
          %p171 = pneg %p85
        $region18: #{char_lstm_forward.1} parent=11 // pred_check_branch
          %173 = sbr.rel (%p171) target = $region20
        $region19: #{char_lstm_forward.1} parent=11 // pred_region
          _
        $region20: #{char_lstm_forward.1} parent=11 // pred_fallthru
          _
      $region12: #{char_lstm_forward.1} parent=5 // pred_fallthru
        _
      %p174 = scmp.lt.s32.totalorder %s17, 3
      // Predicated region
      $region21: #{char_lstm_forward.1} parent=5 // pred_check
        %p175 = pneg %p174
      $region22: #{char_lstm_forward.1} parent=5 // pred_check_branch
        %177 = sbr.rel (%p175) target = $region24
      $region23: #{char_lstm_forward.1} parent=5 // pred_region
        // Predicated region
        $region25: #{char_lstm_forward.1} parent=23 // pred_check
          %p178 = pneg %p37
        $region26: #{char_lstm_forward.1} parent=23 // pred_check_branch
          %180 = sbr.rel (%p178) target = $region28
        $region27: #{char_lstm_forward.1} parent=23 // pred_region
          %s181 = smul.u32 8, %s17
          %p182 = scmp.lt.s32.totalorder %s181, 23
          %s183 = scalar_select %p182, %s181, 23
          %s184 = smul.addr %s183, 8
          %s185 = scalar_lea.vmem %s0, %s184
          %s186 = smul.u32 8, %s17
        $region28: #{char_lstm_forward.1} parent=23 // pred_fallthru
          _
      $region24: #{char_lstm_forward.1} parent=5 // pred_fallthru
        _
      %p187 = scmp.le.s32.totalorder 1, %s17
      %p188 = scmp.lt.s32.totalorder %s17, 4
      %p189 = pnand %p187, %p188
      %p190 = pneg %p189
      // Predicated region
      $region29: #{char_lstm_forward.1} parent=5 // pred_check
        _
      $region30: #{char_lstm_forward.1} parent=5 // pred_check_branch
        %192 = sbr.rel (%p189) target = $region32
      $region31: #{char_lstm_forward.1} parent=5 // pred_region
        %s193 = ssub.s32 %s17, 1
        %s194 = smul.u32 8, %s22
        %p195 = scmp.lt.s32.totalorder %s194, 23
        %s196 = scalar_select %p195, %s194, 23
        %s197 = smul.addr %s196, 8
        %s198 = scalar_lea.vmem %s0, %s197
        %p199 = pneg %p43
        %p200 = pneg %p40
        %p201 = pneg %p64
        %p202 = pneg %p61
        %p203 = pneg %p85
        %p204 = pneg %p82
        %p205 = pneg %p111
        %p206 = pneg %p108
        %s207 = sand.u32 %s98, 1
        %s208 = sand.u32 %s98, 1
        %s209 = smul.addr %s208, 64
        %s210 = scalar_lea.vmem [#allocation9], %s209
        %p211 = pneg %p132
        %p212 = pneg %p129
        %p213 = pneg %p153
        %p214 = pneg %p150
        %s215 = smul.u32 8, %s22
        %p216 = scmp.lt.s32.totalorder %s215, 23
        %s217 = scalar_select %p216, %s215, 23
        %s218 = smul.addr %s217, 8
        %s219 = scalar_lea.vmem %s0, %s218
        %s220 = smul.u32 8, %s22
        %p221 = scmp.eq.s32.totalorder %s22, 0
        // Predicated region
        $region33: #{char_lstm_forward.1} parent=31 // pred_check
          %p222 = pneg %p221
        $region34: #{char_lstm_forward.1} parent=31 // pred_check_branch
          %224 = sbr.rel (%p222) target = $region36
        $region35: #{char_lstm_forward.1} parent=31 // pred_region
          $region37: #{char_lstm_forward.1} parent=35
            #allocation10 [shape = 's32[1]{0}', space=sflag, size = 0x4, scoped, tag = 'scoped memory for char_lstm_forward.1']
            %p226 = scmp.lt.u32.totalorder 128, 8
            %p227 = pneg %p226
            // Predicated region
            $region38: #{char_lstm_forward.1} parent=37 // pred_check
              _
            $region39: #{char_lstm_forward.1} parent=37 // pred_check_branch
              %229 = sbr.rel (%p226) target = $region41
            $region40: #{char_lstm_forward.1} parent=37 // pred_region
              %s245 = sand.u32 128, 7
              %p246 = scmp.eq.s32.totalorder %s245, 0
              // Predicated region
              $region53: #{char_lstm_forward.1} parent=40 // pred_check
                %p247 = pneg %p246
              $region54: #{char_lstm_forward.1} parent=40 // pred_check_branch
                %249 = sbr.rel (%p247) target = $region56
              $region55: #{char_lstm_forward.1} parent=40 // pred_region
                loop: start=0, step=1, limit=1
                $region57: #{char_lstm_forward.1} parent=55 // loop_pre_header
                  _
                $region58: #{char_lstm_forward.1} parent=55 // loop_header
                  %s251 = sphi 0, %s255
                  %p252 = scmp.ge.s32.totalorder %s251, 1
                  %s256 = sphi %s1, %s1
                  %s257 = sphi [#allocation2], [#allocation2]
                $region59: #{char_lstm_forward.1} parent=55 // loop_header_branch
                  %254 = sbr.rel (%p252) target = $region63
                $region60: #{char_lstm_forward.1} parent=55 // loop_body
                  %v258 = vld [vmem:[%s256] sm:$0xff]
                  %259 = vst [vmem:[%s257] sm:$0xff] %v258
                  %v260 = vld [vmem:[%s256 + $0x8] sm:$0xff]
                  %261 = vst [vmem:[%s257 + $0x8] sm:$0xff] %v260
                  %v262 = vld [vmem:[%s256 + $0x10] sm:$0xff]
                  %263 = vst [vmem:[%s257 + $0x10] sm:$0xff] %v262
                  %v264 = vld [vmem:[%s256 + $0x18] sm:$0xff]
                  %265 = vst [vmem:[%s257 + $0x18] sm:$0xff] %v264
                  %v266 = vld [vmem:[%s256 + $0x20] sm:$0xff]
                  %267 = vst [vmem:[%s257 + $0x20] sm:$0xff] %v266
                  %v268 = vld [vmem:[%s256 + $0x28] sm:$0xff]
                  %269 = vst [vmem:[%s257 + $0x28] sm:$0xff] %v268
                  %v270 = vld [vmem:[%s256 + $0x30] sm:$0xff]
                  %271 = vst [vmem:[%s257 + $0x30] sm:$0xff] %v270
                  %v272 = vld [vmem:[%s256 + $0x38] sm:$0xff]
                  %273 = vst [vmem:[%s257 + $0x38] sm:$0xff] %v272
                  %v274 = vld [vmem:[%s256 + $0x40] sm:$0xff]
                  %275 = vst [vmem:[%s257 + $0x40] sm:$0xff] %v274
                  %v276 = vld [vmem:[%s256 + $0x48] sm:$0xff]
                  %277 = vst [vmem:[%s257 + $0x48] sm:$0xff] %v276
                  %v278 = vld [vmem:[%s256 + $0x50] sm:$0xff]
                  %279 = vst [vmem:[%s257 + $0x50] sm:$0xff] %v278
                  %v280 = vld [vmem:[%s256 + $0x58] sm:$0xff]
                  %281 = vst [vmem:[%s257 + $0x58] sm:$0xff] %v280
                  %v282 = vld [vmem:[%s256 + $0x60] sm:$0xff]
                  %283 = vst [vmem:[%s257 + $0x60] sm:$0xff] %v282
                  %v284 = vld [vmem:[%s256 + $0x68] sm:$0xff]
                  %285 = vst [vmem:[%s257 + $0x68] sm:$0xff] %v284
                  %v286 = vld [vmem:[%s256 + $0x70] sm:$0xff]
                  %287 = vst [vmem:[%s257 + $0x70] sm:$0xff] %v286
                  %v288 = vld [vmem:[%s256 + $0x78] sm:$0xff]
                  %289 = vst [vmem:[%s257 + $0x78] sm:$0xff] %v288
                $region61: #{char_lstm_forward.1} parent=55 // loop_footer
                  %s255 = sadd.s32 1, %s251
                $region62: #{char_lstm_forward.1} parent=55 // loop_footer_branch
                  %250 = sbr.rel target = $region58
                $region63: #{char_lstm_forward.1} parent=55 // loop_exit
                  _
              $region56: #{char_lstm_forward.1} parent=40 // pred_fallthru
                _
              %p290 = pneg %p246
              // Predicated region
              $region64: #{char_lstm_forward.1} parent=40 // pred_check
                _
              $region65: #{char_lstm_forward.1} parent=40 // pred_check_branch
                %292 = sbr.rel (%p246) target = $region67
              $region66: #{char_lstm_forward.1} parent=40 // pred_region
                %s293 = sand.u32 128, 7
              $region67: #{char_lstm_forward.1} parent=40 // pred_fallthru
                _
            $region41: #{char_lstm_forward.1} parent=37 // pred_fallthru
              _
            // Predicated region
            $region42: #{char_lstm_forward.1} parent=37 // pred_check
              %p230 = pneg %p226
            $region43: #{char_lstm_forward.1} parent=37 // pred_check_branch
              %232 = sbr.rel (%p230) target = $region45
            $region44: #{char_lstm_forward.1} parent=37 // pred_region
              %s233 = sshll.u32 1, 128
              %s234 = ssub.s32 %s233, 1
              loop: start=0, step=1, limit=1
              $region46: #{char_lstm_forward.1} parent=44 // loop_pre_header
                _
              $region47: #{char_lstm_forward.1} parent=44 // loop_header
                %s236 = sphi 0, %s240
                %p237 = scmp.ge.s32.totalorder %s236, 1
                %s241 = sphi %s1, %s1
                %s242 = sphi [#allocation2], [#allocation2]
              $region48: #{char_lstm_forward.1} parent=44 // loop_header_branch
                %239 = sbr.rel (%p237) target = $region52
              $region49: #{char_lstm_forward.1} parent=44 // loop_body
                %v243 = vld [vmem:[%s241] sm:%s234]
                %244 = vst [vmem:[%s242] sm:%s234] %v243
              $region50: #{char_lstm_forward.1} parent=44 // loop_footer
                %s240 = sadd.s32 1, %s236
              $region51: #{char_lstm_forward.1} parent=44 // loop_footer_branch
                %235 = sbr.rel target = $region47
              $region52: #{char_lstm_forward.1} parent=44 // loop_exit
                _
            $region45: #{char_lstm_forward.1} parent=37 // pred_fallthru
              _
            // Predicated region
            $region68: #{char_lstm_forward.1} parent=37 // pred_check
              _
            $region69: #{char_lstm_forward.1} parent=37 // pred_check_branch
              %296 = sbr.rel (0) target = $region71
            $region70: #{char_lstm_forward.1} parent=37 // pred_region
              %297 = vsyncadd [#allocation10], 2048
            $region71: #{char_lstm_forward.1} parent=37 // pred_fallthru
              _
            %s298 = smul.u32 8, 4
            %s299 = smul.u32 %s298, 4
            %s300 = sshll.u32 %s299, 4
            %301 = dma.done [#allocation10], %s300
          $region72: #{char_lstm_forward.1} parent=35
            #allocation12 [shape = 's32[1]{0}', space=sflag, size = 0x4, scoped, tag = 'scoped memory for char_lstm_forward.1']
            %p303 = scmp.lt.u32.totalorder 512, 8
            %p304 = pneg %p303
            // Predicated region
            $region73: #{char_lstm_forward.1} parent=72 // pred_check
              _
            $region74: #{char_lstm_forward.1} parent=72 // pred_check_branch
              %306 = sbr.rel (%p303) target = $region76
            $region75: #{char_lstm_forward.1} parent=72 // pred_region
              %s322 = sand.u32 512, 7
              %p323 = scmp.eq.s32.totalorder %s322, 0
              // Predicated region
              $region88: #{char_lstm_forward.1} parent=75 // pred_check
                %p324 = pneg %p323
              $region89: #{char_lstm_forward.1} parent=75 // pred_check_branch
                %326 = sbr.rel (%p324) target = $region91
              $region90: #{char_lstm_forward.1} parent=75 // pred_region
                loop: start=0, step=1, limit=1
                $region92: #{char_lstm_forward.1} parent=90 // loop_pre_header
                  _
                $region93: #{char_lstm_forward.1} parent=90 // loop_header
                  %s328 = sphi 0, %s332
                  %p329 = scmp.ge.s32.totalorder %s328, 1
                  %s333 = sphi %s2, %s2
                  %s334 = sphi [#allocation3], [#allocation3]
                $region94: #{char_lstm_forward.1} parent=90 // loop_header_branch
                  %331 = sbr.rel (%p329) target = $region98
                $region95: #{char_lstm_forward.1} parent=90 // loop_body
                  %v335 = vld [vmem:[%s333] sm:$0xff]
                  %336 = vst [vmem:[%s334] sm:$0xff] %v335
                  %v337 = vld [vmem:[%s333 + $0x8] sm:$0xff]
                  %338 = vst [vmem:[%s334 + $0x8] sm:$0xff] %v337
                  %v339 = vld [vmem:[%s333 + $0x10] sm:$0xff]
                  %340 = vst [vmem:[%s334 + $0x10] sm:$0xff] %v339
                  %v341 = vld [vmem:[%s333 + $0x18] sm:$0xff]
                  %342 = vst [vmem:[%s334 + $0x18] sm:$0xff] %v341
                  %v343 = vld [vmem:[%s333 + $0x20] sm:$0xff]
                  %344 = vst [vmem:[%s334 + $0x20] sm:$0xff] %v343
                  %v345 = vld [vmem:[%s333 + $0x28] sm:$0xff]
                  %346 = vst [vmem:[%s334 + $0x28] sm:$0xff] %v345
                  %v347 = vld [vmem:[%s333 + $0x30] sm:$0xff]
                  %348 = vst [vmem:[%s334 + $0x30] sm:$0xff] %v347
                  %v349 = vld [vmem:[%s333 + $0x38] sm:$0xff]
                  %350 = vst [vmem:[%s334 + $0x38] sm:$0xff] %v349
                  %v351 = vld [vmem:[%s333 + $0x40] sm:$0xff]
                  %352 = vst [vmem:[%s334 + $0x40] sm:$0xff] %v351
                  %v353 = vld [vmem:[%s333 + $0x48] sm:$0xff]
                  %354 = vst [vmem:[%s334 + $0x48] sm:$0xff] %v353
                  %v355 = vld [vmem:[%s333 + $0x50] sm:$0xff]
                  %356 = vst [vmem:[%s334 + $0x50] sm:$0xff] %v355
                  %v357 = vld [vmem:[%s333 + $0x58] sm:$0xff]
                  %358 = vst [vmem:[%s334 + $0x58] sm:$0xff] %v357
                  %v359 = vld [vmem:[%s333 + $0x60] sm:$0xff]
                  %360 = vst [vmem:[%s334 + $0x60] sm:$0xff] %v359
                  %v361 = vld [vmem:[%s333 + $0x68] sm:$0xff]
                  %362 = vst [vmem:[%s334 + $0x68] sm:$0xff] %v361
                  %v363 = vld [vmem:[%s333 + $0x70] sm:$0xff]
                  %364 = vst [vmem:[%s334 + $0x70] sm:$0xff] %v363
                  %v365 = vld [vmem:[%s333 + $0x78] sm:$0xff]
                  %366 = vst [vmem:[%s334 + $0x78] sm:$0xff] %v365
                  %v367 = vld [vmem:[%s333 + $0x80] sm:$0xff]
                  %368 = vst [vmem:[%s334 + $0x80] sm:$0xff] %v367
                  %v369 = vld [vmem:[%s333 + $0x88] sm:$0xff]
                  %370 = vst [vmem:[%s334 + $0x88] sm:$0xff] %v369
                  %v371 = vld [vmem:[%s333 + $0x90] sm:$0xff]
                  %372 = vst [vmem:[%s334 + $0x90] sm:$0xff] %v371
                  %v373 = vld [vmem:[%s333 + $0x98] sm:$0xff]
                  %374 = vst [vmem:[%s334 + $0x98] sm:$0xff] %v373
                  %v375 = vld [vmem:[%s333 + $0xa0] sm:$0xff]
                  %376 = vst [vmem:[%s334 + $0xa0] sm:$0xff] %v375
                  %v377 = vld [vmem:[%s333 + $0xa8] sm:$0xff]
                  %378 = vst [vmem:[%s334 + $0xa8] sm:$0xff] %v377
                  %v379 = vld [vmem:[%s333 + $0xb0] sm:$0xff]
                  %380 = vst [vmem:[%s334 + $0xb0] sm:$0xff] %v379
                  %v381 = vld [vmem:[%s333 + $0xb8] sm:$0xff]
                  %382 = vst [vmem:[%s334 + $0xb8] sm:$0xff] %v381
                  %v383 = vld [vmem:[%s333 + $0xc0] sm:$0xff]
                  %384 = vst [vmem:[%s334 + $0xc0] sm:$0xff] %v383
                  %v385 = vld [vmem:[%s333 + $0xc8] sm:$0xff]
                  %386 = vst [vmem:[%s334 + $0xc8] sm:$0xff] %v385
                  %v387 = vld [vmem:[%s333 + $0xd0] sm:$0xff]
                  %388 = vst [vmem:[%s334 + $0xd0] sm:$0xff] %v387
                  %v389 = vld [vmem:[%s333 + $0xd8] sm:$0xff]
                  %390 = vst [vmem:[%s334 + $0xd8] sm:$0xff] %v389
                  %v391 = vld [vmem:[%s333 + $0xe0] sm:$0xff]
                  %392 = vst [vmem:[%s334 + $0xe0] sm:$0xff] %v391
                  %v393 = vld [vmem:[%s333 + $0xe8] sm:$0xff]
                  %394 = vst [vmem:[%s334 + $0xe8] sm:$0xff] %v393
                  %v395 = vld [vmem:[%s333 + $0xf0] sm:$0xff]
                  %396 = vst [vmem:[%s334 + $0xf0] sm:$0xff] %v395
                  %v397 = vld [vmem:[%s333 + $0xf8] sm:$0xff]
                  %398 = vst [vmem:[%s334 + $0xf8] sm:$0xff] %v397
                  %v399 = vld [vmem:[%s333 + $0x100] sm:$0xff]
                  %400 = vst [vmem:[%s334 + $0x100] sm:$0xff] %v399
                  %v401 = vld [vmem:[%s333 + $0x108] sm:$0xff]
                  %402 = vst [vmem:[%s334 + $0x108] sm:$0xff] %v401
                  %v403 = vld [vmem:[%s333 + $0x110] sm:$0xff]
                  %404 = vst [vmem:[%s334 + $0x110] sm:$0xff] %v403
                  %v405 = vld [vmem:[%s333 + $0x118] sm:$0xff]
                  %406 = vst [vmem:[%s334 + $0x118] sm:$0xff] %v405
                  %v407 = vld [vmem:[%s333 + $0x120] sm:$0xff]
                  %408 = vst [vmem:[%s334 + $0x120] sm:$0xff] %v407
                  %v409 = vld [vmem:[%s333 + $0x128] sm:$0xff]
                  %410 = vst [vmem:[%s334 + $0x128] sm:$0xff] %v409
                  %v411 = vld [vmem:[%s333 + $0x130] sm:$0xff]
                  %412 = vst [vmem:[%s334 + $0x130] sm:$0xff] %v411
                  %v413 = vld [vmem:[%s333 + $0x138] sm:$0xff]
                  %414 = vst [vmem:[%s334 + $0x138] sm:$0xff] %v413
                  %v415 = vld [vmem:[%s333 + $0x140] sm:$0xff]
                  %416 = vst [vmem:[%s334 + $0x140] sm:$0xff] %v415
                  %v417 = vld [vmem:[%s333 + $0x148] sm:$0xff]
                  %418 = vst [vmem:[%s334 + $0x148] sm:$0xff] %v417
                  %v419 = vld [vmem:[%s333 + $0x150] sm:$0xff]
                  %420 = vst [vmem:[%s334 + $0x150] sm:$0xff] %v419
                  %v421 = vld [vmem:[%s333 + $0x158] sm:$0xff]
                  %422 = vst [vmem:[%s334 + $0x158] sm:$0xff] %v421
                  %v423 = vld [vmem:[%s333 + $0x160] sm:$0xff]
                  %424 = vst [vmem:[%s334 + $0x160] sm:$0xff] %v423
                  %v425 = vld [vmem:[%s333 + $0x168] sm:$0xff]
                  %426 = vst [vmem:[%s334 + $0x168] sm:$0xff] %v425
                  %v427 = vld [vmem:[%s333 + $0x170] sm:$0xff]
                  %428 = vst [vmem:[%s334 + $0x170] sm:$0xff] %v427
                  %v429 = vld [vmem:[%s333 + $0x178] sm:$0xff]
                  %430 = vst [vmem:[%s334 + $0x178] sm:$0xff] %v429
                  %v431 = vld [vmem:[%s333 + $0x180] sm:$0xff]
                  %432 = vst [vmem:[%s334 + $0x180] sm:$0xff] %v431
                  %v433 = vld [vmem:[%s333 + $0x188] sm:$0xff]
                  %434 = vst [vmem:[%s334 + $0x188] sm:$0xff] %v433
                  %v435 = vld [vmem:[%s333 + $0x190] sm:$0xff]
                  %436 = vst [vmem:[%s334 + $0x190] sm:$0xff] %v435
                  %v437 = vld [vmem:[%s333 + $0x198] sm:$0xff]
                  %438 = vst [vmem:[%s334 + $0x198] sm:$0xff] %v437
                  %v439 = vld [vmem:[%s333 + $0x1a0] sm:$0xff]
                  %440 = vst [vmem:[%s334 + $0x1a0] sm:$0xff] %v439
                  %v441 = vld [vmem:[%s333 + $0x1a8] sm:$0xff]
                  %442 = vst [vmem:[%s334 + $0x1a8] sm:$0xff] %v441
                  %v443 = vld [vmem:[%s333 + $0x1b0] sm:$0xff]
                  %444 = vst [vmem:[%s334 + $0x1b0] sm:$0xff] %v443
                  %v445 = vld [vmem:[%s333 + $0x1b8] sm:$0xff]
                  %446 = vst [vmem:[%s334 + $0x1b8] sm:$0xff] %v445
                  %v447 = vld [vmem:[%s333 + $0x1c0] sm:$0xff]
                  %448 = vst [vmem:[%s334 + $0x1c0] sm:$0xff] %v447
                  %v449 = vld [vmem:[%s333 + $0x1c8] sm:$0xff]
                  %450 = vst [vmem:[%s334 + $0x1c8] sm:$0xff] %v449
                  %v451 = vld [vmem:[%s333 + $0x1d0] sm:$0xff]
                  %452 = vst [vmem:[%s334 + $0x1d0] sm:$0xff] %v451
                  %v453 = vld [vmem:[%s333 + $0x1d8] sm:$0xff]
                  %454 = vst [vmem:[%s334 + $0x1d8] sm:$0xff] %v453
                  %v455 = vld [vmem:[%s333 + $0x1e0] sm:$0xff]
                  %456 = vst [vmem:[%s334 + $0x1e0] sm:$0xff] %v455
                  %v457 = vld [vmem:[%s333 + $0x1e8] sm:$0xff]
                  %458 = vst [vmem:[%s334 + $0x1e8] sm:$0xff] %v457
                  %v459 = vld [vmem:[%s333 + $0x1f0] sm:$0xff]
                  %460 = vst [vmem:[%s334 + $0x1f0] sm:$0xff] %v459
                  %v461 = vld [vmem:[%s333 + $0x1f8] sm:$0xff]
                  %462 = vst [vmem:[%s334 + $0x1f8] sm:$0xff] %v461
                $region96: #{char_lstm_forward.1} parent=90 // loop_footer
                  %s332 = sadd.s32 1, %s328
                $region97: #{char_lstm_forward.1} parent=90 // loop_footer_branch
                  %327 = sbr.rel target = $region93
                $region98: #{char_lstm_forward.1} parent=90 // loop_exit
                  _
              $region91: #{char_lstm_forward.1} parent=75 // pred_fallthru
                _
              %p463 = pneg %p323
              // Predicated region
              $region99: #{char_lstm_forward.1} parent=75 // pred_check
                _
              $region100: #{char_lstm_forward.1} parent=75 // pred_check_branch
                %465 = sbr.rel (%p323) target = $region102
              $region101: #{char_lstm_forward.1} parent=75 // pred_region
                %s466 = sand.u32 512, 7
              $region102: #{char_lstm_forward.1} parent=75 // pred_fallthru
                _
            $region76: #{char_lstm_forward.1} parent=72 // pred_fallthru
              _
            // Predicated region
            $region77: #{char_lstm_forward.1} parent=72 // pred_check
              %p307 = pneg %p303
            $region78: #{char_lstm_forward.1} parent=72 // pred_check_branch
              %309 = sbr.rel (%p307) target = $region80
            $region79: #{char_lstm_forward.1} parent=72 // pred_region
              %s310 = sshll.u32 1, 512
              %s311 = ssub.s32 %s310, 1
              loop: start=0, step=1, limit=1
              $region81: #{char_lstm_forward.1} parent=79 // loop_pre_header
                _
              $region82: #{char_lstm_forward.1} parent=79 // loop_header
                %s313 = sphi 0, %s317
                %p314 = scmp.ge.s32.totalorder %s313, 1
                %s318 = sphi %s2, %s2
                %s319 = sphi [#allocation3], [#allocation3]
              $region83: #{char_lstm_forward.1} parent=79 // loop_header_branch
                %316 = sbr.rel (%p314) target = $region87
              $region84: #{char_lstm_forward.1} parent=79 // loop_body
                %v320 = vld [vmem:[%s318] sm:%s311]
                %321 = vst [vmem:[%s319] sm:%s311] %v320
              $region85: #{char_lstm_forward.1} parent=79 // loop_footer
                %s317 = sadd.s32 1, %s313
              $region86: #{char_lstm_forward.1} parent=79 // loop_footer_branch
                %312 = sbr.rel target = $region82
              $region87: #{char_lstm_forward.1} parent=79 // loop_exit
                _
            $region80: #{char_lstm_forward.1} parent=72 // pred_fallthru
              _
            // Predicated region
            $region103: #{char_lstm_forward.1} parent=72 // pred_check
              _
            $region104: #{char_lstm_forward.1} parent=72 // pred_check_branch
              %469 = sbr.rel (0) target = $region106
            $region105: #{char_lstm_forward.1} parent=72 // pred_region
              %470 = vsyncadd [#allocation12], 8192
            $region106: #{char_lstm_forward.1} parent=72 // pred_fallthru
              _
            %s471 = smul.u32 8, 16
            %s472 = smul.u32 %s471, 4
            %s473 = sshll.u32 %s472, 4
            %474 = dma.done [#allocation12], %s473
          $region107: #{char_lstm_forward.1} parent=35
            #allocation14 [shape = 's32[1]{0}', space=sflag, size = 0x4, scoped, tag = 'scoped memory for char_lstm_forward.1']
            %p476 = scmp.lt.u32.totalorder 128, 8
            %p477 = pneg %p476
            // Predicated region
            $region108: #{char_lstm_forward.1} parent=107 // pred_check
              _
            $region109: #{char_lstm_forward.1} parent=107 // pred_check_branch
              %479 = sbr.rel (%p476) target = $region111
            $region110: #{char_lstm_forward.1} parent=107 // pred_region
              %s495 = sand.u32 128, 7
              %p496 = scmp.eq.s32.totalorder %s495, 0
              // Predicated region
              $region123: #{char_lstm_forward.1} parent=110 // pred_check
                %p497 = pneg %p496
              $region124: #{char_lstm_forward.1} parent=110 // pred_check_branch
                %499 = sbr.rel (%p497) target = $region126
              $region125: #{char_lstm_forward.1} parent=110 // pred_region
                loop: start=0, step=1, limit=1
                $region127: #{char_lstm_forward.1} parent=125 // loop_pre_header
                  _
                $region128: #{char_lstm_forward.1} parent=125 // loop_header
                  %s501 = sphi 0, %s505
                  %p502 = scmp.ge.s32.totalorder %s501, 1
                  %s506 = sphi %s4, %s4
                  %s507 = sphi [#allocation4], [#allocation4]
                $region129: #{char_lstm_forward.1} parent=125 // loop_header_branch
                  %504 = sbr.rel (%p502) target = $region133
                $region130: #{char_lstm_forward.1} parent=125 // loop_body
                  %v508 = vld [vmem:[%s506] sm:$0xff]
                  %509 = vst [vmem:[%s507] sm:$0xff] %v508
                  %v510 = vld [vmem:[%s506 + $0x8] sm:$0xff]
                  %511 = vst [vmem:[%s507 + $0x8] sm:$0xff] %v510
                  %v512 = vld [vmem:[%s506 + $0x10] sm:$0xff]
                  %513 = vst [vmem:[%s507 + $0x10] sm:$0xff] %v512
                  %v514 = vld [vmem:[%s506 + $0x18] sm:$0xff]
                  %515 = vst [vmem:[%s507 + $0x18] sm:$0xff] %v514
                  %v516 = vld [vmem:[%s506 + $0x20] sm:$0xff]
                  %517 = vst [vmem:[%s507 + $0x20] sm:$0xff] %v516
                  %v518 = vld [vmem:[%s506 + $0x28] sm:$0xff]
                  %519 = vst [vmem:[%s507 + $0x28] sm:$0xff] %v518
                  %v520 = vld [vmem:[%s506 + $0x30] sm:$0xff]
                  %521 = vst [vmem:[%s507 + $0x30] sm:$0xff] %v520
                  %v522 = vld [vmem:[%s506 + $0x38] sm:$0xff]
                  %523 = vst [vmem:[%s507 + $0x38] sm:$0xff] %v522
                  %v524 = vld [vmem:[%s506 + $0x40] sm:$0xff]
                  %525 = vst [vmem:[%s507 + $0x40] sm:$0xff] %v524
                  %v526 = vld [vmem:[%s506 + $0x48] sm:$0xff]
                  %527 = vst [vmem:[%s507 + $0x48] sm:$0xff] %v526
                  %v528 = vld [vmem:[%s506 + $0x50] sm:$0xff]
                  %529 = vst [vmem:[%s507 + $0x50] sm:$0xff] %v528
                  %v530 = vld [vmem:[%s506 + $0x58] sm:$0xff]
                  %531 = vst [vmem:[%s507 + $0x58] sm:$0xff] %v530
                  %v532 = vld [vmem:[%s506 + $0x60] sm:$0xff]
                  %533 = vst [vmem:[%s507 + $0x60] sm:$0xff] %v532
                  %v534 = vld [vmem:[%s506 + $0x68] sm:$0xff]
                  %535 = vst [vmem:[%s507 + $0x68] sm:$0xff] %v534
                  %v536 = vld [vmem:[%s506 + $0x70] sm:$0xff]
                  %537 = vst [vmem:[%s507 + $0x70] sm:$0xff] %v536
                  %v538 = vld [vmem:[%s506 + $0x78] sm:$0xff]
                  %539 = vst [vmem:[%s507 + $0x78] sm:$0xff] %v538
                $region131: #{char_lstm_forward.1} parent=125 // loop_footer
                  %s505 = sadd.s32 1, %s501
                $region132: #{char_lstm_forward.1} parent=125 // loop_footer_branch
                  %500 = sbr.rel target = $region128
                $region133: #{char_lstm_forward.1} parent=125 // loop_exit
                  _
              $region126: #{char_lstm_forward.1} parent=110 // pred_fallthru
                _
              %p540 = pneg %p496
              // Predicated region
              $region134: #{char_lstm_forward.1} parent=110 // pred_check
                _
              $region135: #{char_lstm_forward.1} parent=110 // pred_check_branch
                %542 = sbr.rel (%p496) target = $region137
              $region136: #{char_lstm_forward.1} parent=110 // pred_region
                %s543 = sand.u32 128, 7
              $region137: #{char_lstm_forward.1} parent=110 // pred_fallthru
                _
            $region111: #{char_lstm_forward.1} parent=107 // pred_fallthru
              _
            // Predicated region
            $region112: #{char_lstm_forward.1} parent=107 // pred_check
              %p480 = pneg %p476
            $region113: #{char_lstm_forward.1} parent=107 // pred_check_branch
              %482 = sbr.rel (%p480) target = $region115
            $region114: #{char_lstm_forward.1} parent=107 // pred_region
              %s483 = sshll.u32 1, 128
              %s484 = ssub.s32 %s483, 1
              loop: start=0, step=1, limit=1
              $region116: #{char_lstm_forward.1} parent=114 // loop_pre_header
                _
              $region117: #{char_lstm_forward.1} parent=114 // loop_header
                %s486 = sphi 0, %s490
                %p487 = scmp.ge.s32.totalorder %s486, 1
                %s491 = sphi %s4, %s4
                %s492 = sphi [#allocation4], [#allocation4]
              $region118: #{char_lstm_forward.1} parent=114 // loop_header_branch
                %489 = sbr.rel (%p487) target = $region122
              $region119: #{char_lstm_forward.1} parent=114 // loop_body
                %v493 = vld [vmem:[%s491] sm:%s484]
                %494 = vst [vmem:[%s492] sm:%s484] %v493
              $region120: #{char_lstm_forward.1} parent=114 // loop_footer
                %s490 = sadd.s32 1, %s486
              $region121: #{char_lstm_forward.1} parent=114 // loop_footer_branch
                %485 = sbr.rel target = $region117
              $region122: #{char_lstm_forward.1} parent=114 // loop_exit
                _
            $region115: #{char_lstm_forward.1} parent=107 // pred_fallthru
              _
            // Predicated region
            $region138: #{char_lstm_forward.1} parent=107 // pred_check
              _
            $region139: #{char_lstm_forward.1} parent=107 // pred_check_branch
              %546 = sbr.rel (0) target = $region141
            $region140: #{char_lstm_forward.1} parent=107 // pred_region
              %547 = vsyncadd [#allocation14], 2048
            $region141: #{char_lstm_forward.1} parent=107 // pred_fallthru
              _
            %s548 = smul.u32 128, 1
            %s549 = sshll.u32 %s548, 4
            %550 = dma.done [#allocation14], %s549
          $region142: #{char_lstm_forward.1} parent=35
            #allocation16 [shape = 's32[1]{0}', space=sflag, size = 0x4, scoped, tag = 'scoped memory for char_lstm_forward.1']
            %p552 = scmp.lt.u32.totalorder 8, 8
            %p553 = pneg %p552
            // Predicated region
            $region143: #{char_lstm_forward.1} parent=142 // pred_check
              _
            $region144: #{char_lstm_forward.1} parent=142 // pred_check_branch
              %555 = sbr.rel (%p552) target = $region146
            $region145: #{char_lstm_forward.1} parent=142 // pred_region
              %s571 = sand.u32 8, 7
              %p572 = scmp.eq.s32.totalorder %s571, 0
              // Predicated region
              $region158: #{char_lstm_forward.1} parent=145 // pred_check
                %p573 = pneg %p572
              $region159: #{char_lstm_forward.1} parent=145 // pred_check_branch
                %575 = sbr.rel (%p573) target = $region161
              $region160: #{char_lstm_forward.1} parent=145 // pred_region
                loop: start=0, step=1, limit=1
                $region162: #{char_lstm_forward.1} parent=160 // loop_pre_header
                  _
                $region163: #{char_lstm_forward.1} parent=160 // loop_header
                  %s577 = sphi 0, %s581
                  %p578 = scmp.ge.s32.totalorder %s577, 1
                  %s582 = sphi %s6, %s6
                  %s583 = sphi [#allocation5], [#allocation5]
                $region164: #{char_lstm_forward.1} parent=160 // loop_header_branch
                  %580 = sbr.rel (%p578) target = $region168
                $region165: #{char_lstm_forward.1} parent=160 // loop_body
                  %v584 = vld [vmem:[%s582] sm:$0xff]
                  %585 = vst [vmem:[%s583] sm:$0xff] %v584
                $region166: #{char_lstm_forward.1} parent=160 // loop_footer
                  %s581 = sadd.s32 1, %s577
                $region167: #{char_lstm_forward.1} parent=160 // loop_footer_branch
                  %576 = sbr.rel target = $region163
                $region168: #{char_lstm_forward.1} parent=160 // loop_exit
                  _
              $region161: #{char_lstm_forward.1} parent=145 // pred_fallthru
                _
              %p586 = pneg %p572
              // Predicated region
              $region169: #{char_lstm_forward.1} parent=145 // pred_check
                _
              $region170: #{char_lstm_forward.1} parent=145 // pred_check_branch
                %588 = sbr.rel (%p572) target = $region172
              $region171: #{char_lstm_forward.1} parent=145 // pred_region
                %s589 = sand.u32 8, 7
              $region172: #{char_lstm_forward.1} parent=145 // pred_fallthru
                _
            $region146: #{char_lstm_forward.1} parent=142 // pred_fallthru
              _
            // Predicated region
            $region147: #{char_lstm_forward.1} parent=142 // pred_check
              %p556 = pneg %p552
            $region148: #{char_lstm_forward.1} parent=142 // pred_check_branch
              %558 = sbr.rel (%p556) target = $region150
            $region149: #{char_lstm_forward.1} parent=142 // pred_region
              %s559 = sshll.u32 1, 8
              %s560 = ssub.s32 %s559, 1
              loop: start=0, step=1, limit=1
              $region151: #{char_lstm_forward.1} parent=149 // loop_pre_header
                _
              $region152: #{char_lstm_forward.1} parent=149 // loop_header
                %s562 = sphi 0, %s566
                %p563 = scmp.ge.s32.totalorder %s562, 1
                %s567 = sphi %s6, %s6
                %s568 = sphi [#allocation5], [#allocation5]
              $region153: #{char_lstm_forward.1} parent=149 // loop_header_branch
                %565 = sbr.rel (%p563) target = $region157
              $region154: #{char_lstm_forward.1} parent=149 // loop_body
                %v569 = vld [vmem:[%s567] sm:%s560]
                %570 = vst [vmem:[%s568] sm:%s560] %v569
              $region155: #{char_lstm_forward.1} parent=149 // loop_footer
                %s566 = sadd.s32 1, %s562
              $region156: #{char_lstm_forward.1} parent=149 // loop_footer_branch
                %561 = sbr.rel target = $region152
              $region157: #{char_lstm_forward.1} parent=149 // loop_exit
                _
            $region150: #{char_lstm_forward.1} parent=142 // pred_fallthru
              _
            // Predicated region
            $region173: #{char_lstm_forward.1} parent=142 // pred_check
              _
            $region174: #{char_lstm_forward.1} parent=142 // pred_check_branch
              %592 = sbr.rel (0) target = $region176
            $region175: #{char_lstm_forward.1} parent=142 // pred_region
              %593 = vsyncadd [#allocation16], 128
            $region176: #{char_lstm_forward.1} parent=142 // pred_fallthru
              _
            %s594 = smul.u32 8, 1
            %s595 = sshll.u32 %s594, 4
            %596 = dma.done [#allocation16], %s595
          $region177: #{char_lstm_forward.1} parent=35
            #allocation18 [shape = 's32[1]{0}', space=sflag, size = 0x4, scoped, tag = 'scoped memory for char_lstm_forward.1']
            %p598 = scmp.lt.u32.totalorder 8, 8
            %p599 = pneg %p598
            // Predicated region
            $region178: #{char_lstm_forward.1} parent=177 // pred_check
              _
            $region179: #{char_lstm_forward.1} parent=177 // pred_check_branch
              %601 = sbr.rel (%p598) target = $region181
            $region180: #{char_lstm_forward.1} parent=177 // pred_region
              %s617 = sand.u32 8, 7
              %p618 = scmp.eq.s32.totalorder %s617, 0
              // Predicated region
              $region193: #{char_lstm_forward.1} parent=180 // pred_check
                %p619 = pneg %p618
              $region194: #{char_lstm_forward.1} parent=180 // pred_check_branch
                %621 = sbr.rel (%p619) target = $region196
              $region195: #{char_lstm_forward.1} parent=180 // pred_region
                loop: start=0, step=1, limit=1
                $region197: #{char_lstm_forward.1} parent=195 // loop_pre_header
                  _
                $region198: #{char_lstm_forward.1} parent=195 // loop_header
                  %s623 = sphi 0, %s627
                  %p624 = scmp.ge.s32.totalorder %s623, 1
                  %s628 = sphi %s7, %s7
                  %s629 = sphi [#allocation6], [#allocation6]
                $region199: #{char_lstm_forward.1} parent=195 // loop_header_branch
                  %626 = sbr.rel (%p624) target = $region203
                $region200: #{char_lstm_forward.1} parent=195 // loop_body
                  %v630 = vld [vmem:[%s628] sm:$0xff]
                  %631 = vst [vmem:[%s629] sm:$0xff] %v630
                $region201: #{char_lstm_forward.1} parent=195 // loop_footer
                  %s627 = sadd.s32 1, %s623
                $region202: #{char_lstm_forward.1} parent=195 // loop_footer_branch
                  %622 = sbr.rel target = $region198
                $region203: #{char_lstm_forward.1} parent=195 // loop_exit
                  _
              $region196: #{char_lstm_forward.1} parent=180 // pred_fallthru
                _
              %p632 = pneg %p618
              // Predicated region
              $region204: #{char_lstm_forward.1} parent=180 // pred_check
                _
              $region205: #{char_lstm_forward.1} parent=180 // pred_check_branch
                %634 = sbr.rel (%p618) target = $region207
              $region206: #{char_lstm_forward.1} parent=180 // pred_region
                %s635 = sand.u32 8, 7
              $region207: #{char_lstm_forward.1} parent=180 // pred_fallthru
                _
            $region181: #{char_lstm_forward.1} parent=177 // pred_fallthru
              _
            // Predicated region
            $region182: #{char_lstm_forward.1} parent=177 // pred_check
              %p602 = pneg %p598
            $region183: #{char_lstm_forward.1} parent=177 // pred_check_branch
              %604 = sbr.rel (%p602) target = $region185
            $region184: #{char_lstm_forward.1} parent=177 // pred_region
              %s605 = sshll.u32 1, 8
              %s606 = ssub.s32 %s605, 1
              loop: start=0, step=1, limit=1
              $region186: #{char_lstm_forward.1} parent=184 // loop_pre_header
                _
              $region187: #{char_lstm_forward.1} parent=184 // loop_header
                %s608 = sphi 0, %s612
                %p609 = scmp.ge.s32.totalorder %s608, 1
                %s613 = sphi %s7, %s7
                %s614 = sphi [#allocation6], [#allocation6]
              $region188: #{char_lstm_forward.1} parent=184 // loop_header_branch
                %611 = sbr.rel (%p609) target = $region192
              $region189: #{char_lstm_forward.1} parent=184 // loop_body
                %v615 = vld [vmem:[%s613] sm:%s606]
                %616 = vst [vmem:[%s614] sm:%s606] %v615
              $region190: #{char_lstm_forward.1} parent=184 // loop_footer
                %s612 = sadd.s32 1, %s608
              $region191: #{char_lstm_forward.1} parent=184 // loop_footer_branch
                %607 = sbr.rel target = $region187
              $region192: #{char_lstm_forward.1} parent=184 // loop_exit
                _
            $region185: #{char_lstm_forward.1} parent=177 // pred_fallthru
              _
            // Predicated region
            $region208: #{char_lstm_forward.1} parent=177 // pred_check
              _
            $region209: #{char_lstm_forward.1} parent=177 // pred_check_branch
              %638 = sbr.rel (0) target = $region211
            $region210: #{char_lstm_forward.1} parent=177 // pred_region
              %639 = vsyncadd [#allocation18], 128
            $region211: #{char_lstm_forward.1} parent=177 // pred_fallthru
              _
            %s640 = smul.u32 8, 1
            %s641 = sshll.u32 %s640, 4
            %642 = dma.done [#allocation18], %s641
        $region36: #{char_lstm_forward.1} parent=31 // pred_fallthru
          _
        %v643 = vld [vmem:[%s219] sm:$0xff]
        %v644 = vld [vmem:[%s219 + $0x8] sm:$0xff]
        %v645 = vld [vmem:[%s219 + $0x10] sm:$0xff]
        %v646 = vld [vmem:[%s219 + $0x18] sm:$0xff]
        %v647 = vld [vmem:[%s219 + $0x20] sm:$0xff]
        %v648 = vld [vmem:[%s219 + $0x28] sm:$0xff]
        %v649 = vld [vmem:[%s219 + $0x30] sm:$0xff]
        %v650 = vld [vmem:[%s219 + $0x38] sm:$0xff]
        %v651 = vld [vmem:[#allocation2] sm:$0xff]
        %v652 = vld [vmem:[#allocation2 + $0x8] sm:$0xff]
        %v653 = vld [vmem:[#allocation2 + $0x10] sm:$0xff]
        %v654 = vld [vmem:[#allocation2 + $0x18] sm:$0xff]
        %v655 = vld [vmem:[#allocation2 + $0x20] sm:$0xff]
        %v656 = vld [vmem:[#allocation2 + $0x28] sm:$0xff]
        %v657 = vld [vmem:[#allocation2 + $0x30] sm:$0xff]
        %v658 = vld [vmem:[#allocation2 + $0x38] sm:$0xff]
        %v659 = vld [vmem:[#allocation2 + $0x40] sm:$0xff]
        %v660 = vld [vmem:[#allocation2 + $0x48] sm:$0xff]
        %v661 = vld [vmem:[#allocation2 + $0x50] sm:$0xff]
        %v662 = vld [vmem:[#allocation2 + $0x58] sm:$0xff]
        %v663 = vld [vmem:[#allocation2 + $0x60] sm:$0xff]
        %v664 = vld [vmem:[#allocation2 + $0x68] sm:$0xff]
        %v665 = vld [vmem:[#allocation2 + $0x70] sm:$0xff]
        %v666 = vld [vmem:[#allocation2 + $0x78] sm:$0xff]
        %v667 = vld [vmem:[%s3] sm:$0xf]
        %v669 = vlaneseq
        %v670 = vshrl.u32 %v669, 7
        %v671 = vsub.s32 0, %v670
        %v672 = vrot.slane %v667, %v671
        %v673 = vlaneseq
        %v674 = vshrl.u32 %v673, 7
        %v675 = vsub.s32 1, %v674
        %v676 = vrot.slane %v667, %v675
        %v677 = vlaneseq
        %v678 = vshrl.u32 %v677, 7
        %v679 = vsub.s32 2, %v678
        %v680 = vrot.slane %v667, %v679
        %v681 = vlaneseq
        %v682 = vshrl.u32 %v681, 7
        %v683 = vsub.s32 3, %v682
        %v684 = vrot.slane %v667, %v683
        %vm689 = vcmask 261120
        %v691 = vsel %vm689, %v643, 0
        %v694 = vsel %vm689, %v644, 0
        %v697 = vsel %vm689, %v645, 0
        %v700 = vsel %vm689, %v646, 0
        %v703 = vsel %vm689, %v647, 0
        %v706 = vsel %vm689, %v648, 0
        %v709 = vsel %vm689, %v649, 0
        %v712 = vsel %vm689, %v650, 0
        %714 = vmatprep.subr.mxu0 0.0
        %715 = vmatpush1.msra.mxu0 0.0
        %716 = vmatprep.subr.mxu0 0.0
        %717 = vmatpush1.msra.mxu0 0.0
        %718 = vmatprep.subr.mxu0 0.0
        %719 = vmatpush1.msra.mxu0 0.0
        %720 = vmatprep.subr.mxu0 0.0
        %721 = vmatpush1.msra.mxu0 0.0
        %722 = vmatprep.subr.mxu0 0.0
        %723 = vmatpush1.msra.mxu0 0.0
        %724 = vmatprep.subr.mxu0 0.0
        %725 = vmatpush1.msra.mxu0 0.0
        %726 = vmatprep.subr.mxu0 0.0
        %727 = vmatpush1.msra.mxu0 0.0
        %728 = vmatprep.subr.mxu0 0.0
        %729 = vmatpush1.msra.mxu0 0.0
        %730 = vmatprep.subr.mxu0 0.0
        %731 = vmatpush1.msra.mxu0 0.0
        %732 = vmatprep.subr.mxu0 0.0
        %733 = vmatpush1.msra.mxu0 0.0
        %734 = vmatprep.subr.mxu0 0.0
        %735 = vmatpush1.msra.mxu0 0.0
        %736 = vmatprep.subr.mxu0 0.0
        %737 = vmatpush1.msra.mxu0 0.0
        %738 = vmatprep.subr.mxu0 %v664
        %739 = vmatpush1.msra.mxu0 %v663
        %740 = vmatprep.subr.mxu0 %v660
        %741 = vmatpush1.msra.mxu0 %v659
        %742 = vmatprep.subr.mxu0 %v656
        %743 = vmatpush1.msra.mxu0 %v655
        %744 = vmatprep.subr.mxu0 %v652
        %745 = vmatpush1.msra.mxu0 %v651
        %746 = vmatprep.subr.mxu0 0.0
        %747 = vmatpush2.msra.mxu0 0.0
        %748 = vmatprep.subr.mxu0 0.0
        %749 = vmatpush2.msra.mxu0 0.0
        %750 = vmatprep.subr.mxu0 0.0
        %751 = vmatpush2.msra.mxu0 0.0
        %752 = vmatprep.subr.mxu0 0.0
        %753 = vmatpush2.msra.mxu0 0.0
        %754 = vmatprep.subr.mxu0 0.0
        %755 = vmatpush2.msra.mxu0 0.0
        %756 = vmatprep.subr.mxu0 0.0
        %757 = vmatpush2.msra.mxu0 0.0
        %758 = vmatprep.subr.mxu0 0.0
        %759 = vmatpush2.msra.mxu0 0.0
        %760 = vmatprep.subr.mxu0 0.0
        %761 = vmatpush2.msra.mxu0 0.0
        %762 = vmatprep.subr.mxu0 0.0
        %763 = vmatpush2.msra.mxu0 0.0
        %764 = vmatprep.subr.mxu0 0.0
        %765 = vmatpush2.msra.mxu0 0.0
        %766 = vmatprep.subr.mxu0 0.0
        %767 = vmatpush2.msra.mxu0 0.0
        %768 = vmatprep.subr.mxu0 0.0
        %769 = vmatpush2.msra.mxu0 0.0
        %770 = vmatprep.subr.mxu0 0.0
        %771 = vmatpush2.msra.mxu0 0.0
        %772 = vmatprep.subr.mxu0 0.0
        %773 = vmatpush2.msra.mxu0 0.0
        %774 = vmatprep.subr.mxu0 0.0
        %775 = vmatpush2.msra.mxu0 0.0
        %776 = vmatprep.subr.mxu0 0.0
        %777 = vmatpush2.msra.mxu0 0.0
        %778 = vmatprep.mubr.f32.mxu0 0.0
        %779 = vmatmul.mubr.f32.gmra.mxu0 %v691
        %v780 = vpop.f32.mrf.mxu0
        %v781 = vadd.f32 %v672, %v780
        %v782 = vpop.f32.mrf.mxu0
        %v783 = vadd.f32 %v676, %v782
        %784 = vmatprep.mubr.f32.mxu0 0.0
        %785 = vmatmul.mubr.f32.gmra.mxu0 %v694
        %v786 = vpop.f32.mrf.mxu0
        %v787 = vadd.f32 %v672, %v786
        %v788 = vpop.f32.mrf.mxu0
        %v789 = vadd.f32 %v676, %v788
        %790 = vmatprep.mubr.f32.mxu0 0.0
        %791 = vmatmul.mubr.f32.gmra.mxu0 %v697
        %v792 = vpop.f32.mrf.mxu0
        %v793 = vadd.f32 %v672, %v792
        %v794 = vpop.f32.mrf.mxu0
        %v795 = vadd.f32 %v676, %v794
        %796 = vmatprep.mubr.f32.mxu0 0.0
        %797 = vmatmul.mubr.f32.gmra.mxu0 %v700
        %v798 = vpop.f32.mrf.mxu0
        %v799 = vadd.f32 %v672, %v798
        %v800 = vpop.f32.mrf.mxu0
        %v801 = vadd.f32 %v676, %v800
        %802 = vmatprep.mubr.f32.mxu0 0.0
        %803 = vmatmul.mubr.f32.gmra.mxu0 %v703
        %v804 = vpop.f32.mrf.mxu0
        %v805 = vadd.f32 %v672, %v804
        %v806 = vpop.f32.mrf.mxu0
        %v807 = vadd.f32 %v676, %v806
        %808 = vmatprep.mubr.f32.mxu0 0.0
        %809 = vmatmul.mubr.f32.gmra.mxu0 %v706
        %v810 = vpop.f32.mrf.mxu0
        %v811 = vadd.f32 %v672, %v810
        %v812 = vpop.f32.mrf.mxu0
        %v813 = vadd.f32 %v676, %v812
        %814 = vmatprep.mubr.f32.mxu0 0.0
        %815 = vmatmul.mubr.f32.gmra.mxu0 %v709
        %v816 = vpop.f32.mrf.mxu0
        %v817 = vadd.f32 %v672, %v816
        %v818 = vpop.f32.mrf.mxu0
        %v819 = vadd.f32 %v676, %v818
        %820 = vmatprep.mubr.f32.mxu0 0.0
        %821 = vmatmul.mubr.f32.gmra.mxu0 %v712
        %v822 = vpop.f32.mrf.mxu0
        %v823 = vadd.f32 %v672, %v822
        %v824 = vpop.f32.mrf.mxu0
        %v825 = vadd.f32 %v676, %v824
        %826 = vdwg.mxu0
        %827 = vmatprep.subr.mxu0 0.0
        %828 = vmatpush1.msra.mxu0 0.0
        %829 = vmatprep.subr.mxu0 0.0
        %830 = vmatpush1.msra.mxu0 0.0
        %831 = vmatprep.subr.mxu0 0.0
        %832 = vmatpush1.msra.mxu0 0.0
        %833 = vmatprep.subr.mxu0 0.0
        %834 = vmatpush1.msra.mxu0 0.0
        %835 = vmatprep.subr.mxu0 0.0
        %836 = vmatpush1.msra.mxu0 0.0
        %837 = vmatprep.subr.mxu0 0.0
        %838 = vmatpush1.msra.mxu0 0.0
        %839 = vmatprep.subr.mxu0 0.0
        %840 = vmatpush1.msra.mxu0 0.0
        %841 = vmatprep.subr.mxu0 0.0
        %842 = vmatpush1.msra.mxu0 0.0
        %843 = vmatprep.subr.mxu0 0.0
        %844 = vmatpush1.msra.mxu0 0.0
        %845 = vmatprep.subr.mxu0 0.0
        %846 = vmatpush1.msra.mxu0 0.0
        %847 = vmatprep.subr.mxu0 0.0
        %848 = vmatpush1.msra.mxu0 0.0
        %849 = vmatprep.subr.mxu0 0.0
        %850 = vmatpush1.msra.mxu0 0.0
        %851 = vmatprep.subr.mxu0 %v666
        %852 = vmatpush1.msra.mxu0 %v665
        %853 = vmatprep.subr.mxu0 %v662
        %854 = vmatpush1.msra.mxu0 %v661
        %855 = vmatprep.subr.mxu0 %v658
        %856 = vmatpush1.msra.mxu0 %v657
        %857 = vmatprep.subr.mxu0 %v654
        %858 = vmatpush1.msra.mxu0 %v653
        %859 = vmatprep.subr.mxu0 0.0
        %860 = vmatpush2.msra.mxu0 0.0
        %861 = vmatprep.subr.mxu0 0.0
        %862 = vmatpush2.msra.mxu0 0.0
        %863 = vmatprep.subr.mxu0 0.0
        %864 = vmatpush2.msra.mxu0 0.0
        %865 = vmatprep.subr.mxu0 0.0
        %866 = vmatpush2.msra.mxu0 0.0
        %867 = vmatprep.subr.mxu0 0.0
        %868 = vmatpush2.msra.mxu0 0.0
        %869 = vmatprep.subr.mxu0 0.0
        %870 = vmatpush2.msra.mxu0 0.0
        %871 = vmatprep.subr.mxu0 0.0
        %872 = vmatpush2.msra.mxu0 0.0
        %873 = vmatprep.subr.mxu0 0.0
        %874 = vmatpush2.msra.mxu0 0.0
        %875 = vmatprep.subr.mxu0 0.0
        %876 = vmatpush2.msra.mxu0 0.0
        %877 = vmatprep.subr.mxu0 0.0
        %878 = vmatpush2.msra.mxu0 0.0
        %879 = vmatprep.subr.mxu0 0.0
        %880 = vmatpush2.msra.mxu0 0.0
        %881 = vmatprep.subr.mxu0 0.0
        %882 = vmatpush2.msra.mxu0 0.0
        %883 = vmatprep.subr.mxu0 0.0
        %884 = vmatpush2.msra.mxu0 0.0
        %885 = vmatprep.subr.mxu0 0.0
        %886 = vmatpush2.msra.mxu0 0.0
        %887 = vmatprep.subr.mxu0 0.0
        %888 = vmatpush2.msra.mxu0 0.0
        %889 = vmatprep.subr.mxu0 0.0
        %890 = vmatpush2.msra.mxu0 0.0
        %891 = vmatprep.mubr.f32.mxu0 0.0
        %892 = vmatmul.mubr.f32.gmra.mxu0 %v691
        %v893 = vpop.f32.mrf.mxu0
        %v894 = vadd.f32 %v680, %v893
        %v895 = vpop.f32.mrf.mxu0
        %v896 = vadd.f32 %v684, %v895
        %897 = vmatprep.mubr.f32.mxu0 0.0
        %898 = vmatmul.mubr.f32.gmra.mxu0 %v694
        %v899 = vpop.f32.mrf.mxu0
        %v900 = vadd.f32 %v680, %v899
        %v901 = vpop.f32.mrf.mxu0
        %v902 = vadd.f32 %v684, %v901
        %903 = vmatprep.mubr.f32.mxu0 0.0
        %904 = vmatmul.mubr.f32.gmra.mxu0 %v697
        %v905 = vpop.f32.mrf.mxu0
        %v906 = vadd.f32 %v680, %v905
        %v907 = vpop.f32.mrf.mxu0
        %v908 = vadd.f32 %v684, %v907
        %909 = vmatprep.mubr.f32.mxu0 0.0
        %910 = vmatmul.mubr.f32.gmra.mxu0 %v700
        %v911 = vpop.f32.mrf.mxu0
        %v912 = vadd.f32 %v680, %v911
        %v913 = vpop.f32.mrf.mxu0
        %v914 = vadd.f32 %v684, %v913
        %915 = vmatprep.mubr.f32.mxu0 0.0
        %916 = vmatmul.mubr.f32.gmra.mxu0 %v703
        %v917 = vpop.f32.mrf.mxu0
        %v918 = vadd.f32 %v680, %v917
        %v919 = vpop.f32.mrf.mxu0
        %v920 = vadd.f32 %v684, %v919
        %921 = vmatprep.mubr.f32.mxu0 0.0
        %922 = vmatmul.mubr.f32.gmra.mxu0 %v706
        %v923 = vpop.f32.mrf.mxu0
        %v924 = vadd.f32 %v680, %v923
        %v925 = vpop.f32.mrf.mxu0
        %v926 = vadd.f32 %v684, %v925
        %927 = vmatprep.mubr.f32.mxu0 0.0
        %928 = vmatmul.mubr.f32.gmra.mxu0 %v709
        %v929 = vpop.f32.mrf.mxu0
        %v930 = vadd.f32 %v680, %v929
        %v931 = vpop.f32.mrf.mxu0
        %v932 = vadd.f32 %v684, %v931
        %933 = vmatprep.mubr.f32.mxu0 0.0
        %934 = vmatmul.mubr.f32.gmra.mxu0 %v712
        %v935 = vpop.f32.mrf.mxu0
        %v936 = vadd.f32 %v680, %v935
        %v937 = vpop.f32.mrf.mxu0
        %v938 = vadd.f32 %v684, %v937
        %939 = vdwg.mxu0
        %940 = vst [vmem:[#allocation7] sm:$0xff] %v781
        %941 = vst [vmem:[#allocation7 + $0x8] sm:$0xff] %v783
        %942 = vst [vmem:[#allocation7 + $0x10] sm:$0xff] %v894
        %943 = vst [vmem:[#allocation7 + $0x18] sm:$0xff] %v896
        %944 = vst [vmem:[#allocation7 + $0x20] sm:$0xff] %v787
        %945 = vst [vmem:[#allocation7 + $0x28] sm:$0xff] %v789
        %946 = vst [vmem:[#allocation7 + $0x30] sm:$0xff] %v900
        %947 = vst [vmem:[#allocation7 + $0x38] sm:$0xff] %v902
        %948 = vst [vmem:[#allocation7 + $0x40] sm:$0xff] %v793
        %949 = vst [vmem:[#allocation7 + $0x48] sm:$0xff] %v795
        %950 = vst [vmem:[#allocation7 + $0x50] sm:$0xff] %v906
        %951 = vst [vmem:[#allocation7 + $0x58] sm:$0xff] %v908
        %952 = vst [vmem:[#allocation7 + $0x60] sm:$0xff] %v799
        %953 = vst [vmem:[#allocation7 + $0x68] sm:$0xff] %v801
        %954 = vst [vmem:[#allocation7 + $0x70] sm:$0xff] %v912
        %955 = vst [vmem:[#allocation7 + $0x78] sm:$0xff] %v914
        %956 = vst [vmem:[#allocation7 + $0x80] sm:$0xff] %v805
        %957 = vst [vmem:[#allocation7 + $0x88] sm:$0xff] %v807
        %958 = vst [vmem:[#allocation7 + $0x90] sm:$0xff] %v918
        %959 = vst [vmem:[#allocation7 + $0x98] sm:$0xff] %v920
        %960 = vst [vmem:[#allocation7 + $0xa0] sm:$0xff] %v811
        %961 = vst [vmem:[#allocation7 + $0xa8] sm:$0xff] %v813
        %962 = vst [vmem:[#allocation7 + $0xb0] sm:$0xff] %v924
        %963 = vst [vmem:[#allocation7 + $0xb8] sm:$0xff] %v926
        %964 = vst [vmem:[#allocation7 + $0xc0] sm:$0xff] %v817
        %965 = vst [vmem:[#allocation7 + $0xc8] sm:$0xff] %v819
        %966 = vst [vmem:[#allocation7 + $0xd0] sm:$0xff] %v930
        %967 = vst [vmem:[#allocation7 + $0xd8] sm:$0xff] %v932
        %968 = vst [vmem:[#allocation7 + $0xe0] sm:$0xff] %v823
        %969 = vst [vmem:[#allocation7 + $0xe8] sm:$0xff] %v825
        %970 = vst [vmem:[#allocation7 + $0xf0] sm:$0xff] %v936
        %971 = vst [vmem:[#allocation7 + $0xf8] sm:$0xff] %v938
        %v972 = vld [vmem:[#allocation5] sm:$0xff]
        %v973 = vld [vmem:[#allocation6] sm:$0xff]
        %s974 = smul.u32 0, 4
        %s975 = smul.addr %s974, 8
        %s976 = scalar_lea.vmem [#allocation7], %s975
        %v977 = vld [vmem:[%s976] sm:$0xff]
        %v978 = vld [vmem:[%s976 + $0x8] sm:$0xff]
        %v979 = vld [vmem:[%s976 + $0x10] sm:$0xff]
        %v980 = vld [vmem:[%s976 + $0x18] sm:$0xff]
        %v981 = vld [vmem:[#allocation3] sm:$0xff]
        %v982 = vld [vmem:[#allocation3 + $0x8] sm:$0xff]
        %v983 = vld [vmem:[#allocation3 + $0x10] sm:$0xff]
        %v984 = vld [vmem:[#allocation3 + $0x18] sm:$0xff]
        %v985 = vld [vmem:[#allocation3 + $0x20] sm:$0xff]
        %v986 = vld [vmem:[#allocation3 + $0x28] sm:$0xff]
        %v987 = vld [vmem:[#allocation3 + $0x30] sm:$0xff]
        %v988 = vld [vmem:[#allocation3 + $0x38] sm:$0xff]
        %v989 = vld [vmem:[#allocation3 + $0x40] sm:$0xff]
        %v990 = vld [vmem:[#allocation3 + $0x48] sm:$0xff]
        %v991 = vld [vmem:[#allocation3 + $0x50] sm:$0xff]
        %v992 = vld [vmem:[#allocation3 + $0x58] sm:$0xff]
        %v993 = vld [vmem:[#allocation3 + $0x60] sm:$0xff]
        %v994 = vld [vmem:[#allocation3 + $0x68] sm:$0xff]
        %v995 = vld [vmem:[#allocation3 + $0x70] sm:$0xff]
        %v996 = vld [vmem:[#allocation3 + $0x78] sm:$0xff]
        %v997 = vld [vmem:[#allocation3 + $0x80] sm:$0xff]
        %v998 = vld [vmem:[#allocation3 + $0x88] sm:$0xff]
        %v999 = vld [vmem:[#allocation3 + $0x90] sm:$0xff]
        %v1000 = vld [vmem:[#allocation3 + $0x98] sm:$0xff]
        %v1001 = vld [vmem:[#allocation3 + $0xa0] sm:$0xff]
        %v1002 = vld [vmem:[#allocation3 + $0xa8] sm:$0xff]
        %v1003 = vld [vmem:[#allocation3 + $0xb0] sm:$0xff]
        %v1004 = vld [vmem:[#allocation3 + $0xb8] sm:$0xff]
        %v1005 = vld [vmem:[#allocation3 + $0xc0] sm:$0xff]
        %v1006 = vld [vmem:[#allocation3 + $0xc8] sm:$0xff]
        %v1007 = vld [vmem:[#allocation3 + $0xd0] sm:$0xff]
        %v1008 = vld [vmem:[#allocation3 + $0xd8] sm:$0xff]
        %v1009 = vld [vmem:[#allocation3 + $0xe0] sm:$0xff]
        %v1010 = vld [vmem:[#allocation3 + $0xe8] sm:$0xff]
        %v1011 = vld [vmem:[#allocation3 + $0xf0] sm:$0xff]
        %v1012 = vld [vmem:[#allocation3 + $0xf8] sm:$0xff]
        %v1013 = vld [vmem:[#allocation3 + $0x100] sm:$0xff]
        %v1014 = vld [vmem:[#allocation3 + $0x108] sm:$0xff]
        %v1015 = vld [vmem:[#allocation3 + $0x110] sm:$0xff]
        %v1016 = vld [vmem:[#allocation3 + $0x118] sm:$0xff]
        %v1017 = vld [vmem:[#allocation3 + $0x120] sm:$0xff]
        %v1018 = vld [vmem:[#allocation3 + $0x128] sm:$0xff]
        %v1019 = vld [vmem:[#allocation3 + $0x130] sm:$0xff]
        %v1020 = vld [vmem:[#allocation3 + $0x138] sm:$0xff]
        %v1021 = vld [vmem:[#allocation3 + $0x140] sm:$0xff]
        %v1022 = vld [vmem:[#allocation3 + $0x148] sm:$0xff]
        %v1023 = vld [vmem:[#allocation3 + $0x150] sm:$0xff]
        %v1024 = vld [vmem:[#allocation3 + $0x158] sm:$0xff]
        %v1025 = vld [vmem:[#allocation3 + $0x160] sm:$0xff]
        %v1026 = vld [vmem:[#allocation3 + $0x168] sm:$0xff]
        %v1027 = vld [vmem:[#allocation3 + $0x170] sm:$0xff]
        %v1028 = vld [vmem:[#allocation3 + $0x178] sm:$0xff]
        %v1029 = vld [vmem:[#allocation3 + $0x180] sm:$0xff]
        %v1030 = vld [vmem:[#allocation3 + $0x188] sm:$0xff]
        %v1031 = vld [vmem:[#allocation3 + $0x190] sm:$0xff]
        %v1032 = vld [vmem:[#allocation3 + $0x198] sm:$0xff]
        %v1033 = vld [vmem:[#allocation3 + $0x1a0] sm:$0xff]
        %v1034 = vld [vmem:[#allocation3 + $0x1a8] sm:$0xff]
        %v1035 = vld [vmem:[#allocation3 + $0x1b0] sm:$0xff]
        %v1036 = vld [vmem:[#allocation3 + $0x1b8] sm:$0xff]
        %v1037 = vld [vmem:[#allocation3 + $0x1c0] sm:$0xff]
        %v1038 = vld [vmem:[#allocation3 + $0x1c8] sm:$0xff]
        %v1039 = vld [vmem:[#allocation3 + $0x1d0] sm:$0xff]
        %v1040 = vld [vmem:[#allocation3 + $0x1d8] sm:$0xff]
        %v1041 = vld [vmem:[#allocation3 + $0x1e0] sm:$0xff]
        %v1042 = vld [vmem:[#allocation3 + $0x1e8] sm:$0xff]
        %v1043 = vld [vmem:[#allocation3 + $0x1f0] sm:$0xff]
        %v1044 = vld [vmem:[#allocation3 + $0x1f8] sm:$0xff]
        %1045 = vmatprep.subr.mxu0 %v1042
        %1046 = vmatpush1.msra.mxu0 %v1041
        %1047 = vmatprep.subr.mxu0 %v1038
        %1048 = vmatpush1.msra.mxu0 %v1037
        %1049 = vmatprep.subr.mxu0 %v1034
        %1050 = vmatpush1.msra.mxu0 %v1033
        %1051 = vmatprep.subr.mxu0 %v1030
        %1052 = vmatpush1.msra.mxu0 %v1029
        %1053 = vmatprep.subr.mxu0 %v1026
        %1054 = vmatpush1.msra.mxu0 %v1025
        %1055 = vmatprep.subr.mxu0 %v1022
        %1056 = vmatpush1.msra.mxu0 %v1021
        %1057 = vmatprep.subr.mxu0 %v1018
        %1058 = vmatpush1.msra.mxu0 %v1017
        %1059 = vmatprep.subr.mxu0 %v1014
        %1060 = vmatpush1.msra.mxu0 %v1013
        %1061 = vmatprep.subr.mxu0 %v1010
        %1062 = vmatpush1.msra.mxu0 %v1009
        %1063 = vmatprep.subr.mxu0 %v1006
        %1064 = vmatpush1.msra.mxu0 %v1005
        %1065 = vmatprep.subr.mxu0 %v1002
        %1066 = vmatpush1.msra.mxu0 %v1001
        %1067 = vmatprep.subr.mxu0 %v998
        %1068 = vmatpush1.msra.mxu0 %v997
        %1069 = vmatprep.subr.mxu0 %v994
        %1070 = vmatpush1.msra.mxu0 %v993
        %1071 = vmatprep.subr.mxu0 %v990
        %1072 = vmatpush1.msra.mxu0 %v989
        %1073 = vmatprep.subr.mxu0 %v986
        %1074 = vmatpush1.msra.mxu0 %v985
        %1075 = vmatprep.subr.mxu0 %v982
        %1076 = vmatpush1.msra.mxu0 %v981
        %1077 = vmatprep.subr.mxu0 0.0
        %1078 = vmatpush2.msra.mxu0 0.0
        %1079 = vmatprep.subr.mxu0 0.0
        %1080 = vmatpush2.msra.mxu0 0.0
        %1081 = vmatprep.subr.mxu0 0.0
        %1082 = vmatpush2.msra.mxu0 0.0
        %1083 = vmatprep.subr.mxu0 0.0
        %1084 = vmatpush2.msra.mxu0 0.0
        %1085 = vmatprep.subr.mxu0 0.0
        %1086 = vmatpush2.msra.mxu0 0.0
        %1087 = vmatprep.subr.mxu0 0.0
        %1088 = vmatpush2.msra.mxu0 0.0
        %1089 = vmatprep.subr.mxu0 0.0
        %1090 = vmatpush2.msra.mxu0 0.0
        %1091 = vmatprep.subr.mxu0 0.0
        %1092 = vmatpush2.msra.mxu0 0.0
        %1093 = vmatprep.subr.mxu0 0.0
        %1094 = vmatpush2.msra.mxu0 0.0
        %1095 = vmatprep.subr.mxu0 0.0
        %1096 = vmatpush2.msra.mxu0 0.0
        %1097 = vmatprep.subr.mxu0 0.0
        %1098 = vmatpush2.msra.mxu0 0.0
        %1099 = vmatprep.subr.mxu0 0.0
        %1100 = vmatpush2.msra.mxu0 0.0
        %1101 = vmatprep.subr.mxu0 0.0
        %1102 = vmatpush2.msra.mxu0 0.0
        %1103 = vmatprep.subr.mxu0 0.0
        %1104 = vmatpush2.msra.mxu0 0.0
        %1105 = vmatprep.subr.mxu0 0.0
        %1106 = vmatpush2.msra.mxu0 0.0
        %1107 = vmatprep.subr.mxu0 0.0
        %1108 = vmatpush2.msra.mxu0 0.0
        %1109 = vmatprep.mubr.f32.mxu0 0.0
        %1110 = vmatmul.mubr.f32.gmra.mxu0 %v972
        %v1111 = vpop.f32.mrf.mxu0
        %v1112 = vadd.f32 0.0, %v1111
        %v1113 = vpop.f32.mrf.mxu0
        %v1114 = vadd.f32 0.0, %v1113
        %1115 = vdwg.mxu0
        %1116 = vmatprep.subr.mxu0 %v1044
        %1117 = vmatpush1.msra.mxu0 %v1043
        %1118 = vmatprep.subr.mxu0 %v1040
        %1119 = vmatpush1.msra.mxu0 %v1039
        %1120 = vmatprep.subr.mxu0 %v1036
        %1121 = vmatpush1.msra.mxu0 %v1035
        %1122 = vmatprep.subr.mxu0 %v1032
        %1123 = vmatpush1.msra.mxu0 %v1031
        %1124 = vmatprep.subr.mxu0 %v1028
        %1125 = vmatpush1.msra.mxu0 %v1027
        %1126 = vmatprep.subr.mxu0 %v1024
        %1127 = vmatpush1.msra.mxu0 %v1023
        %1128 = vmatprep.subr.mxu0 %v1020
        %1129 = vmatpush1.msra.mxu0 %v1019
        %1130 = vmatprep.subr.mxu0 %v1016
        %1131 = vmatpush1.msra.mxu0 %v1015
        %1132 = vmatprep.subr.mxu0 %v1012
        %1133 = vmatpush1.msra.mxu0 %v1011
        %1134 = vmatprep.subr.mxu0 %v1008
        %1135 = vmatpush1.msra.mxu0 %v1007
        %1136 = vmatprep.subr.mxu0 %v1004
        %1137 = vmatpush1.msra.mxu0 %v1003
        %1138 = vmatprep.subr.mxu0 %v1000
        %1139 = vmatpush1.msra.mxu0 %v999
        %1140 = vmatprep.subr.mxu0 %v996
        %1141 = vmatpush1.msra.mxu0 %v995
        %1142 = vmatprep.subr.mxu0 %v992
        %1143 = vmatpush1.msra.mxu0 %v991
        %1144 = vmatprep.subr.mxu0 %v988
        %1145 = vmatpush1.msra.mxu0 %v987
        %1146 = vmatprep.subr.mxu0 %v984
        %1147 = vmatpush1.msra.mxu0 %v983
        %1148 = vmatprep.subr.mxu0 0.0
        %1149 = vmatpush2.msra.mxu0 0.0
        %1150 = vmatprep.subr.mxu0 0.0
        %1151 = vmatpush2.msra.mxu0 0.0
        %1152 = vmatprep.subr.mxu0 0.0
        %1153 = vmatpush2.msra.mxu0 0.0
        %1154 = vmatprep.subr.mxu0 0.0
        %1155 = vmatpush2.msra.mxu0 0.0
        %1156 = vmatprep.subr.mxu0 0.0
        %1157 = vmatpush2.msra.mxu0 0.0
        %1158 = vmatprep.subr.mxu0 0.0
        %1159 = vmatpush2.msra.mxu0 0.0
        %1160 = vmatprep.subr.mxu0 0.0
        %1161 = vmatpush2.msra.mxu0 0.0
        %1162 = vmatprep.subr.mxu0 0.0
        %1163 = vmatpush2.msra.mxu0 0.0
        %1164 = vmatprep.subr.mxu0 0.0
        %1165 = vmatpush2.msra.mxu0 0.0
        %1166 = vmatprep.subr.mxu0 0.0
        %1167 = vmatpush2.msra.mxu0 0.0
        %1168 = vmatprep.subr.mxu0 0.0
        %1169 = vmatpush2.msra.mxu0 0.0
        %1170 = vmatprep.subr.mxu0 0.0
        %1171 = vmatpush2.msra.mxu0 0.0
        %1172 = vmatprep.subr.mxu0 0.0
        %1173 = vmatpush2.msra.mxu0 0.0
        %1174 = vmatprep.subr.mxu0 0.0
        %1175 = vmatpush2.msra.mxu0 0.0
        %1176 = vmatprep.subr.mxu0 0.0
        %1177 = vmatpush2.msra.mxu0 0.0
        %1178 = vmatprep.subr.mxu0 0.0
        %1179 = vmatpush2.msra.mxu0 0.0
        %1180 = vmatprep.mubr.f32.mxu0 0.0
        %1181 = vmatmul.mubr.f32.gmra.mxu0 %v972
        %v1182 = vpop.f32.mrf.mxu0
        %v1183 = vadd.f32 0.0, %v1182
        %v1184 = vpop.f32.mrf.mxu0
        %v1185 = vadd.f32 0.0, %v1184
        %1186 = vdwg.mxu0
        %v1187 = vadd.f32 %v977, %v1112
        %v1188 = vadd.f32 %v978, %v1114
        %v1189 = vadd.f32 %v979, %v1183
        %v1190 = vadd.f32 %v980, %v1185
        %v1191 = vxor.u32 %v1187, 2147483648
        %v1192 = vmul.f32 %v1191, 1.442695
        %v1193 = vpow.pop %v1192
        %v1194 = vadd.f32 %v1193, 1.0
        %v1195 = vrcp.pop %v1194
        %v1196 = vmul.f32 1.0, %v1195
        %v1197 = vxor.u32 %v1188, 2147483648
        %v1198 = vmul.f32 %v1197, 1.442695
        %v1199 = vpow.pop %v1198
        %v1200 = vadd.f32 %v1199, 1.0
        %v1201 = vrcp.pop %v1200
        %v1202 = vmul.f32 1.0, %v1201
        %v1203 = vtanh.pop %v1189
        %v1204 = vxor.u32 %v1190, 2147483648
        %v1205 = vmul.f32 %v1204, 1.442695
        %v1206 = vpow.pop %v1205
        %v1207 = vadd.f32 %v1206, 1.0
        %v1208 = vrcp.pop %v1207
        %v1209 = vmul.f32 1.0, %v1208
        %v1210 = vmul.f32 %v1202, %v973
        %v1211 = vmul.f32 %v1196, %v1203
        %v1212 = vadd.f32 %v1210, %v1211
        %v1213 = vtanh.pop %v1212
        %v1214 = vmul.f32 %v1209, %v1213
        %1215 = vst [vmem:[#allocation8] sm:$0xff] %v1214
        %s1216 = smul.u32 %s22, 8
        %p1217 = scmp.lt.s32.totalorder %s1216, 20
        // Predicated region
        $region212: #{char_lstm_forward.1} parent=31 // pred_check
          %p1218 = pneg %p1217
        $region213: #{char_lstm_forward.1} parent=31 // pred_check_branch
          %1220 = sbr.rel (%p1218) target = $region215
        $region214: #{char_lstm_forward.1} parent=31 // pred_region
          %1221 = vst [vmem:[#allocation5] sm:$0xff] %v1214
          %1222 = vst [vmem:[#allocation6] sm:$0xff] %v1212
        $region215: #{char_lstm_forward.1} parent=31 // pred_fallthru
          _
        %v1223 = vld [vmem:[#allocation5] sm:$0xff]
        %v1224 = vld [vmem:[#allocation6] sm:$0xff]
        %s1225 = smul.u32 1, 4
        %s1226 = smul.addr %s1225, 8
        %s1227 = scalar_lea.vmem [#allocation7], %s1226
        %v1228 = vld [vmem:[%s1227] sm:$0xff]
        %v1229 = vld [vmem:[%s1227 + $0x8] sm:$0xff]
        %v1230 = vld [vmem:[%s1227 + $0x10] sm:$0xff]
        %v1231 = vld [vmem:[%s1227 + $0x18] sm:$0xff]
        %v1232 = vld [vmem:[#allocation3] sm:$0xff]
        %v1233 = vld [vmem:[#allocation3 + $0x8] sm:$0xff]
        %v1234 = vld [vmem:[#allocation3 + $0x10] sm:$0xff]
        %v1235 = vld [vmem:[#allocation3 + $0x18] sm:$0xff]
        %v1236 = vld [vmem:[#allocation3 + $0x20] sm:$0xff]
        %v1237 = vld [vmem:[#allocation3 + $0x28] sm:$0xff]
        %v1238 = vld [vmem:[#allocation3 + $0x30] sm:$0xff]
        %v1239 = vld [vmem:[#allocation3 + $0x38] sm:$0xff]
        %v1240 = vld [vmem:[#allocation3 + $0x40] sm:$0xff]
        %v1241 = vld [vmem:[#allocation3 + $0x48] sm:$0xff]
        %v1242 = vld [vmem:[#allocation3 + $0x50] sm:$0xff]
        %v1243 = vld [vmem:[#allocation3 + $0x58] sm:$0xff]
        %v1244 = vld [vmem:[#allocation3 + $0x60] sm:$0xff]
        %v1245 = vld [vmem:[#allocation3 + $0x68] sm:$0xff]
        %v1246 = vld [vmem:[#allocation3 + $0x70] sm:$0xff]
        %v1247 = vld [vmem:[#allocation3 + $0x78] sm:$0xff]
        %v1248 = vld [vmem:[#allocation3 + $0x80] sm:$0xff]
        %v1249 = vld [vmem:[#allocation3 + $0x88] sm:$0xff]
        %v1250 = vld [vmem:[#allocation3 + $0x90] sm:$0xff]
        %v1251 = vld [vmem:[#allocation3 + $0x98] sm:$0xff]
        %v1252 = vld [vmem:[#allocation3 + $0xa0] sm:$0xff]
        %v1253 = vld [vmem:[#allocation3 + $0xa8] sm:$0xff]
        %v1254 = vld [vmem:[#allocation3 + $0xb0] sm:$0xff]
        %v1255 = vld [vmem:[#allocation3 + $0xb8] sm:$0xff]
        %v1256 = vld [vmem:[#allocation3 + $0xc0] sm:$0xff]
        %v1257 = vld [vmem:[#allocation3 + $0xc8] sm:$0xff]
        %v1258 = vld [vmem:[#allocation3 + $0xd0] sm:$0xff]
        %v1259 = vld [vmem:[#allocation3 + $0xd8] sm:$0xff]
        %v1260 = vld [vmem:[#allocation3 + $0xe0] sm:$0xff]
        %v1261 = vld [vmem:[#allocation3 + $0xe8] sm:$0xff]
        %v1262 = vld [vmem:[#allocation3 + $0xf0] sm:$0xff]
        %v1263 = vld [vmem:[#allocation3 + $0xf8] sm:$0xff]
        %v1264 = vld [vmem:[#allocation3 + $0x100] sm:$0xff]
        %v1265 = vld [vmem:[#allocation3 + $0x108] sm:$0xff]
        %v1266 = vld [vmem:[#allocation3 + $0x110] sm:$0xff]
        %v1267 = vld [vmem:[#allocation3 + $0x118] sm:$0xff]
        %v1268 = vld [vmem:[#allocation3 + $0x120] sm:$0xff]
        %v1269 = vld [vmem:[#allocation3 + $0x128] sm:$0xff]
        %v1270 = vld [vmem:[#allocation3 + $0x130] sm:$0xff]
        %v1271 = vld [vmem:[#allocation3 + $0x138] sm:$0xff]
        %v1272 = vld [vmem:[#allocation3 + $0x140] sm:$0xff]
        %v1273 = vld [vmem:[#allocation3 + $0x148] sm:$0xff]
        %v1274 = vld [vmem:[#allocation3 + $0x150] sm:$0xff]
        %v1275 = vld [vmem:[#allocation3 + $0x158] sm:$0xff]
        %v1276 = vld [vmem:[#allocation3 + $0x160] sm:$0xff]
        %v1277 = vld [vmem:[#allocation3 + $0x168] sm:$0xff]
        %v1278 = vld [vmem:[#allocation3 + $0x170] sm:$0xff]
        %v1279 = vld [vmem:[#allocation3 + $0x178] sm:$0xff]
        %v1280 = vld [vmem:[#allocation3 + $0x180] sm:$0xff]
        %v1281 = vld [vmem:[#allocation3 + $0x188] sm:$0xff]
        %v1282 = vld [vmem:[#allocation3 + $0x190] sm:$0xff]
        %v1283 = vld [vmem:[#allocation3 + $0x198] sm:$0xff]
        %v1284 = vld [vmem:[#allocation3 + $0x1a0] sm:$0xff]
        %v1285 = vld [vmem:[#allocation3 + $0x1a8] sm:$0xff]
        %v1286 = vld [vmem:[#allocation3 + $0x1b0] sm:$0xff]
        %v1287 = vld [vmem:[#allocation3 + $0x1b8] sm:$0xff]
        %v1288 = vld [vmem:[#allocation3 + $0x1c0] sm:$0xff]
        %v1289 = vld [vmem:[#allocation3 + $0x1c8] sm:$0xff]
        %v1290 = vld [vmem:[#allocation3 + $0x1d0] sm:$0xff]
        %v1291 = vld [vmem:[#allocation3 + $0x1d8] sm:$0xff]
        %v1292 = vld [vmem:[#allocation3 + $0x1e0] sm:$0xff]
        %v1293 = vld [vmem:[#allocation3 + $0x1e8] sm:$0xff]
        %v1294 = vld [vmem:[#allocation3 + $0x1f0] sm:$0xff]
        %v1295 = vld [vmem:[#allocation3 + $0x1f8] sm:$0xff]
        %1296 = vmatprep.subr.mxu0 %v1293
        %1297 = vmatpush1.msra.mxu0 %v1292
        %1298 = vmatprep.subr.mxu0 %v1289
        %1299 = vmatpush1.msra.mxu0 %v1288
        %1300 = vmatprep.subr.mxu0 %v1285
        %1301 = vmatpush1.msra.mxu0 %v1284
        %1302 = vmatprep.subr.mxu0 %v1281
        %1303 = vmatpush1.msra.mxu0 %v1280
        %1304 = vmatprep.subr.mxu0 %v1277
        %1305 = vmatpush1.msra.mxu0 %v1276
        %1306 = vmatprep.subr.mxu0 %v1273
        %1307 = vmatpush1.msra.mxu0 %v1272
        %1308 = vmatprep.subr.mxu0 %v1269
        %1309 = vmatpush1.msra.mxu0 %v1268
        %1310 = vmatprep.subr.mxu0 %v1265
        %1311 = vmatpush1.msra.mxu0 %v1264
        %1312 = vmatprep.subr.mxu0 %v1261
        %1313 = vmatpush1.msra.mxu0 %v1260
        %1314 = vmatprep.subr.mxu0 %v1257
        %1315 = vmatpush1.msra.mxu0 %v1256
        %1316 = vmatprep.subr.mxu0 %v1253
        %1317 = vmatpush1.msra.mxu0 %v1252
        %1318 = vmatprep.subr.mxu0 %v1249
        %1319 = vmatpush1.msra.mxu0 %v1248
        %1320 = vmatprep.subr.mxu0 %v1245
        %1321 = vmatpush1.msra.mxu0 %v1244
        %1322 = vmatprep.subr.mxu0 %v1241
        %1323 = vmatpush1.msra.mxu0 %v1240
        %1324 = vmatprep.subr.mxu0 %v1237
        %1325 = vmatpush1.msra.mxu0 %v1236
        %1326 = vmatprep.subr.mxu0 %v1233
        %1327 = vmatpush1.msra.mxu0 %v1232
        %1328 = vmatprep.subr.mxu0 0.0
        %1329 = vmatpush2.msra.mxu0 0.0
        %1330 = vmatprep.subr.mxu0 0.0
        %1331 = vmatpush2.msra.mxu0 0.0
        %1332 = vmatprep.subr.mxu0 0.0
        %1333 = vmatpush2.msra.mxu0 0.0
        %1334 = vmatprep.subr.mxu0 0.0
        %1335 = vmatpush2.msra.mxu0 0.0
        %1336 = vmatprep.subr.mxu0 0.0
        %1337 = vmatpush2.msra.mxu0 0.0
        %1338 = vmatprep.subr.mxu0 0.0
        %1339 = vmatpush2.msra.mxu0 0.0
        %1340 = vmatprep.subr.mxu0 0.0
        %1341 = vmatpush2.msra.mxu0 0.0
        %1342 = vmatprep.subr.mxu0 0.0
        %1343 = vmatpush2.msra.mxu0 0.0
        %1344 = vmatprep.subr.mxu0 0.0
        %1345 = vmatpush2.msra.mxu0 0.0
        %1346 = vmatprep.subr.mxu0 0.0
        %1347 = vmatpush2.msra.mxu0 0.0
        %1348 = vmatprep.subr.mxu0 0.0
        %1349 = vmatpush2.msra.mxu0 0.0
        %1350 = vmatprep.subr.mxu0 0.0
        %1351 = vmatpush2.msra.mxu0 0.0
        %1352 = vmatprep.subr.mxu0 0.0
        %1353 = vmatpush2.msra.mxu0 0.0
        %1354 = vmatprep.subr.mxu0 0.0
        %1355 = vmatpush2.msra.mxu0 0.0
        %1356 = vmatprep.subr.mxu0 0.0
        %1357 = vmatpush2.msra.mxu0 0.0
        %1358 = vmatprep.subr.mxu0 0.0
        %1359 = vmatpush2.msra.mxu0 0.0
        %1360 = vmatprep.mubr.f32.mxu0 0.0
        %1361 = vmatmul.mubr.f32.gmra.mxu0 %v1223
        %v1362 = vpop.f32.mrf.mxu0
        %v1363 = vadd.f32 0.0, %v1362
        %v1364 = vpop.f32.mrf.mxu0
        %v1365 = vadd.f32 0.0, %v1364
        %1366 = vdwg.mxu0
        %1367 = vmatprep.subr.mxu0 %v1295
        %1368 = vmatpush1.msra.mxu0 %v1294
        %1369 = vmatprep.subr.mxu0 %v1291
        %1370 = vmatpush1.msra.mxu0 %v1290
        %1371 = vmatprep.subr.mxu0 %v1287
        %1372 = vmatpush1.msra.mxu0 %v1286
        %1373 = vmatprep.subr.mxu0 %v1283
        %1374 = vmatpush1.msra.mxu0 %v1282
        %1375 = vmatprep.subr.mxu0 %v1279
        %1376 = vmatpush1.msra.mxu0 %v1278
        %1377 = vmatprep.subr.mxu0 %v1275
        %1378 = vmatpush1.msra.mxu0 %v1274
        %1379 = vmatprep.subr.mxu0 %v1271
        %1380 = vmatpush1.msra.mxu0 %v1270
        %1381 = vmatprep.subr.mxu0 %v1267
        %1382 = vmatpush1.msra.mxu0 %v1266
        %1383 = vmatprep.subr.mxu0 %v1263
        %1384 = vmatpush1.msra.mxu0 %v1262
        %1385 = vmatprep.subr.mxu0 %v1259
        %1386 = vmatpush1.msra.mxu0 %v1258
        %1387 = vmatprep.subr.mxu0 %v1255
        %1388 = vmatpush1.msra.mxu0 %v1254
        %1389 = vmatprep.subr.mxu0 %v1251
        %1390 = vmatpush1.msra.mxu0 %v1250
        %1391 = vmatprep.subr.mxu0 %v1247
        %1392 = vmatpush1.msra.mxu0 %v1246
        %1393 = vmatprep.subr.mxu0 %v1243
        %1394 = vmatpush1.msra.mxu0 %v1242
        %1395 = vmatprep.subr.mxu0 %v1239
        %1396 = vmatpush1.msra.mxu0 %v1238
        %1397 = vmatprep.subr.mxu0 %v1235
        %1398 = vmatpush1.msra.mxu0 %v1234
        %1399 = vmatprep.subr.mxu0 0.0
        %1400 = vmatpush2.msra.mxu0 0.0
        %1401 = vmatprep.subr.mxu0 0.0
        %1402 = vmatpush2.msra.mxu0 0.0
        %1403 = vmatprep.subr.mxu0 0.0
        %1404 = vmatpush2.msra.mxu0 0.0
        %1405 = vmatprep.subr.mxu0 0.0
        %1406 = vmatpush2.msra.mxu0 0.0
        %1407 = vmatprep.subr.mxu0 0.0
        %1408 = vmatpush2.msra.mxu0 0.0
        %1409 = vmatprep.subr.mxu0 0.0
        %1410 = vmatpush2.msra.mxu0 0.0
        %1411 = vmatprep.subr.mxu0 0.0
        %1412 = vmatpush2.msra.mxu0 0.0
        %1413 = vmatprep.subr.mxu0 0.0
        %1414 = vmatpush2.msra.mxu0 0.0
        %1415 = vmatprep.subr.mxu0 0.0
        %1416 = vmatpush2.msra.mxu0 0.0
        %1417 = vmatprep.subr.mxu0 0.0
        %1418 = vmatpush2.msra.mxu0 0.0
        %1419 = vmatprep.subr.mxu0 0.0
        %1420 = vmatpush2.msra.mxu0 0.0
        %1421 = vmatprep.subr.mxu0 0.0
        %1422 = vmatpush2.msra.mxu0 0.0
        %1423 = vmatprep.subr.mxu0 0.0
        %1424 = vmatpush2.msra.mxu0 0.0
        %1425 = vmatprep.subr.mxu0 0.0
        %1426 = vmatpush2.msra.mxu0 0.0
        %1427 = vmatprep.subr.mxu0 0.0
        %1428 = vmatpush2.msra.mxu0 0.0
        %1429 = vmatprep.subr.mxu0 0.0
        %1430 = vmatpush2.msra.mxu0 0.0
        %1431 = vmatprep.mubr.f32.mxu0 0.0
        %1432 = vmatmul.mubr.f32.gmra.mxu0 %v1223
        %v1433 = vpop.f32.mrf.mxu0
        %v1434 = vadd.f32 0.0, %v1433
        %v1435 = vpop.f32.mrf.mxu0
        %v1436 = vadd.f32 0.0, %v1435
        %1437 = vdwg.mxu0
        %v1438 = vadd.f32 %v1228, %v1363
        %v1439 = vadd.f32 %v1229, %v1365
        %v1440 = vadd.f32 %v1230, %v1434
        %v1441 = vadd.f32 %v1231, %v1436
        %v1442 = vxor.u32 %v1438, 2147483648
        %v1443 = vmul.f32 %v1442, 1.442695
        %v1444 = vpow.pop %v1443
        %v1445 = vadd.f32 %v1444, 1.0
        %v1446 = vrcp.pop %v1445
        %v1447 = vmul.f32 1.0, %v1446
        %v1448 = vxor.u32 %v1439, 2147483648
        %v1449 = vmul.f32 %v1448, 1.442695
        %v1450 = vpow.pop %v1449
        %v1451 = vadd.f32 %v1450, 1.0
        %v1452 = vrcp.pop %v1451
        %v1453 = vmul.f32 1.0, %v1452
        %v1454 = vtanh.pop %v1440
        %v1455 = vxor.u32 %v1441, 2147483648
        %v1456 = vmul.f32 %v1455, 1.442695
        %v1457 = vpow.pop %v1456
        %v1458 = vadd.f32 %v1457, 1.0
        %v1459 = vrcp.pop %v1458
        %v1460 = vmul.f32 1.0, %v1459
        %v1461 = vmul.f32 %v1453, %v1224
        %v1462 = vmul.f32 %v1447, %v1454
        %v1463 = vadd.f32 %v1461, %v1462
        %v1464 = vtanh.pop %v1463
        %v1465 = vmul.f32 %v1460, %v1464
        %s1466 = scalar_lea.vmem [#allocation8], 8
        %1467 = vst [vmem:[%s1466] sm:$0xff] %v1465
        %s1468 = sadd.s32 %s1216, 1
        %p1469 = scmp.lt.s32.totalorder %s1468, 20
        // Predicated region
        $region216: #{char_lstm_forward.1} parent=31 // pred_check
          %p1470 = pneg %p1469
        $region217: #{char_lstm_forward.1} parent=31 // pred_check_branch
          %1472 = sbr.rel (%p1470) target = $region219
        $region218: #{char_lstm_forward.1} parent=31 // pred_region
          %1473 = vst [vmem:[#allocation5] sm:$0xff] %v1465
          %1474 = vst [vmem:[#allocation6] sm:$0xff] %v1463
        $region219: #{char_lstm_forward.1} parent=31 // pred_fallthru
          _
        %v1475 = vld [vmem:[#allocation5] sm:$0xff]
        %v1476 = vld [vmem:[#allocation6] sm:$0xff]
        %s1477 = smul.u32 2, 4
        %s1478 = smul.addr %s1477, 8
        %s1479 = scalar_lea.vmem [#allocation7], %s1478
        %v1480 = vld [vmem:[%s1479] sm:$0xff]
        %v1481 = vld [vmem:[%s1479 + $0x8] sm:$0xff]
        %v1482 = vld [vmem:[%s1479 + $0x10] sm:$0xff]
        %v1483 = vld [vmem:[%s1479 + $0x18] sm:$0xff]
        %v1484 = vld [vmem:[#allocation3] sm:$0xff]
        %v1485 = vld [vmem:[#allocation3 + $0x8] sm:$0xff]
        %v1486 = vld [vmem:[#allocation3 + $0x10] sm:$0xff]
        %v1487 = vld [vmem:[#allocation3 + $0x18] sm:$0xff]
        %v1488 = vld [vmem:[#allocation3 + $0x20] sm:$0xff]
        %v1489 = vld [vmem:[#allocation3 + $0x28] sm:$0xff]
        %v1490 = vld [vmem:[#allocation3 + $0x30] sm:$0xff]
        %v1491 = vld [vmem:[#allocation3 + $0x38] sm:$0xff]
        %v1492 = vld [vmem:[#allocation3 + $0x40] sm:$0xff]
        %v1493 = vld [vmem:[#allocation3 + $0x48] sm:$0xff]
        %v1494 = vld [vmem:[#allocation3 + $0x50] sm:$0xff]
        %v1495 = vld [vmem:[#allocation3 + $0x58] sm:$0xff]
        %v1496 = vld [vmem:[#allocation3 + $0x60] sm:$0xff]
        %v1497 = vld [vmem:[#allocation3 + $0x68] sm:$0xff]
        %v1498 = vld [vmem:[#allocation3 + $0x70] sm:$0xff]
        %v1499 = vld [vmem:[#allocation3 + $0x78] sm:$0xff]
        %v1500 = vld [vmem:[#allocation3 + $0x80] sm:$0xff]
        %v1501 = vld [vmem:[#allocation3 + $0x88] sm:$0xff]
        %v1502 = vld [vmem:[#allocation3 + $0x90] sm:$0xff]
        %v1503 = vld [vmem:[#allocation3 + $0x98] sm:$0xff]
        %v1504 = vld [vmem:[#allocation3 + $0xa0] sm:$0xff]
        %v1505 = vld [vmem:[#allocation3 + $0xa8] sm:$0xff]
        %v1506 = vld [vmem:[#allocation3 + $0xb0] sm:$0xff]
        %v1507 = vld [vmem:[#allocation3 + $0xb8] sm:$0xff]
        %v1508 = vld [vmem:[#allocation3 + $0xc0] sm:$0xff]
        %v1509 = vld [vmem:[#allocation3 + $0xc8] sm:$0xff]
        %v1510 = vld [vmem:[#allocation3 + $0xd0] sm:$0xff]
        %v1511 = vld [vmem:[#allocation3 + $0xd8] sm:$0xff]
        %v1512 = vld [vmem:[#allocation3 + $0xe0] sm:$0xff]
        %v1513 = vld [vmem:[#allocation3 + $0xe8] sm:$0xff]
        %v1514 = vld [vmem:[#allocation3 + $0xf0] sm:$0xff]
        %v1515 = vld [vmem:[#allocation3 + $0xf8] sm:$0xff]
        %v1516 = vld [vmem:[#allocation3 + $0x100] sm:$0xff]
        %v1517 = vld [vmem:[#allocation3 + $0x108] sm:$0xff]
        %v1518 = vld [vmem:[#allocation3 + $0x110] sm:$0xff]
        %v1519 = vld [vmem:[#allocation3 + $0x118] sm:$0xff]
        %v1520 = vld [vmem:[#allocation3 + $0x120] sm:$0xff]
        %v1521 = vld [vmem:[#allocation3 + $0x128] sm:$0xff]
        %v1522 = vld [vmem:[#allocation3 + $0x130] sm:$0xff]
        %v1523 = vld [vmem:[#allocation3 + $0x138] sm:$0xff]
        %v1524 = vld [vmem:[#allocation3 + $0x140] sm:$0xff]
        %v1525 = vld [vmem:[#allocation3 + $0x148] sm:$0xff]
        %v1526 = vld [vmem:[#allocation3 + $0x150] sm:$0xff]
        %v1527 = vld [vmem:[#allocation3 + $0x158] sm:$0xff]
        %v1528 = vld [vmem:[#allocation3 + $0x160] sm:$0xff]
        %v1529 = vld [vmem:[#allocation3 + $0x168] sm:$0xff]
        %v1530 = vld [vmem:[#allocation3 + $0x170] sm:$0xff]
        %v1531 = vld [vmem:[#allocation3 + $0x178] sm:$0xff]
        %v1532 = vld [vmem:[#allocation3 + $0x180] sm:$0xff]
        %v1533 = vld [vmem:[#allocation3 + $0x188] sm:$0xff]
        %v1534 = vld [vmem:[#allocation3 + $0x190] sm:$0xff]
        %v1535 = vld [vmem:[#allocation3 + $0x198] sm:$0xff]
        %v1536 = vld [vmem:[#allocation3 + $0x1a0] sm:$0xff]
        %v1537 = vld [vmem:[#allocation3 + $0x1a8] sm:$0xff]
        %v1538 = vld [vmem:[#allocation3 + $0x1b0] sm:$0xff]
        %v1539 = vld [vmem:[#allocation3 + $0x1b8] sm:$0xff]
        %v1540 = vld [vmem:[#allocation3 + $0x1c0] sm:$0xff]
        %v1541 = vld [vmem:[#allocation3 + $0x1c8] sm:$0xff]
        %v1542 = vld [vmem:[#allocation3 + $0x1d0] sm:$0xff]
        %v1543 = vld [vmem:[#allocation3 + $0x1d8] sm:$0xff]
        %v1544 = vld [vmem:[#allocation3 + $0x1e0] sm:$0xff]
        %v1545 = vld [vmem:[#allocation3 + $0x1e8] sm:$0xff]
        %v1546 = vld [vmem:[#allocation3 + $0x1f0] sm:$0xff]
        %v1547 = vld [vmem:[#allocation3 + $0x1f8] sm:$0xff]
        %1548 = vmatprep.subr.mxu0 %v1545
        %1549 = vmatpush1.msra.mxu0 %v1544
        %1550 = vmatprep.subr.mxu0 %v1541
        %1551 = vmatpush1.msra.mxu0 %v1540
        %1552 = vmatprep.subr.mxu0 %v1537
        %1553 = vmatpush1.msra.mxu0 %v1536
        %1554 = vmatprep.subr.mxu0 %v1533
        %1555 = vmatpush1.msra.mxu0 %v1532
        %1556 = vmatprep.subr.mxu0 %v1529
        %1557 = vmatpush1.msra.mxu0 %v1528
        %1558 = vmatprep.subr.mxu0 %v1525
        %1559 = vmatpush1.msra.mxu0 %v1524
        %1560 = vmatprep.subr.mxu0 %v1521
        %1561 = vmatpush1.msra.mxu0 %v1520
        %1562 = vmatprep.subr.mxu0 %v1517
        %1563 = vmatpush1.msra.mxu0 %v1516
        %1564 = vmatprep.subr.mxu0 %v1513
        %1565 = vmatpush1.msra.mxu0 %v1512
        %1566 = vmatprep.subr.mxu0 %v1509
        %1567 = vmatpush1.msra.mxu0 %v1508
        %1568 = vmatprep.subr.mxu0 %v1505
        %1569 = vmatpush1.msra.mxu0 %v1504
        %1570 = vmatprep.subr.mxu0 %v1501
        %1571 = vmatpush1.msra.mxu0 %v1500
        %1572 = vmatprep.subr.mxu0 %v1497
        %1573 = vmatpush1.msra.mxu0 %v1496
        %1574 = vmatprep.subr.mxu0 %v1493
        %1575 = vmatpush1.msra.mxu0 %v1492
        %1576 = vmatprep.subr.mxu0 %v1489
        %1577 = vmatpush1.msra.mxu0 %v1488
        %1578 = vmatprep.subr.mxu0 %v1485
        %1579 = vmatpush1.msra.mxu0 %v1484
        %1580 = vmatprep.subr.mxu0 0.0
        %1581 = vmatpush2.msra.mxu0 0.0
        %1582 = vmatprep.subr.mxu0 0.0
        %1583 = vmatpush2.msra.mxu0 0.0
        %1584 = vmatprep.subr.mxu0 0.0
        %1585 = vmatpush2.msra.mxu0 0.0
        %1586 = vmatprep.subr.mxu0 0.0
        %1587 = vmatpush2.msra.mxu0 0.0
        %1588 = vmatprep.subr.mxu0 0.0
        %1589 = vmatpush2.msra.mxu0 0.0
        %1590 = vmatprep.subr.mxu0 0.0
        %1591 = vmatpush2.msra.mxu0 0.0
        %1592 = vmatprep.subr.mxu0 0.0
        %1593 = vmatpush2.msra.mxu0 0.0
        %1594 = vmatprep.subr.mxu0 0.0
        %1595 = vmatpush2.msra.mxu0 0.0
        %1596 = vmatprep.subr.mxu0 0.0
        %1597 = vmatpush2.msra.mxu0 0.0
        %1598 = vmatprep.subr.mxu0 0.0
        %1599 = vmatpush2.msra.mxu0 0.0
        %1600 = vmatprep.subr.mxu0 0.0
        %1601 = vmatpush2.msra.mxu0 0.0
        %1602 = vmatprep.subr.mxu0 0.0
        %1603 = vmatpush2.msra.mxu0 0.0
        %1604 = vmatprep.subr.mxu0 0.0
        %1605 = vmatpush2.msra.mxu0 0.0
        %1606 = vmatprep.subr.mxu0 0.0
        %1607 = vmatpush2.msra.mxu0 0.0
        %1608 = vmatprep.subr.mxu0 0.0
        %1609 = vmatpush2.msra.mxu0 0.0
        %1610 = vmatprep.subr.mxu0 0.0
        %1611 = vmatpush2.msra.mxu0 0.0
        %1612 = vmatprep.mubr.f32.mxu0 0.0
        %1613 = vmatmul.mubr.f32.gmra.mxu0 %v1475
        %v1614 = vpop.f32.mrf.mxu0
        %v1615 = vadd.f32 0.0, %v1614
        %v1616 = vpop.f32.mrf.mxu0
        %v1617 = vadd.f32 0.0, %v1616
        %1618 = vdwg.mxu0
        %1619 = vmatprep.subr.mxu0 %v1547
        %1620 = vmatpush1.msra.mxu0 %v1546
        %1621 = vmatprep.subr.mxu0 %v1543
        %1622 = vmatpush1.msra.mxu0 %v1542
        %1623 = vmatprep.subr.mxu0 %v1539
        %1624 = vmatpush1.msra.mxu0 %v1538
        %1625 = vmatprep.subr.mxu0 %v1535
        %1626 = vmatpush1.msra.mxu0 %v1534
        %1627 = vmatprep.subr.mxu0 %v1531
        %1628 = vmatpush1.msra.mxu0 %v1530
        %1629 = vmatprep.subr.mxu0 %v1527
        %1630 = vmatpush1.msra.mxu0 %v1526
        %1631 = vmatprep.subr.mxu0 %v1523
        %1632 = vmatpush1.msra.mxu0 %v1522
        %1633 = vmatprep.subr.mxu0 %v1519
        %1634 = vmatpush1.msra.mxu0 %v1518
        %1635 = vmatprep.subr.mxu0 %v1515
        %1636 = vmatpush1.msra.mxu0 %v1514
        %1637 = vmatprep.subr.mxu0 %v1511
        %1638 = vmatpush1.msra.mxu0 %v1510
        %1639 = vmatprep.subr.mxu0 %v1507
        %1640 = vmatpush1.msra.mxu0 %v1506
        %1641 = vmatprep.subr.mxu0 %v1503
        %1642 = vmatpush1.msra.mxu0 %v1502
        %1643 = vmatprep.subr.mxu0 %v1499
        %1644 = vmatpush1.msra.mxu0 %v1498
        %1645 = vmatprep.subr.mxu0 %v1495
        %1646 = vmatpush1.msra.mxu0 %v1494
        %1647 = vmatprep.subr.mxu0 %v1491
        %1648 = vmatpush1.msra.mxu0 %v1490
        %1649 = vmatprep.subr.mxu0 %v1487
        %1650 = vmatpush1.msra.mxu0 %v1486
        %1651 = vmatprep.subr.mxu0 0.0
        %1652 = vmatpush2.msra.mxu0 0.0
        %1653 = vmatprep.subr.mxu0 0.0
        %1654 = vmatpush2.msra.mxu0 0.0
        %1655 = vmatprep.subr.mxu0 0.0
        %1656 = vmatpush2.msra.mxu0 0.0
        %1657 = vmatprep.subr.mxu0 0.0
        %1658 = vmatpush2.msra.mxu0 0.0
        %1659 = vmatprep.subr.mxu0 0.0
        %1660 = vmatpush2.msra.mxu0 0.0
        %1661 = vmatprep.subr.mxu0 0.0
        %1662 = vmatpush2.msra.mxu0 0.0
        %1663 = vmatprep.subr.mxu0 0.0
        %1664 = vmatpush2.msra.mxu0 0.0
        %1665 = vmatprep.subr.mxu0 0.0
        %1666 = vmatpush2.msra.mxu0 0.0
        %1667 = vmatprep.subr.mxu0 0.0
        %1668 = vmatpush2.msra.mxu0 0.0
        %1669 = vmatprep.subr.mxu0 0.0
        %1670 = vmatpush2.msra.mxu0 0.0
        %1671 = vmatprep.subr.mxu0 0.0
        %1672 = vmatpush2.msra.mxu0 0.0
        %1673 = vmatprep.subr.mxu0 0.0
        %1674 = vmatpush2.msra.mxu0 0.0
        %1675 = vmatprep.subr.mxu0 0.0
        %1676 = vmatpush2.msra.mxu0 0.0
        %1677 = vmatprep.subr.mxu0 0.0
        %1678 = vmatpush2.msra.mxu0 0.0
        %1679 = vmatprep.subr.mxu0 0.0
        %1680 = vmatpush2.msra.mxu0 0.0
        %1681 = vmatprep.subr.mxu0 0.0
        %1682 = vmatpush2.msra.mxu0 0.0
        %1683 = vmatprep.mubr.f32.mxu0 0.0
        %1684 = vmatmul.mubr.f32.gmra.mxu0 %v1475
        %v1685 = vpop.f32.mrf.mxu0
        %v1686 = vadd.f32 0.0, %v1685
        %v1687 = vpop.f32.mrf.mxu0
        %v1688 = vadd.f32 0.0, %v1687
        %1689 = vdwg.mxu0
        %v1690 = vadd.f32 %v1480, %v1615
        %v1691 = vadd.f32 %v1481, %v1617
        %v1692 = vadd.f32 %v1482, %v1686
        %v1693 = vadd.f32 %v1483, %v1688
        %v1694 = vxor.u32 %v1690, 2147483648
        %v1695 = vmul.f32 %v1694, 1.442695
        %v1696 = vpow.pop %v1695
        %v1697 = vadd.f32 %v1696, 1.0
        %v1698 = vrcp.pop %v1697
        %v1699 = vmul.f32 1.0, %v1698
        %v1700 = vxor.u32 %v1691, 2147483648
        %v1701 = vmul.f32 %v1700, 1.442695
        %v1702 = vpow.pop %v1701
        %v1703 = vadd.f32 %v1702, 1.0
        %v1704 = vrcp.pop %v1703
        %v1705 = vmul.f32 1.0, %v1704
        %v1706 = vtanh.pop %v1692
        %v1707 = vxor.u32 %v1693, 2147483648
        %v1708 = vmul.f32 %v1707, 1.442695
        %v1709 = vpow.pop %v1708
        %v1710 = vadd.f32 %v1709, 1.0
        %v1711 = vrcp.pop %v1710
        %v1712 = vmul.f32 1.0, %v1711
        %v1713 = vmul.f32 %v1705, %v1476
        %v1714 = vmul.f32 %v1699, %v1706
        %v1715 = vadd.f32 %v1713, %v1714
        %v1716 = vtanh.pop %v1715
        %v1717 = vmul.f32 %v1712, %v1716
        %s1718 = scalar_lea.vmem [#allocation8], 16
        %1719 = vst [vmem:[%s1718] sm:$0xff] %v1717
        %s1720 = sadd.s32 %s1216, 2
        %p1721 = scmp.lt.s32.totalorder %s1720, 20
        // Predicated region
        $region220: #{char_lstm_forward.1} parent=31 // pred_check
          %p1722 = pneg %p1721
        $region221: #{char_lstm_forward.1} parent=31 // pred_check_branch
          %1724 = sbr.rel (%p1722) target = $region223
        $region222: #{char_lstm_forward.1} parent=31 // pred_region
          %1725 = vst [vmem:[#allocation5] sm:$0xff] %v1717
          %1726 = vst [vmem:[#allocation6] sm:$0xff] %v1715
        $region223: #{char_lstm_forward.1} parent=31 // pred_fallthru
          _
        %v1727 = vld [vmem:[#allocation5] sm:$0xff]
        %v1728 = vld [vmem:[#allocation6] sm:$0xff]
        %s1729 = smul.u32 3, 4
        %s1730 = smul.addr %s1729, 8
        %s1731 = scalar_lea.vmem [#allocation7], %s1730
        %v1732 = vld [vmem:[%s1731] sm:$0xff]
        %v1733 = vld [vmem:[%s1731 + $0x8] sm:$0xff]
        %v1734 = vld [vmem:[%s1731 + $0x10] sm:$0xff]
        %v1735 = vld [vmem:[%s1731 + $0x18] sm:$0xff]
        %v1736 = vld [vmem:[#allocation3] sm:$0xff]
        %v1737 = vld [vmem:[#allocation3 + $0x8] sm:$0xff]
        %v1738 = vld [vmem:[#allocation3 + $0x10] sm:$0xff]
        %v1739 = vld [vmem:[#allocation3 + $0x18] sm:$0xff]
        %v1740 = vld [vmem:[#allocation3 + $0x20] sm:$0xff]
        %v1741 = vld [vmem:[#allocation3 + $0x28] sm:$0xff]
        %v1742 = vld [vmem:[#allocation3 + $0x30] sm:$0xff]
        %v1743 = vld [vmem:[#allocation3 + $0x38] sm:$0xff]
        %v1744 = vld [vmem:[#allocation3 + $0x40] sm:$0xff]
        %v1745 = vld [vmem:[#allocation3 + $0x48] sm:$0xff]
        %v1746 = vld [vmem:[#allocation3 + $0x50] sm:$0xff]
        %v1747 = vld [vmem:[#allocation3 + $0x58] sm:$0xff]
        %v1748 = vld [vmem:[#allocation3 + $0x60] sm:$0xff]
        %v1749 = vld [vmem:[#allocation3 + $0x68] sm:$0xff]
        %v1750 = vld [vmem:[#allocation3 + $0x70] sm:$0xff]
        %v1751 = vld [vmem:[#allocation3 + $0x78] sm:$0xff]
        %v1752 = vld [vmem:[#allocation3 + $0x80] sm:$0xff]
        %v1753 = vld [vmem:[#allocation3 + $0x88] sm:$0xff]
        %v1754 = vld [vmem:[#allocation3 + $0x90] sm:$0xff]
        %v1755 = vld [vmem:[#allocation3 + $0x98] sm:$0xff]
        %v1756 = vld [vmem:[#allocation3 + $0xa0] sm:$0xff]
        %v1757 = vld [vmem:[#allocation3 + $0xa8] sm:$0xff]
        %v1758 = vld [vmem:[#allocation3 + $0xb0] sm:$0xff]
        %v1759 = vld [vmem:[#allocation3 + $0xb8] sm:$0xff]
        %v1760 = vld [vmem:[#allocation3 + $0xc0] sm:$0xff]
        %v1761 = vld [vmem:[#allocation3 + $0xc8] sm:$0xff]
        %v1762 = vld [vmem:[#allocation3 + $0xd0] sm:$0xff]
        %v1763 = vld [vmem:[#allocation3 + $0xd8] sm:$0xff]
        %v1764 = vld [vmem:[#allocation3 + $0xe0] sm:$0xff]
        %v1765 = vld [vmem:[#allocation3 + $0xe8] sm:$0xff]
        %v1766 = vld [vmem:[#allocation3 + $0xf0] sm:$0xff]
        %v1767 = vld [vmem:[#allocation3 + $0xf8] sm:$0xff]
        %v1768 = vld [vmem:[#allocation3 + $0x100] sm:$0xff]
        %v1769 = vld [vmem:[#allocation3 + $0x108] sm:$0xff]
        %v1770 = vld [vmem:[#allocation3 + $0x110] sm:$0xff]
        %v1771 = vld [vmem:[#allocation3 + $0x118] sm:$0xff]
        %v1772 = vld [vmem:[#allocation3 + $0x120] sm:$0xff]
        %v1773 = vld [vmem:[#allocation3 + $0x128] sm:$0xff]
        %v1774 = vld [vmem:[#allocation3 + $0x130] sm:$0xff]
        %v1775 = vld [vmem:[#allocation3 + $0x138] sm:$0xff]
        %v1776 = vld [vmem:[#allocation3 + $0x140] sm:$0xff]
        %v1777 = vld [vmem:[#allocation3 + $0x148] sm:$0xff]
        %v1778 = vld [vmem:[#allocation3 + $0x150] sm:$0xff]
        %v1779 = vld [vmem:[#allocation3 + $0x158] sm:$0xff]
        %v1780 = vld [vmem:[#allocation3 + $0x160] sm:$0xff]
        %v1781 = vld [vmem:[#allocation3 + $0x168] sm:$0xff]
        %v1782 = vld [vmem:[#allocation3 + $0x170] sm:$0xff]
        %v1783 = vld [vmem:[#allocation3 + $0x178] sm:$0xff]
        %v1784 = vld [vmem:[#allocation3 + $0x180] sm:$0xff]
        %v1785 = vld [vmem:[#allocation3 + $0x188] sm:$0xff]
        %v1786 = vld [vmem:[#allocation3 + $0x190] sm:$0xff]
        %v1787 = vld [vmem:[#allocation3 + $0x198] sm:$0xff]
        %v1788 = vld [vmem:[#allocation3 + $0x1a0] sm:$0xff]
        %v1789 = vld [vmem:[#allocation3 + $0x1a8] sm:$0xff]
        %v1790 = vld [vmem:[#allocation3 + $0x1b0] sm:$0xff]
        %v1791 = vld [vmem:[#allocation3 + $0x1b8] sm:$0xff]
        %v1792 = vld [vmem:[#allocation3 + $0x1c0] sm:$0xff]
        %v1793 = vld [vmem:[#allocation3 + $0x1c8] sm:$0xff]
        %v1794 = vld [vmem:[#allocation3 + $0x1d0] sm:$0xff]
        %v1795 = vld [vmem:[#allocation3 + $0x1d8] sm:$0xff]
        %v1796 = vld [vmem:[#allocation3 + $0x1e0] sm:$0xff]
        %v1797 = vld [vmem:[#allocation3 + $0x1e8] sm:$0xff]
        %v1798 = vld [vmem:[#allocation3 + $0x1f0] sm:$0xff]
        %v1799 = vld [vmem:[#allocation3 + $0x1f8] sm:$0xff]
        %1800 = vmatprep.subr.mxu0 %v1797
        %1801 = vmatpush1.msra.mxu0 %v1796
        %1802 = vmatprep.subr.mxu0 %v1793
        %1803 = vmatpush1.msra.mxu0 %v1792
        %1804 = vmatprep.subr.mxu0 %v1789
        %1805 = vmatpush1.msra.mxu0 %v1788
        %1806 = vmatprep.subr.mxu0 %v1785
        %1807 = vmatpush1.msra.mxu0 %v1784
        %1808 = vmatprep.subr.mxu0 %v1781
        %1809 = vmatpush1.msra.mxu0 %v1780
        %1810 = vmatprep.subr.mxu0 %v1777
        %1811 = vmatpush1.msra.mxu0 %v1776
        %1812 = vmatprep.subr.mxu0 %v1773
        %1813 = vmatpush1.msra.mxu0 %v1772
        %1814 = vmatprep.subr.mxu0 %v1769
        %1815 = vmatpush1.msra.mxu0 %v1768
        %1816 = vmatprep.subr.mxu0 %v1765
        %1817 = vmatpush1.msra.mxu0 %v1764
        %1818 = vmatprep.subr.mxu0 %v1761
        %1819 = vmatpush1.msra.mxu0 %v1760
        %1820 = vmatprep.subr.mxu0 %v1757
        %1821 = vmatpush1.msra.mxu0 %v1756
        %1822 = vmatprep.subr.mxu0 %v1753
        %1823 = vmatpush1.msra.mxu0 %v1752
        %1824 = vmatprep.subr.mxu0 %v1749
        %1825 = vmatpush1.msra.mxu0 %v1748
        %1826 = vmatprep.subr.mxu0 %v1745
        %1827 = vmatpush1.msra.mxu0 %v1744
        %1828 = vmatprep.subr.mxu0 %v1741
        %1829 = vmatpush1.msra.mxu0 %v1740
        %1830 = vmatprep.subr.mxu0 %v1737
        %1831 = vmatpush1.msra.mxu0 %v1736
        %1832 = vmatprep.subr.mxu0 0.0
        %1833 = vmatpush2.msra.mxu0 0.0
        %1834 = vmatprep.subr.mxu0 0.0
        %1835 = vmatpush2.msra.mxu0 0.0
        %1836 = vmatprep.subr.mxu0 0.0
        %1837 = vmatpush2.msra.mxu0 0.0
        %1838 = vmatprep.subr.mxu0 0.0
        %1839 = vmatpush2.msra.mxu0 0.0
        %1840 = vmatprep.subr.mxu0 0.0
        %1841 = vmatpush2.msra.mxu0 0.0
        %1842 = vmatprep.subr.mxu0 0.0
        %1843 = vmatpush2.msra.mxu0 0.0
        %1844 = vmatprep.subr.mxu0 0.0
        %1845 = vmatpush2.msra.mxu0 0.0
        %1846 = vmatprep.subr.mxu0 0.0
        %1847 = vmatpush2.msra.mxu0 0.0
        %1848 = vmatprep.subr.mxu0 0.0
        %1849 = vmatpush2.msra.mxu0 0.0
        %1850 = vmatprep.subr.mxu0 0.0
        %1851 = vmatpush2.msra.mxu0 0.0
        %1852 = vmatprep.subr.mxu0 0.0
        %1853 = vmatpush2.msra.mxu0 0.0
        %1854 = vmatprep.subr.mxu0 0.0
        %1855 = vmatpush2.msra.mxu0 0.0
        %1856 = vmatprep.subr.mxu0 0.0
        %1857 = vmatpush2.msra.mxu0 0.0
        %1858 = vmatprep.subr.mxu0 0.0
        %1859 = vmatpush2.msra.mxu0 0.0
        %1860 = vmatprep.subr.mxu0 0.0
        %1861 = vmatpush2.msra.mxu0 0.0
        %1862 = vmatprep.subr.mxu0 0.0
        %1863 = vmatpush2.msra.mxu0 0.0
        %1864 = vmatprep.mubr.f32.mxu0 0.0
        %1865 = vmatmul.mubr.f32.gmra.mxu0 %v1727
        %v1866 = vpop.f32.mrf.mxu0
        %v1867 = vadd.f32 0.0, %v1866
        %v1868 = vpop.f32.mrf.mxu0
        %v1869 = vadd.f32 0.0, %v1868
        %1870 = vdwg.mxu0
        %1871 = vmatprep.subr.mxu0 %v1799
        %1872 = vmatpush1.msra.mxu0 %v1798
        %1873 = vmatprep.subr.mxu0 %v1795
        %1874 = vmatpush1.msra.mxu0 %v1794
        %1875 = vmatprep.subr.mxu0 %v1791
        %1876 = vmatpush1.msra.mxu0 %v1790
        %1877 = vmatprep.subr.mxu0 %v1787
        %1878 = vmatpush1.msra.mxu0 %v1786
        %1879 = vmatprep.subr.mxu0 %v1783
        %1880 = vmatpush1.msra.mxu0 %v1782
        %1881 = vmatprep.subr.mxu0 %v1779
        %1882 = vmatpush1.msra.mxu0 %v1778
        %1883 = vmatprep.subr.mxu0 %v1775
        %1884 = vmatpush1.msra.mxu0 %v1774
        %1885 = vmatprep.subr.mxu0 %v1771
        %1886 = vmatpush1.msra.mxu0 %v1770
        %1887 = vmatprep.subr.mxu0 %v1767
        %1888 = vmatpush1.msra.mxu0 %v1766
        %1889 = vmatprep.subr.mxu0 %v1763
        %1890 = vmatpush1.msra.mxu0 %v1762
        %1891 = vmatprep.subr.mxu0 %v1759
        %1892 = vmatpush1.msra.mxu0 %v1758
        %1893 = vmatprep.subr.mxu0 %v1755
        %1894 = vmatpush1.msra.mxu0 %v1754
        %1895 = vmatprep.subr.mxu0 %v1751
        %1896 = vmatpush1.msra.mxu0 %v1750
        %1897 = vmatprep.subr.mxu0 %v1747
        %1898 = vmatpush1.msra.mxu0 %v1746
        %1899 = vmatprep.subr.mxu0 %v1743
        %1900 = vmatpush1.msra.mxu0 %v1742
        %1901 = vmatprep.subr.mxu0 %v1739
        %1902 = vmatpush1.msra.mxu0 %v1738
        %1903 = vmatprep.subr.mxu0 0.0
        %1904 = vmatpush2.msra.mxu0 0.0
        %1905 = vmatprep.subr.mxu0 0.0
        %1906 = vmatpush2.msra.mxu0 0.0
        %1907 = vmatprep.subr.mxu0 0.0
        %1908 = vmatpush2.msra.mxu0 0.0
        %1909 = vmatprep.subr.mxu0 0.0
        %1910 = vmatpush2.msra.mxu0 0.0
        %1911 = vmatprep.subr.mxu0 0.0
        %1912 = vmatpush2.msra.mxu0 0.0
        %1913 = vmatprep.subr.mxu0 0.0
        %1914 = vmatpush2.msra.mxu0 0.0
        %1915 = vmatprep.subr.mxu0 0.0
        %1916 = vmatpush2.msra.mxu0 0.0
        %1917 = vmatprep.subr.mxu0 0.0
        %1918 = vmatpush2.msra.mxu0 0.0
        %1919 = vmatprep.subr.mxu0 0.0
        %1920 = vmatpush2.msra.mxu0 0.0
        %1921 = vmatprep.subr.mxu0 0.0
        %1922 = vmatpush2.msra.mxu0 0.0
        %1923 = vmatprep.subr.mxu0 0.0
        %1924 = vmatpush2.msra.mxu0 0.0
        %1925 = vmatprep.subr.mxu0 0.0
        %1926 = vmatpush2.msra.mxu0 0.0
        %1927 = vmatprep.subr.mxu0 0.0
        %1928 = vmatpush2.msra.mxu0 0.0
        %1929 = vmatprep.subr.mxu0 0.0
        %1930 = vmatpush2.msra.mxu0 0.0
        %1931 = vmatprep.subr.mxu0 0.0
        %1932 = vmatpush2.msra.mxu0 0.0
        %1933 = vmatprep.subr.mxu0 0.0
        %1934 = vmatpush2.msra.mxu0 0.0
        %1935 = vmatprep.mubr.f32.mxu0 0.0
        %1936 = vmatmul.mubr.f32.gmra.mxu0 %v1727
        %v1937 = vpop.f32.mrf.mxu0
        %v1938 = vadd.f32 0.0, %v1937
        %v1939 = vpop.f32.mrf.mxu0
        %v1940 = vadd.f32 0.0, %v1939
        %1941 = vdwg.mxu0
        %v1942 = vadd.f32 %v1732, %v1867
        %v1943 = vadd.f32 %v1733, %v1869
        %v1944 = vadd.f32 %v1734, %v1938
        %v1945 = vadd.f32 %v1735, %v1940
        %v1946 = vxor.u32 %v1942, 2147483648
        %v1947 = vmul.f32 %v1946, 1.442695
        %v1948 = vpow.pop %v1947
        %v1949 = vadd.f32 %v1948, 1.0
        %v1950 = vrcp.pop %v1949
        %v1951 = vmul.f32 1.0, %v1950
        %v1952 = vxor.u32 %v1943, 2147483648
        %v1953 = vmul.f32 %v1952, 1.442695
        %v1954 = vpow.pop %v1953
        %v1955 = vadd.f32 %v1954, 1.0
        %v1956 = vrcp.pop %v1955
        %v1957 = vmul.f32 1.0, %v1956
        %v1958 = vtanh.pop %v1944
        %v1959 = vxor.u32 %v1945, 2147483648
        %v1960 = vmul.f32 %v1959, 1.442695
        %v1961 = vpow.pop %v1960
        %v1962 = vadd.f32 %v1961, 1.0
        %v1963 = vrcp.pop %v1962
        %v1964 = vmul.f32 1.0, %v1963
        %v1965 = vmul.f32 %v1957, %v1728
        %v1966 = vmul.f32 %v1951, %v1958
        %v1967 = vadd.f32 %v1965, %v1966
        %v1968 = vtanh.pop %v1967
        %v1969 = vmul.f32 %v1964, %v1968
        %s1970 = scalar_lea.vmem [#allocation8], 24
        %1971 = vst [vmem:[%s1970] sm:$0xff] %v1969
        %s1972 = sadd.s32 %s1216, 3
        %p1973 = scmp.lt.s32.totalorder %s1972, 20
        // Predicated region
        $region224: #{char_lstm_forward.1} parent=31 // pred_check
          %p1974 = pneg %p1973
        $region225: #{char_lstm_forward.1} parent=31 // pred_check_branch
          %1976 = sbr.rel (%p1974) target = $region227
        $region226: #{char_lstm_forward.1} parent=31 // pred_region
          %1977 = vst [vmem:[#allocation5] sm:$0xff] %v1969
          %1978 = vst [vmem:[#allocation6] sm:$0xff] %v1967
        $region227: #{char_lstm_forward.1} parent=31 // pred_fallthru
          _
        %v1979 = vld [vmem:[#allocation5] sm:$0xff]
        %v1980 = vld [vmem:[#allocation6] sm:$0xff]
        %s1981 = smul.u32 4, 4
        %s1982 = smul.addr %s1981, 8
        %s1983 = scalar_lea.vmem [#allocation7], %s1982
        %v1984 = vld [vmem:[%s1983] sm:$0xff]
        %v1985 = vld [vmem:[%s1983 + $0x8] sm:$0xff]
        %v1986 = vld [vmem:[%s1983 + $0x10] sm:$0xff]
        %v1987 = vld [vmem:[%s1983 + $0x18] sm:$0xff]
        %v1988 = vld [vmem:[#allocation3] sm:$0xff]
        %v1989 = vld [vmem:[#allocation3 + $0x8] sm:$0xff]
        %v1990 = vld [vmem:[#allocation3 + $0x10] sm:$0xff]
        %v1991 = vld [vmem:[#allocation3 + $0x18] sm:$0xff]
        %v1992 = vld [vmem:[#allocation3 + $0x20] sm:$0xff]
        %v1993 = vld [vmem:[#allocation3 + $0x28] sm:$0xff]
        %v1994 = vld [vmem:[#allocation3 + $0x30] sm:$0xff]
        %v1995 = vld [vmem:[#allocation3 + $0x38] sm:$0xff]
        %v1996 = vld [vmem:[#allocation3 + $0x40] sm:$0xff]
        %v1997 = vld [vmem:[#allocation3 + $0x48] sm:$0xff]
        %v1998 = vld [vmem:[#allocation3 + $0x50] sm:$0xff]
        %v1999 = vld [vmem:[#allocation3 + $0x58] sm:$0xff]
        %v2000 = vld [vmem:[#allocation3 + $0x60] sm:$0xff]
        %v2001 = vld [vmem:[#allocation3 + $0x68] sm:$0xff]
        %v2002 = vld [vmem:[#allocation3 + $0x70] sm:$0xff]
        %v2003 = vld [vmem:[#allocation3 + $0x78] sm:$0xff]
        %v2004 = vld [vmem:[#allocation3 + $0x80] sm:$0xff]
        %v2005 = vld [vmem:[#allocation3 + $0x88] sm:$0xff]
        %v2006 = vld [vmem:[#allocation3 + $0x90] sm:$0xff]
        %v2007 = vld [vmem:[#allocation3 + $0x98] sm:$0xff]
        %v2008 = vld [vmem:[#allocation3 + $0xa0] sm:$0xff]
        %v2009 = vld [vmem:[#allocation3 + $0xa8] sm:$0xff]
        %v2010 = vld [vmem:[#allocation3 + $0xb0] sm:$0xff]
        %v2011 = vld [vmem:[#allocation3 + $0xb8] sm:$0xff]
        %v2012 = vld [vmem:[#allocation3 + $0xc0] sm:$0xff]
        %v2013 = vld [vmem:[#allocation3 + $0xc8] sm:$0xff]
        %v2014 = vld [vmem:[#allocation3 + $0xd0] sm:$0xff]
        %v2015 = vld [vmem:[#allocation3 + $0xd8] sm:$0xff]
        %v2016 = vld [vmem:[#allocation3 + $0xe0] sm:$0xff]
        %v2017 = vld [vmem:[#allocation3 + $0xe8] sm:$0xff]
        %v2018 = vld [vmem:[#allocation3 + $0xf0] sm:$0xff]
        %v2019 = vld [vmem:[#allocation3 + $0xf8] sm:$0xff]
        %v2020 = vld [vmem:[#allocation3 + $0x100] sm:$0xff]
        %v2021 = vld [vmem:[#allocation3 + $0x108] sm:$0xff]
        %v2022 = vld [vmem:[#allocation3 + $0x110] sm:$0xff]
        %v2023 = vld [vmem:[#allocation3 + $0x118] sm:$0xff]
        %v2024 = vld [vmem:[#allocation3 + $0x120] sm:$0xff]
        %v2025 = vld [vmem:[#allocation3 + $0x128] sm:$0xff]
        %v2026 = vld [vmem:[#allocation3 + $0x130] sm:$0xff]
        %v2027 = vld [vmem:[#allocation3 + $0x138] sm:$0xff]
        %v2028 = vld [vmem:[#allocation3 + $0x140] sm:$0xff]
        %v2029 = vld [vmem:[#allocation3 + $0x148] sm:$0xff]
        %v2030 = vld [vmem:[#allocation3 + $0x150] sm:$0xff]
        %v2031 = vld [vmem:[#allocation3 + $0x158] sm:$0xff]
        %v2032 = vld [vmem:[#allocation3 + $0x160] sm:$0xff]
        %v2033 = vld [vmem:[#allocation3 + $0x168] sm:$0xff]
        %v2034 = vld [vmem:[#allocation3 + $0x170] sm:$0xff]
        %v2035 = vld [vmem:[#allocation3 + $0x178] sm:$0xff]
        %v2036 = vld [vmem:[#allocation3 + $0x180] sm:$0xff]
        %v2037 = vld [vmem:[#allocation3 + $0x188] sm:$0xff]
        %v2038 = vld [vmem:[#allocation3 + $0x190] sm:$0xff]
        %v2039 = vld [vmem:[#allocation3 + $0x198] sm:$0xff]
        %v2040 = vld [vmem:[#allocation3 + $0x1a0] sm:$0xff]
        %v2041 = vld [vmem:[#allocation3 + $0x1a8] sm:$0xff]
        %v2042 = vld [vmem:[#allocation3 + $0x1b0] sm:$0xff]
        %v2043 = vld [vmem:[#allocation3 + $0x1b8] sm:$0xff]
        %v2044 = vld [vmem:[#allocation3 + $0x1c0] sm:$0xff]
        %v2045 = vld [vmem:[#allocation3 + $0x1c8] sm:$0xff]
        %v2046 = vld [vmem:[#allocation3 + $0x1d0] sm:$0xff]
        %v2047 = vld [vmem:[#allocation3 + $0x1d8] sm:$0xff]
        %v2048 = vld [vmem:[#allocation3 + $0x1e0] sm:$0xff]
        %v2049 = vld [vmem:[#allocation3 + $0x1e8] sm:$0xff]
        %v2050 = vld [vmem:[#allocation3 + $0x1f0] sm:$0xff]
        %v2051 = vld [vmem:[#allocation3 + $0x1f8] sm:$0xff]
        %2052 = vmatprep.subr.mxu0 %v2049
        %2053 = vmatpush1.msra.mxu0 %v2048
        %2054 = vmatprep.subr.mxu0 %v2045
        %2055 = vmatpush1.msra.mxu0 %v2044
        %2056 = vmatprep.subr.mxu0 %v2041
        %2057 = vmatpush1.msra.mxu0 %v2040
        %2058 = vmatprep.subr.mxu0 %v2037
        %2059 = vmatpush1.msra.mxu0 %v2036
        %2060 = vmatprep.subr.mxu0 %v2033
        %2061 = vmatpush1.msra.mxu0 %v2032
        %2062 = vmatprep.subr.mxu0 %v2029
        %2063 = vmatpush1.msra.mxu0 %v2028
        %2064 = vmatprep.subr.mxu0 %v2025
        %2065 = vmatpush1.msra.mxu0 %v2024
        %2066 = vmatprep.subr.mxu0 %v2021
        %2067 = vmatpush1.msra.mxu0 %v2020
        %2068 = vmatprep.subr.mxu0 %v2017
        %2069 = vmatpush1.msra.mxu0 %v2016
        %2070 = vmatprep.subr.mxu0 %v2013
        %2071 = vmatpush1.msra.mxu0 %v2012
        %2072 = vmatprep.subr.mxu0 %v2009
        %2073 = vmatpush1.msra.mxu0 %v2008
        %2074 = vmatprep.subr.mxu0 %v2005
        %2075 = vmatpush1.msra.mxu0 %v2004
        %2076 = vmatprep.subr.mxu0 %v2001
        %2077 = vmatpush1.msra.mxu0 %v2000
        %2078 = vmatprep.subr.mxu0 %v1997
        %2079 = vmatpush1.msra.mxu0 %v1996
        %2080 = vmatprep.subr.mxu0 %v1993
        %2081 = vmatpush1.msra.mxu0 %v1992
        %2082 = vmatprep.subr.mxu0 %v1989
        %2083 = vmatpush1.msra.mxu0 %v1988
        %2084 = vmatprep.subr.mxu0 0.0
        %2085 = vmatpush2.msra.mxu0 0.0
        %2086 = vmatprep.subr.mxu0 0.0
        %2087 = vmatpush2.msra.mxu0 0.0
        %2088 = vmatprep.subr.mxu0 0.0
        %2089 = vmatpush2.msra.mxu0 0.0
        %2090 = vmatprep.subr.mxu0 0.0
        %2091 = vmatpush2.msra.mxu0 0.0
        %2092 = vmatprep.subr.mxu0 0.0
        %2093 = vmatpush2.msra.mxu0 0.0
        %2094 = vmatprep.subr.mxu0 0.0
        %2095 = vmatpush2.msra.mxu0 0.0
        %2096 = vmatprep.subr.mxu0 0.0
        %2097 = vmatpush2.msra.mxu0 0.0
        %2098 = vmatprep.subr.mxu0 0.0
        %2099 = vmatpush2.msra.mxu0 0.0
        %2100 = vmatprep.subr.mxu0 0.0
        %2101 = vmatpush2.msra.mxu0 0.0
        %2102 = vmatprep.subr.mxu0 0.0
        %2103 = vmatpush2.msra.mxu0 0.0
        %2104 = vmatprep.subr.mxu0 0.0
        %2105 = vmatpush2.msra.mxu0 0.0
        %2106 = vmatprep.subr.mxu0 0.0
        %2107 = vmatpush2.msra.mxu0 0.0
        %2108 = vmatprep.subr.mxu0 0.0
        %2109 = vmatpush2.msra.mxu0 0.0
        %2110 = vmatprep.subr.mxu0 0.0
        %2111 = vmatpush2.msra.mxu0 0.0
        %2112 = vmatprep.subr.mxu0 0.0
        %2113 = vmatpush2.msra.mxu0 0.0
        %2114 = vmatprep.subr.mxu0 0.0
        %2115 = vmatpush2.msra.mxu0 0.0
        %2116 = vmatprep.mubr.f32.mxu0 0.0
        %2117 = vmatmul.mubr.f32.gmra.mxu0 %v1979
        %v2118 = vpop.f32.mrf.mxu0
        %v2119 = vadd.f32 0.0, %v2118
        %v2120 = vpop.f32.mrf.mxu0
        %v2121 = vadd.f32 0.0, %v2120
        %2122 = vdwg.mxu0
        %2123 = vmatprep.subr.mxu0 %v2051
        %2124 = vmatpush1.msra.mxu0 %v2050
        %2125 = vmatprep.subr.mxu0 %v2047
        %2126 = vmatpush1.msra.mxu0 %v2046
        %2127 = vmatprep.subr.mxu0 %v2043
        %2128 = vmatpush1.msra.mxu0 %v2042
        %2129 = vmatprep.subr.mxu0 %v2039
        %2130 = vmatpush1.msra.mxu0 %v2038
        %2131 = vmatprep.subr.mxu0 %v2035
        %2132 = vmatpush1.msra.mxu0 %v2034
        %2133 = vmatprep.subr.mxu0 %v2031
        %2134 = vmatpush1.msra.mxu0 %v2030
        %2135 = vmatprep.subr.mxu0 %v2027
        %2136 = vmatpush1.msra.mxu0 %v2026
        %2137 = vmatprep.subr.mxu0 %v2023
        %2138 = vmatpush1.msra.mxu0 %v2022
        %2139 = vmatprep.subr.mxu0 %v2019
        %2140 = vmatpush1.msra.mxu0 %v2018
        %2141 = vmatprep.subr.mxu0 %v2015
        %2142 = vmatpush1.msra.mxu0 %v2014
        %2143 = vmatprep.subr.mxu0 %v2011
        %2144 = vmatpush1.msra.mxu0 %v2010
        %2145 = vmatprep.subr.mxu0 %v2007
        %2146 = vmatpush1.msra.mxu0 %v2006
        %2147 = vmatprep.subr.mxu0 %v2003
        %2148 = vmatpush1.msra.mxu0 %v2002
        %2149 = vmatprep.subr.mxu0 %v1999
        %2150 = vmatpush1.msra.mxu0 %v1998
        %2151 = vmatprep.subr.mxu0 %v1995
        %2152 = vmatpush1.msra.mxu0 %v1994
        %2153 = vmatprep.subr.mxu0 %v1991
        %2154 = vmatpush1.msra.mxu0 %v1990
        %2155 = vmatprep.subr.mxu0 0.0
        %2156 = vmatpush2.msra.mxu0 0.0
        %2157 = vmatprep.subr.mxu0 0.0
        %2158 = vmatpush2.msra.mxu0 0.0
        %2159 = vmatprep.subr.mxu0 0.0
        %2160 = vmatpush2.msra.mxu0 0.0
        %2161 = vmatprep.subr.mxu0 0.0
        %2162 = vmatpush2.msra.mxu0 0.0
        %2163 = vmatprep.subr.mxu0 0.0
        %2164 = vmatpush2.msra.mxu0 0.0
        %2165 = vmatprep.subr.mxu0 0.0
        %2166 = vmatpush2.msra.mxu0 0.0
        %2167 = vmatprep.subr.mxu0 0.0
        %2168 = vmatpush2.msra.mxu0 0.0
        %2169 = vmatprep.subr.mxu0 0.0
        %2170 = vmatpush2.msra.mxu0 0.0
        %2171 = vmatprep.subr.mxu0 0.0
        %2172 = vmatpush2.msra.mxu0 0.0
        %2173 = vmatprep.subr.mxu0 0.0
        %2174 = vmatpush2.msra.mxu0 0.0
        %2175 = vmatprep.subr.mxu0 0.0
        %2176 = vmatpush2.msra.mxu0 0.0
        %2177 = vmatprep.subr.mxu0 0.0
        %2178 = vmatpush2.msra.mxu0 0.0
        %2179 = vmatprep.subr.mxu0 0.0
        %2180 = vmatpush2.msra.mxu0 0.0
        %2181 = vmatprep.subr.mxu0 0.0
        %2182 = vmatpush2.msra.mxu0 0.0
        %2183 = vmatprep.subr.mxu0 0.0
        %2184 = vmatpush2.msra.mxu0 0.0
        %2185 = vmatprep.subr.mxu0 0.0
        %2186 = vmatpush2.msra.mxu0 0.0
        %2187 = vmatprep.mubr.f32.mxu0 0.0
        %2188 = vmatmul.mubr.f32.gmra.mxu0 %v1979
        %v2189 = vpop.f32.mrf.mxu0
        %v2190 = vadd.f32 0.0, %v2189
        %v2191 = vpop.f32.mrf.mxu0
        %v2192 = vadd.f32 0.0, %v2191
        %2193 = vdwg.mxu0
        %v2194 = vadd.f32 %v1984, %v2119
        %v2195 = vadd.f32 %v1985, %v2121
        %v2196 = vadd.f32 %v1986, %v2190
        %v2197 = vadd.f32 %v1987, %v2192
        %v2198 = vxor.u32 %v2194, 2147483648
        %v2199 = vmul.f32 %v2198, 1.442695
        %v2200 = vpow.pop %v2199
        %v2201 = vadd.f32 %v2200, 1.0
        %v2202 = vrcp.pop %v2201
        %v2203 = vmul.f32 1.0, %v2202
        %v2204 = vxor.u32 %v2195, 2147483648
        %v2205 = vmul.f32 %v2204, 1.442695
        %v2206 = vpow.pop %v2205
        %v2207 = vadd.f32 %v2206, 1.0
        %v2208 = vrcp.pop %v2207
        %v2209 = vmul.f32 1.0, %v2208
        %v2210 = vtanh.pop %v2196
        %v2211 = vxor.u32 %v2197, 2147483648
        %v2212 = vmul.f32 %v2211, 1.442695
        %v2213 = vpow.pop %v2212
        %v2214 = vadd.f32 %v2213, 1.0
        %v2215 = vrcp.pop %v2214
        %v2216 = vmul.f32 1.0, %v2215
        %v2217 = vmul.f32 %v2209, %v1980
        %v2218 = vmul.f32 %v2203, %v2210
        %v2219 = vadd.f32 %v2217, %v2218
        %v2220 = vtanh.pop %v2219
        %v2221 = vmul.f32 %v2216, %v2220
        %s2222 = scalar_lea.vmem [#allocation8], 32
        %2223 = vst [vmem:[%s2222] sm:$0xff] %v2221
        %s2224 = sadd.s32 %s1216, 4
        %p2225 = scmp.lt.s32.totalorder %s2224, 20
        // Predicated region
        $region228: #{char_lstm_forward.1} parent=31 // pred_check
          %p2226 = pneg %p2225
        $region229: #{char_lstm_forward.1} parent=31 // pred_check_branch
          %2228 = sbr.rel (%p2226) target = $region231
        $region230: #{char_lstm_forward.1} parent=31 // pred_region
          %2229 = vst [vmem:[#allocation5] sm:$0xff] %v2221
          %2230 = vst [vmem:[#allocation6] sm:$0xff] %v2219
        $region231: #{char_lstm_forward.1} parent=31 // pred_fallthru
          _
        %v2231 = vld [vmem:[#allocation5] sm:$0xff]
        %v2232 = vld [vmem:[#allocation6] sm:$0xff]
        %s2233 = smul.u32 5, 4
        %s2234 = smul.addr %s2233, 8
        %s2235 = scalar_lea.vmem [#allocation7], %s2234
        %v2236 = vld [vmem:[%s2235] sm:$0xff]
        %v2237 = vld [vmem:[%s2235 + $0x8] sm:$0xff]
        %v2238 = vld [vmem:[%s2235 + $0x10] sm:$0xff]
        %v2239 = vld [vmem:[%s2235 + $0x18] sm:$0xff]
        %v2240 = vld [vmem:[#allocation3] sm:$0xff]
        %v2241 = vld [vmem:[#allocation3 + $0x8] sm:$0xff]
        %v2242 = vld [vmem:[#allocation3 + $0x10] sm:$0xff]
        %v2243 = vld [vmem:[#allocation3 + $0x18] sm:$0xff]
        %v2244 = vld [vmem:[#allocation3 + $0x20] sm:$0xff]
        %v2245 = vld [vmem:[#allocation3 + $0x28] sm:$0xff]
        %v2246 = vld [vmem:[#allocation3 + $0x30] sm:$0xff]
        %v2247 = vld [vmem:[#allocation3 + $0x38] sm:$0xff]
        %v2248 = vld [vmem:[#allocation3 + $0x40] sm:$0xff]
        %v2249 = vld [vmem:[#allocation3 + $0x48] sm:$0xff]
        %v2250 = vld [vmem:[#allocation3 + $0x50] sm:$0xff]
        %v2251 = vld [vmem:[#allocation3 + $0x58] sm:$0xff]
        %v2252 = vld [vmem:[#allocation3 + $0x60] sm:$0xff]
        %v2253 = vld [vmem:[#allocation3 + $0x68] sm:$0xff]
        %v2254 = vld [vmem:[#allocation3 + $0x70] sm:$0xff]
        %v2255 = vld [vmem:[#allocation3 + $0x78] sm:$0xff]
        %v2256 = vld [vmem:[#allocation3 + $0x80] sm:$0xff]
        %v2257 = vld [vmem:[#allocation3 + $0x88] sm:$0xff]
        %v2258 = vld [vmem:[#allocation3 + $0x90] sm:$0xff]
        %v2259 = vld [vmem:[#allocation3 + $0x98] sm:$0xff]
        %v2260 = vld [vmem:[#allocation3 + $0xa0] sm:$0xff]
        %v2261 = vld [vmem:[#allocation3 + $0xa8] sm:$0xff]
        %v2262 = vld [vmem:[#allocation3 + $0xb0] sm:$0xff]
        %v2263 = vld [vmem:[#allocation3 + $0xb8] sm:$0xff]
        %v2264 = vld [vmem:[#allocation3 + $0xc0] sm:$0xff]
        %v2265 = vld [vmem:[#allocation3 + $0xc8] sm:$0xff]
        %v2266 = vld [vmem:[#allocation3 + $0xd0] sm:$0xff]
        %v2267 = vld [vmem:[#allocation3 + $0xd8] sm:$0xff]
        %v2268 = vld [vmem:[#allocation3 + $0xe0] sm:$0xff]
        %v2269 = vld [vmem:[#allocation3 + $0xe8] sm:$0xff]
        %v2270 = vld [vmem:[#allocation3 + $0xf0] sm:$0xff]
        %v2271 = vld [vmem:[#allocation3 + $0xf8] sm:$0xff]
        %v2272 = vld [vmem:[#allocation3 + $0x100] sm:$0xff]
        %v2273 = vld [vmem:[#allocation3 + $0x108] sm:$0xff]
        %v2274 = vld [vmem:[#allocation3 + $0x110] sm:$0xff]
        %v2275 = vld [vmem:[#allocation3 + $0x118] sm:$0xff]
        %v2276 = vld [vmem:[#allocation3 + $0x120] sm:$0xff]
        %v2277 = vld [vmem:[#allocation3 + $0x128] sm:$0xff]
        %v2278 = vld [vmem:[#allocation3 + $0x130] sm:$0xff]
        %v2279 = vld [vmem:[#allocation3 + $0x138] sm:$0xff]
        %v2280 = vld [vmem:[#allocation3 + $0x140] sm:$0xff]
        %v2281 = vld [vmem:[#allocation3 + $0x148] sm:$0xff]
        %v2282 = vld [vmem:[#allocation3 + $0x150] sm:$0xff]
        %v2283 = vld [vmem:[#allocation3 + $0x158] sm:$0xff]
        %v2284 = vld [vmem:[#allocation3 + $0x160] sm:$0xff]
        %v2285 = vld [vmem:[#allocation3 + $0x168] sm:$0xff]
        %v2286 = vld [vmem:[#allocation3 + $0x170] sm:$0xff]
        %v2287 = vld [vmem:[#allocation3 + $0x178] sm:$0xff]
        %v2288 = vld [vmem:[#allocation3 + $0x180] sm:$0xff]
        %v2289 = vld [vmem:[#allocation3 + $0x188] sm:$0xff]
        %v2290 = vld [vmem:[#allocation3 + $0x190] sm:$0xff]
        %v2291 = vld [vmem:[#allocation3 + $0x198] sm:$0xff]
        %v2292 = vld [vmem:[#allocation3 + $0x1a0] sm:$0xff]
        %v2293 = vld [vmem:[#allocation3 + $0x1a8] sm:$0xff]
        %v2294 = vld [vmem:[#allocation3 + $0x1b0] sm:$0xff]
        %v2295 = vld [vmem:[#allocation3 + $0x1b8] sm:$0xff]
        %v2296 = vld [vmem:[#allocation3 + $0x1c0] sm:$0xff]
        %v2297 = vld [vmem:[#allocation3 + $0x1c8] sm:$0xff]
        %v2298 = vld [vmem:[#allocation3 + $0x1d0] sm:$0xff]
        %v2299 = vld [vmem:[#allocation3 + $0x1d8] sm:$0xff]
        %v2300 = vld [vmem:[#allocation3 + $0x1e0] sm:$0xff]
        %v2301 = vld [vmem:[#allocation3 + $0x1e8] sm:$0xff]
        %v2302 = vld [vmem:[#allocation3 + $0x1f0] sm:$0xff]
        %v2303 = vld [vmem:[#allocation3 + $0x1f8] sm:$0xff]
        %2304 = vmatprep.subr.mxu0 %v2301
        %2305 = vmatpush1.msra.mxu0 %v2300
        %2306 = vmatprep.subr.mxu0 %v2297
        %2307 = vmatpush1.msra.mxu0 %v2296
        %2308 = vmatprep.subr.mxu0 %v2293
        %2309 = vmatpush1.msra.mxu0 %v2292
        %2310 = vmatprep.subr.mxu0 %v2289
        %2311 = vmatpush1.msra.mxu0 %v2288
        %2312 = vmatprep.subr.mxu0 %v2285
        %2313 = vmatpush1.msra.mxu0 %v2284
        %2314 = vmatprep.subr.mxu0 %v2281
        %2315 = vmatpush1.msra.mxu0 %v2280
        %2316 = vmatprep.subr.mxu0 %v2277
        %2317 = vmatpush1.msra.mxu0 %v2276
        %2318 = vmatprep.subr.mxu0 %v2273
        %2319 = vmatpush1.msra.mxu0 %v2272
        %2320 = vmatprep.subr.mxu0 %v2269
        %2321 = vmatpush1.msra.mxu0 %v2268
        %2322 = vmatprep.subr.mxu0 %v2265
        %2323 = vmatpush1.msra.mxu0 %v2264
        %2324 = vmatprep.subr.mxu0 %v2261
        %2325 = vmatpush1.msra.mxu0 %v2260
        %2326 = vmatprep.subr.mxu0 %v2257
        %2327 = vmatpush1.msra.mxu0 %v2256
        %2328 = vmatprep.subr.mxu0 %v2253
        %2329 = vmatpush1.msra.mxu0 %v2252
        %2330 = vmatprep.subr.mxu0 %v2249
        %2331 = vmatpush1.msra.mxu0 %v2248
        %2332 = vmatprep.subr.mxu0 %v2245
        %2333 = vmatpush1.msra.mxu0 %v2244
        %2334 = vmatprep.subr.mxu0 %v2241
        %2335 = vmatpush1.msra.mxu0 %v2240
        %2336 = vmatprep.subr.mxu0 0.0
        %2337 = vmatpush2.msra.mxu0 0.0
        %2338 = vmatprep.subr.mxu0 0.0
        %2339 = vmatpush2.msra.mxu0 0.0
        %2340 = vmatprep.subr.mxu0 0.0
        %2341 = vmatpush2.msra.mxu0 0.0
        %2342 = vmatprep.subr.mxu0 0.0
        %2343 = vmatpush2.msra.mxu0 0.0
        %2344 = vmatprep.subr.mxu0 0.0
        %2345 = vmatpush2.msra.mxu0 0.0
        %2346 = vmatprep.subr.mxu0 0.0
        %2347 = vmatpush2.msra.mxu0 0.0
        %2348 = vmatprep.subr.mxu0 0.0
        %2349 = vmatpush2.msra.mxu0 0.0
        %2350 = vmatprep.subr.mxu0 0.0
        %2351 = vmatpush2.msra.mxu0 0.0
        %2352 = vmatprep.subr.mxu0 0.0
        %2353 = vmatpush2.msra.mxu0 0.0
        %2354 = vmatprep.subr.mxu0 0.0
        %2355 = vmatpush2.msra.mxu0 0.0
        %2356 = vmatprep.subr.mxu0 0.0
        %2357 = vmatpush2.msra.mxu0 0.0
        %2358 = vmatprep.subr.mxu0 0.0
        %2359 = vmatpush2.msra.mxu0 0.0
        %2360 = vmatprep.subr.mxu0 0.0
        %2361 = vmatpush2.msra.mxu0 0.0
        %2362 = vmatprep.subr.mxu0 0.0
        %2363 = vmatpush2.msra.mxu0 0.0
        %2364 = vmatprep.subr.mxu0 0.0
        %2365 = vmatpush2.msra.mxu0 0.0
        %2366 = vmatprep.subr.mxu0 0.0
        %2367 = vmatpush2.msra.mxu0 0.0
        %2368 = vmatprep.mubr.f32.mxu0 0.0
        %2369 = vmatmul.mubr.f32.gmra.mxu0 %v2231
        %v2370 = vpop.f32.mrf.mxu0
        %v2371 = vadd.f32 0.0, %v2370
        %v2372 = vpop.f32.mrf.mxu0
        %v2373 = vadd.f32 0.0, %v2372
        %2374 = vdwg.mxu0
        %2375 = vmatprep.subr.mxu0 %v2303
        %2376 = vmatpush1.msra.mxu0 %v2302
        %2377 = vmatprep.subr.mxu0 %v2299
        %2378 = vmatpush1.msra.mxu0 %v2298
        %2379 = vmatprep.subr.mxu0 %v2295
        %2380 = vmatpush1.msra.mxu0 %v2294
        %2381 = vmatprep.subr.mxu0 %v2291
        %2382 = vmatpush1.msra.mxu0 %v2290
        %2383 = vmatprep.subr.mxu0 %v2287
        %2384 = vmatpush1.msra.mxu0 %v2286
        %2385 = vmatprep.subr.mxu0 %v2283
        %2386 = vmatpush1.msra.mxu0 %v2282
        %2387 = vmatprep.subr.mxu0 %v2279
        %2388 = vmatpush1.msra.mxu0 %v2278
        %2389 = vmatprep.subr.mxu0 %v2275
        %2390 = vmatpush1.msra.mxu0 %v2274
        %2391 = vmatprep.subr.mxu0 %v2271
        %2392 = vmatpush1.msra.mxu0 %v2270
        %2393 = vmatprep.subr.mxu0 %v2267
        %2394 = vmatpush1.msra.mxu0 %v2266
        %2395 = vmatprep.subr.mxu0 %v2263
        %2396 = vmatpush1.msra.mxu0 %v2262
        %2397 = vmatprep.subr.mxu0 %v2259
        %2398 = vmatpush1.msra.mxu0 %v2258
        %2399 = vmatprep.subr.mxu0 %v2255
        %2400 = vmatpush1.msra.mxu0 %v2254
        %2401 = vmatprep.subr.mxu0 %v2251
        %2402 = vmatpush1.msra.mxu0 %v2250
        %2403 = vmatprep.subr.mxu0 %v2247
        %2404 = vmatpush1.msra.mxu0 %v2246
        %2405 = vmatprep.subr.mxu0 %v2243
        %2406 = vmatpush1.msra.mxu0 %v2242
        %2407 = vmatprep.subr.mxu0 0.0
        %2408 = vmatpush2.msra.mxu0 0.0
        %2409 = vmatprep.subr.mxu0 0.0
        %2410 = vmatpush2.msra.mxu0 0.0
        %2411 = vmatprep.subr.mxu0 0.0
        %2412 = vmatpush2.msra.mxu0 0.0
        %2413 = vmatprep.subr.mxu0 0.0
        %2414 = vmatpush2.msra.mxu0 0.0
        %2415 = vmatprep.subr.mxu0 0.0
        %2416 = vmatpush2.msra.mxu0 0.0
        %2417 = vmatprep.subr.mxu0 0.0
        %2418 = vmatpush2.msra.mxu0 0.0
        %2419 = vmatprep.subr.mxu0 0.0
        %2420 = vmatpush2.msra.mxu0 0.0
        %2421 = vmatprep.subr.mxu0 0.0
        %2422 = vmatpush2.msra.mxu0 0.0
        %2423 = vmatprep.subr.mxu0 0.0
        %2424 = vmatpush2.msra.mxu0 0.0
        %2425 = vmatprep.subr.mxu0 0.0
        %2426 = vmatpush2.msra.mxu0 0.0
        %2427 = vmatprep.subr.mxu0 0.0
        %2428 = vmatpush2.msra.mxu0 0.0
        %2429 = vmatprep.subr.mxu0 0.0
        %2430 = vmatpush2.msra.mxu0 0.0
        %2431 = vmatprep.subr.mxu0 0.0
        %2432 = vmatpush2.msra.mxu0 0.0
        %2433 = vmatprep.subr.mxu0 0.0
        %2434 = vmatpush2.msra.mxu0 0.0
        %2435 = vmatprep.subr.mxu0 0.0
        %2436 = vmatpush2.msra.mxu0 0.0
        %2437 = vmatprep.subr.mxu0 0.0
        %2438 = vmatpush2.msra.mxu0 0.0
        %2439 = vmatprep.mubr.f32.mxu0 0.0
        %2440 = vmatmul.mubr.f32.gmra.mxu0 %v2231
        %v2441 = vpop.f32.mrf.mxu0
        %v2442 = vadd.f32 0.0, %v2441
        %v2443 = vpop.f32.mrf.mxu0
        %v2444 = vadd.f32 0.0, %v2443
        %2445 = vdwg.mxu0
        %v2446 = vadd.f32 %v2236, %v2371
        %v2447 = vadd.f32 %v2237, %v2373
        %v2448 = vadd.f32 %v2238, %v2442
        %v2449 = vadd.f32 %v2239, %v2444
        %v2450 = vxor.u32 %v2446, 2147483648
        %v2451 = vmul.f32 %v2450, 1.442695
        %v2452 = vpow.pop %v2451
        %v2453 = vadd.f32 %v2452, 1.0
        %v2454 = vrcp.pop %v2453
        %v2455 = vmul.f32 1.0, %v2454
        %v2456 = vxor.u32 %v2447, 2147483648
        %v2457 = vmul.f32 %v2456, 1.442695
        %v2458 = vpow.pop %v2457
        %v2459 = vadd.f32 %v2458, 1.0
        %v2460 = vrcp.pop %v2459
        %v2461 = vmul.f32 1.0, %v2460
        %v2462 = vtanh.pop %v2448
        %v2463 = vxor.u32 %v2449, 2147483648
        %v2464 = vmul.f32 %v2463, 1.442695
        %v2465 = vpow.pop %v2464
        %v2466 = vadd.f32 %v2465, 1.0
        %v2467 = vrcp.pop %v2466
        %v2468 = vmul.f32 1.0, %v2467
        %v2469 = vmul.f32 %v2461, %v2232
        %v2470 = vmul.f32 %v2455, %v2462
        %v2471 = vadd.f32 %v2469, %v2470
        %v2472 = vtanh.pop %v2471
        %v2473 = vmul.f32 %v2468, %v2472
        %s2474 = scalar_lea.vmem [#allocation8], 40
        %2475 = vst [vmem:[%s2474] sm:$0xff] %v2473
        %s2476 = sadd.s32 %s1216, 5
        %p2477 = scmp.lt.s32.totalorder %s2476, 20
        // Predicated region
        $region232: #{char_lstm_forward.1} parent=31 // pred_check
          %p2478 = pneg %p2477
        $region233: #{char_lstm_forward.1} parent=31 // pred_check_branch
          %2480 = sbr.rel (%p2478) target = $region235
        $region234: #{char_lstm_forward.1} parent=31 // pred_region
          %2481 = vst [vmem:[#allocation5] sm:$0xff] %v2473
          %2482 = vst [vmem:[#allocation6] sm:$0xff] %v2471
        $region235: #{char_lstm_forward.1} parent=31 // pred_fallthru
          _
        %v2483 = vld [vmem:[#allocation5] sm:$0xff]
        %v2484 = vld [vmem:[#allocation6] sm:$0xff]
        %s2485 = smul.u32 6, 4
        %s2486 = smul.addr %s2485, 8
        %s2487 = scalar_lea.vmem [#allocation7], %s2486
        %v2488 = vld [vmem:[%s2487] sm:$0xff]
        %v2489 = vld [vmem:[%s2487 + $0x8] sm:$0xff]
        %v2490 = vld [vmem:[%s2487 + $0x10] sm:$0xff]
        %v2491 = vld [vmem:[%s2487 + $0x18] sm:$0xff]
        %v2492 = vld [vmem:[#allocation3] sm:$0xff]
        %v2493 = vld [vmem:[#allocation3 + $0x8] sm:$0xff]
        %v2494 = vld [vmem:[#allocation3 + $0x10] sm:$0xff]
        %v2495 = vld [vmem:[#allocation3 + $0x18] sm:$0xff]
        %v2496 = vld [vmem:[#allocation3 + $0x20] sm:$0xff]
        %v2497 = vld [vmem:[#allocation3 + $0x28] sm:$0xff]
        %v2498 = vld [vmem:[#allocation3 + $0x30] sm:$0xff]
        %v2499 = vld [vmem:[#allocation3 + $0x38] sm:$0xff]
        %v2500 = vld [vmem:[#allocation3 + $0x40] sm:$0xff]
        %v2501 = vld [vmem:[#allocation3 + $0x48] sm:$0xff]
        %v2502 = vld [vmem:[#allocation3 + $0x50] sm:$0xff]
        %v2503 = vld [vmem:[#allocation3 + $0x58] sm:$0xff]
        %v2504 = vld [vmem:[#allocation3 + $0x60] sm:$0xff]
        %v2505 = vld [vmem:[#allocation3 + $0x68] sm:$0xff]
        %v2506 = vld [vmem:[#allocation3 + $0x70] sm:$0xff]
        %v2507 = vld [vmem:[#allocation3 + $0x78] sm:$0xff]
        %v2508 = vld [vmem:[#allocation3 + $0x80] sm:$0xff]
        %v2509 = vld [vmem:[#allocation3 + $0x88] sm:$0xff]
        %v2510 = vld [vmem:[#allocation3 + $0x90] sm:$0xff]
        %v2511 = vld [vmem:[#allocation3 + $0x98] sm:$0xff]
        %v2512 = vld [vmem:[#allocation3 + $0xa0] sm:$0xff]
        %v2513 = vld [vmem:[#allocation3 + $0xa8] sm:$0xff]
        %v2514 = vld [vmem:[#allocation3 + $0xb0] sm:$0xff]
        %v2515 = vld [vmem:[#allocation3 + $0xb8] sm:$0xff]
        %v2516 = vld [vmem:[#allocation3 + $0xc0] sm:$0xff]
        %v2517 = vld [vmem:[#allocation3 + $0xc8] sm:$0xff]
        %v2518 = vld [vmem:[#allocation3 + $0xd0] sm:$0xff]
        %v2519 = vld [vmem:[#allocation3 + $0xd8] sm:$0xff]
        %v2520 = vld [vmem:[#allocation3 + $0xe0] sm:$0xff]
        %v2521 = vld [vmem:[#allocation3 + $0xe8] sm:$0xff]
        %v2522 = vld [vmem:[#allocation3 + $0xf0] sm:$0xff]
        %v2523 = vld [vmem:[#allocation3 + $0xf8] sm:$0xff]
        %v2524 = vld [vmem:[#allocation3 + $0x100] sm:$0xff]
        %v2525 = vld [vmem:[#allocation3 + $0x108] sm:$0xff]
        %v2526 = vld [vmem:[#allocation3 + $0x110] sm:$0xff]
        %v2527 = vld [vmem:[#allocation3 + $0x118] sm:$0xff]
        %v2528 = vld [vmem:[#allocation3 + $0x120] sm:$0xff]
        %v2529 = vld [vmem:[#allocation3 + $0x128] sm:$0xff]
        %v2530 = vld [vmem:[#allocation3 + $0x130] sm:$0xff]
        %v2531 = vld [vmem:[#allocation3 + $0x138] sm:$0xff]
        %v2532 = vld [vmem:[#allocation3 + $0x140] sm:$0xff]
        %v2533 = vld [vmem:[#allocation3 + $0x148] sm:$0xff]
        %v2534 = vld [vmem:[#allocation3 + $0x150] sm:$0xff]
        %v2535 = vld [vmem:[#allocation3 + $0x158] sm:$0xff]
        %v2536 = vld [vmem:[#allocation3 + $0x160] sm:$0xff]
        %v2537 = vld [vmem:[#allocation3 + $0x168] sm:$0xff]
        %v2538 = vld [vmem:[#allocation3 + $0x170] sm:$0xff]
        %v2539 = vld [vmem:[#allocation3 + $0x178] sm:$0xff]
        %v2540 = vld [vmem:[#allocation3 + $0x180] sm:$0xff]
        %v2541 = vld [vmem:[#allocation3 + $0x188] sm:$0xff]
        %v2542 = vld [vmem:[#allocation3 + $0x190] sm:$0xff]
        %v2543 = vld [vmem:[#allocation3 + $0x198] sm:$0xff]
        %v2544 = vld [vmem:[#allocation3 + $0x1a0] sm:$0xff]
        %v2545 = vld [vmem:[#allocation3 + $0x1a8] sm:$0xff]
        %v2546 = vld [vmem:[#allocation3 + $0x1b0] sm:$0xff]
        %v2547 = vld [vmem:[#allocation3 + $0x1b8] sm:$0xff]
        %v2548 = vld [vmem:[#allocation3 + $0x1c0] sm:$0xff]
        %v2549 = vld [vmem:[#allocation3 + $0x1c8] sm:$0xff]
        %v2550 = vld [vmem:[#allocation3 + $0x1d0] sm:$0xff]
        %v2551 = vld [vmem:[#allocation3 + $0x1d8] sm:$0xff]
        %v2552 = vld [vmem:[#allocation3 + $0x1e0] sm:$0xff]
        %v2553 = vld [vmem:[#allocation3 + $0x1e8] sm:$0xff]
        %v2554 = vld [vmem:[#allocation3 + $0x1f0] sm:$0xff]
        %v2555 = vld [vmem:[#allocation3 + $0x1f8] sm:$0xff]
        %2556 = vmatprep.subr.mxu0 %v2553
        %2557 = vmatpush1.msra.mxu0 %v2552
        %2558 = vmatprep.subr.mxu0 %v2549
        %2559 = vmatpush1.msra.mxu0 %v2548
        %2560 = vmatprep.subr.mxu0 %v2545
        %2561 = vmatpush1.msra.mxu0 %v2544
        %2562 = vmatprep.subr.mxu0 %v2541
        %2563 = vmatpush1.msra.mxu0 %v2540
        %2564 = vmatprep.subr.mxu0 %v2537
        %2565 = vmatpush1.msra.mxu0 %v2536
        %2566 = vmatprep.subr.mxu0 %v2533
        %2567 = vmatpush1.msra.mxu0 %v2532
        %2568 = vmatprep.subr.mxu0 %v2529
        %2569 = vmatpush1.msra.mxu0 %v2528
        %2570 = vmatprep.subr.mxu0 %v2525
        %2571 = vmatpush1.msra.mxu0 %v2524
        %2572 = vmatprep.subr.mxu0 %v2521
        %2573 = vmatpush1.msra.mxu0 %v2520
        %2574 = vmatprep.subr.mxu0 %v2517
        %2575 = vmatpush1.msra.mxu0 %v2516
        %2576 = vmatprep.subr.mxu0 %v2513
        %2577 = vmatpush1.msra.mxu0 %v2512
        %2578 = vmatprep.subr.mxu0 %v2509
        %2579 = vmatpush1.msra.mxu0 %v2508
        %2580 = vmatprep.subr.mxu0 %v2505
        %2581 = vmatpush1.msra.mxu0 %v2504
        %2582 = vmatprep.subr.mxu0 %v2501
        %2583 = vmatpush1.msra.mxu0 %v2500
        %2584 = vmatprep.subr.mxu0 %v2497
        %2585 = vmatpush1.msra.mxu0 %v2496
        %2586 = vmatprep.subr.mxu0 %v2493
        %2587 = vmatpush1.msra.mxu0 %v2492
        %2588 = vmatprep.subr.mxu0 0.0
        %2589 = vmatpush2.msra.mxu0 0.0
        %2590 = vmatprep.subr.mxu0 0.0
        %2591 = vmatpush2.msra.mxu0 0.0
        %2592 = vmatprep.subr.mxu0 0.0
        %2593 = vmatpush2.msra.mxu0 0.0
        %2594 = vmatprep.subr.mxu0 0.0
        %2595 = vmatpush2.msra.mxu0 0.0
        %2596 = vmatprep.subr.mxu0 0.0
        %2597 = vmatpush2.msra.mxu0 0.0
        %2598 = vmatprep.subr.mxu0 0.0
        %2599 = vmatpush2.msra.mxu0 0.0
        %2600 = vmatprep.subr.mxu0 0.0
        %2601 = vmatpush2.msra.mxu0 0.0
        %2602 = vmatprep.subr.mxu0 0.0
        %2603 = vmatpush2.msra.mxu0 0.0
        %2604 = vmatprep.subr.mxu0 0.0
        %2605 = vmatpush2.msra.mxu0 0.0
        %2606 = vmatprep.subr.mxu0 0.0
        %2607 = vmatpush2.msra.mxu0 0.0
        %2608 = vmatprep.subr.mxu0 0.0
        %2609 = vmatpush2.msra.mxu0 0.0
        %2610 = vmatprep.subr.mxu0 0.0
        %2611 = vmatpush2.msra.mxu0 0.0
        %2612 = vmatprep.subr.mxu0 0.0
        %2613 = vmatpush2.msra.mxu0 0.0
        %2614 = vmatprep.subr.mxu0 0.0
        %2615 = vmatpush2.msra.mxu0 0.0
        %2616 = vmatprep.subr.mxu0 0.0
        %2617 = vmatpush2.msra.mxu0 0.0
        %2618 = vmatprep.subr.mxu0 0.0
        %2619 = vmatpush2.msra.mxu0 0.0
        %2620 = vmatprep.mubr.f32.mxu0 0.0
        %2621 = vmatmul.mubr.f32.gmra.mxu0 %v2483
        %v2622 = vpop.f32.mrf.mxu0
        %v2623 = vadd.f32 0.0, %v2622
        %v2624 = vpop.f32.mrf.mxu0
        %v2625 = vadd.f32 0.0, %v2624
        %2626 = vdwg.mxu0
        %2627 = vmatprep.subr.mxu0 %v2555
        %2628 = vmatpush1.msra.mxu0 %v2554
        %2629 = vmatprep.subr.mxu0 %v2551
        %2630 = vmatpush1.msra.mxu0 %v2550
        %2631 = vmatprep.subr.mxu0 %v2547
        %2632 = vmatpush1.msra.mxu0 %v2546
        %2633 = vmatprep.subr.mxu0 %v2543
        %2634 = vmatpush1.msra.mxu0 %v2542
        %2635 = vmatprep.subr.mxu0 %v2539
        %2636 = vmatpush1.msra.mxu0 %v2538
        %2637 = vmatprep.subr.mxu0 %v2535
        %2638 = vmatpush1.msra.mxu0 %v2534
        %2639 = vmatprep.subr.mxu0 %v2531
        %2640 = vmatpush1.msra.mxu0 %v2530
        %2641 = vmatprep.subr.mxu0 %v2527
        %2642 = vmatpush1.msra.mxu0 %v2526
        %2643 = vmatprep.subr.mxu0 %v2523
        %2644 = vmatpush1.msra.mxu0 %v2522
        %2645 = vmatprep.subr.mxu0 %v2519
        %2646 = vmatpush1.msra.mxu0 %v2518
        %2647 = vmatprep.subr.mxu0 %v2515
        %2648 = vmatpush1.msra.mxu0 %v2514
        %2649 = vmatprep.subr.mxu0 %v2511
        %2650 = vmatpush1.msra.mxu0 %v2510
        %2651 = vmatprep.subr.mxu0 %v2507
        %2652 = vmatpush1.msra.mxu0 %v2506
        %2653 = vmatprep.subr.mxu0 %v2503
        %2654 = vmatpush1.msra.mxu0 %v2502
        %2655 = vmatprep.subr.mxu0 %v2499
        %2656 = vmatpush1.msra.mxu0 %v2498
        %2657 = vmatprep.subr.mxu0 %v2495
        %2658 = vmatpush1.msra.mxu0 %v2494
        %2659 = vmatprep.subr.mxu0 0.0
        %2660 = vmatpush2.msra.mxu0 0.0
        %2661 = vmatprep.subr.mxu0 0.0
        %2662 = vmatpush2.msra.mxu0 0.0
        %2663 = vmatprep.subr.mxu0 0.0
        %2664 = vmatpush2.msra.mxu0 0.0
        %2665 = vmatprep.subr.mxu0 0.0
        %2666 = vmatpush2.msra.mxu0 0.0
        %2667 = vmatprep.subr.mxu0 0.0
        %2668 = vmatpush2.msra.mxu0 0.0
        %2669 = vmatprep.subr.mxu0 0.0
        %2670 = vmatpush2.msra.mxu0 0.0
        %2671 = vmatprep.subr.mxu0 0.0
        %2672 = vmatpush2.msra.mxu0 0.0
        %2673 = vmatprep.subr.mxu0 0.0
        %2674 = vmatpush2.msra.mxu0 0.0
        %2675 = vmatprep.subr.mxu0 0.0
        %2676 = vmatpush2.msra.mxu0 0.0
        %2677 = vmatprep.subr.mxu0 0.0
        %2678 = vmatpush2.msra.mxu0 0.0
        %2679 = vmatprep.subr.mxu0 0.0
        %2680 = vmatpush2.msra.mxu0 0.0
        %2681 = vmatprep.subr.mxu0 0.0
        %2682 = vmatpush2.msra.mxu0 0.0
        %2683 = vmatprep.subr.mxu0 0.0
        %2684 = vmatpush2.msra.mxu0 0.0
        %2685 = vmatprep.subr.mxu0 0.0
        %2686 = vmatpush2.msra.mxu0 0.0
        %2687 = vmatprep.subr.mxu0 0.0
        %2688 = vmatpush2.msra.mxu0 0.0
        %2689 = vmatprep.subr.mxu0 0.0
        %2690 = vmatpush2.msra.mxu0 0.0
        %2691 = vmatprep.mubr.f32.mxu0 0.0
        %2692 = vmatmul.mubr.f32.gmra.mxu0 %v2483
        %v2693 = vpop.f32.mrf.mxu0
        %v2694 = vadd.f32 0.0, %v2693
        %v2695 = vpop.f32.mrf.mxu0
        %v2696 = vadd.f32 0.0, %v2695
        %2697 = vdwg.mxu0
        %v2698 = vadd.f32 %v2488, %v2623
        %v2699 = vadd.f32 %v2489, %v2625
        %v2700 = vadd.f32 %v2490, %v2694
        %v2701 = vadd.f32 %v2491, %v2696
        %v2702 = vxor.u32 %v2698, 2147483648
        %v2703 = vmul.f32 %v2702, 1.442695
        %v2704 = vpow.pop %v2703
        %v2705 = vadd.f32 %v2704, 1.0
        %v2706 = vrcp.pop %v2705
        %v2707 = vmul.f32 1.0, %v2706
        %v2708 = vxor.u32 %v2699, 2147483648
        %v2709 = vmul.f32 %v2708, 1.442695
        %v2710 = vpow.pop %v2709
        %v2711 = vadd.f32 %v2710, 1.0
        %v2712 = vrcp.pop %v2711
        %v2713 = vmul.f32 1.0, %v2712
        %v2714 = vtanh.pop %v2700
        %v2715 = vxor.u32 %v2701, 2147483648
        %v2716 = vmul.f32 %v2715, 1.442695
        %v2717 = vpow.pop %v2716
        %v2718 = vadd.f32 %v2717, 1.0
        %v2719 = vrcp.pop %v2718
        %v2720 = vmul.f32 1.0, %v2719
        %v2721 = vmul.f32 %v2713, %v2484
        %v2722 = vmul.f32 %v2707, %v2714
        %v2723 = vadd.f32 %v2721, %v2722
        %v2724 = vtanh.pop %v2723
        %v2725 = vmul.f32 %v2720, %v2724
        %s2726 = scalar_lea.vmem [#allocation8], 48
        %2727 = vst [vmem:[%s2726] sm:$0xff] %v2725
        %s2728 = sadd.s32 %s1216, 6
        %p2729 = scmp.lt.s32.totalorder %s2728, 20
        // Predicated region
        $region236: #{char_lstm_forward.1} parent=31 // pred_check
          %p2730 = pneg %p2729
        $region237: #{char_lstm_forward.1} parent=31 // pred_check_branch
          %2732 = sbr.rel (%p2730) target = $region239
        $region238: #{char_lstm_forward.1} parent=31 // pred_region
          %2733 = vst [vmem:[#allocation5] sm:$0xff] %v2725
          %2734 = vst [vmem:[#allocation6] sm:$0xff] %v2723
        $region239: #{char_lstm_forward.1} parent=31 // pred_fallthru
          _
        %v2735 = vld [vmem:[#allocation5] sm:$0xff]
        %v2736 = vld [vmem:[#allocation6] sm:$0xff]
        %s2737 = smul.u32 7, 4
        %s2738 = smul.addr %s2737, 8
        %s2739 = scalar_lea.vmem [#allocation7], %s2738
        %v2740 = vld [vmem:[%s2739] sm:$0xff]
        %v2741 = vld [vmem:[%s2739 + $0x8] sm:$0xff]
        %v2742 = vld [vmem:[%s2739 + $0x10] sm:$0xff]
        %v2743 = vld [vmem:[%s2739 + $0x18] sm:$0xff]
        %v2744 = vld [vmem:[#allocation3] sm:$0xff]
        %v2745 = vld [vmem:[#allocation3 + $0x8] sm:$0xff]
        %v2746 = vld [vmem:[#allocation3 + $0x10] sm:$0xff]
        %v2747 = vld [vmem:[#allocation3 + $0x18] sm:$0xff]
        %v2748 = vld [vmem:[#allocation3 + $0x20] sm:$0xff]
        %v2749 = vld [vmem:[#allocation3 + $0x28] sm:$0xff]
        %v2750 = vld [vmem:[#allocation3 + $0x30] sm:$0xff]
        %v2751 = vld [vmem:[#allocation3 + $0x38] sm:$0xff]
        %v2752 = vld [vmem:[#allocation3 + $0x40] sm:$0xff]
        %v2753 = vld [vmem:[#allocation3 + $0x48] sm:$0xff]
        %v2754 = vld [vmem:[#allocation3 + $0x50] sm:$0xff]
        %v2755 = vld [vmem:[#allocation3 + $0x58] sm:$0xff]
        %v2756 = vld [vmem:[#allocation3 + $0x60] sm:$0xff]
        %v2757 = vld [vmem:[#allocation3 + $0x68] sm:$0xff]
        %v2758 = vld [vmem:[#allocation3 + $0x70] sm:$0xff]
        %v2759 = vld [vmem:[#allocation3 + $0x78] sm:$0xff]
        %v2760 = vld [vmem:[#allocation3 + $0x80] sm:$0xff]
        %v2761 = vld [vmem:[#allocation3 + $0x88] sm:$0xff]
        %v2762 = vld [vmem:[#allocation3 + $0x90] sm:$0xff]
        %v2763 = vld [vmem:[#allocation3 + $0x98] sm:$0xff]
        %v2764 = vld [vmem:[#allocation3 + $0xa0] sm:$0xff]
        %v2765 = vld [vmem:[#allocation3 + $0xa8] sm:$0xff]
        %v2766 = vld [vmem:[#allocation3 + $0xb0] sm:$0xff]
        %v2767 = vld [vmem:[#allocation3 + $0xb8] sm:$0xff]
        %v2768 = vld [vmem:[#allocation3 + $0xc0] sm:$0xff]
        %v2769 = vld [vmem:[#allocation3 + $0xc8] sm:$0xff]
        %v2770 = vld [vmem:[#allocation3 + $0xd0] sm:$0xff]
        %v2771 = vld [vmem:[#allocation3 + $0xd8] sm:$0xff]
        %v2772 = vld [vmem:[#allocation3 + $0xe0] sm:$0xff]
        %v2773 = vld [vmem:[#allocation3 + $0xe8] sm:$0xff]
        %v2774 = vld [vmem:[#allocation3 + $0xf0] sm:$0xff]
        %v2775 = vld [vmem:[#allocation3 + $0xf8] sm:$0xff]
        %v2776 = vld [vmem:[#allocation3 + $0x100] sm:$0xff]
        %v2777 = vld [vmem:[#allocation3 + $0x108] sm:$0xff]
        %v2778 = vld [vmem:[#allocation3 + $0x110] sm:$0xff]
        %v2779 = vld [vmem:[#allocation3 + $0x118] sm:$0xff]
        %v2780 = vld [vmem:[#allocation3 + $0x120] sm:$0xff]
        %v2781 = vld [vmem:[#allocation3 + $0x128] sm:$0xff]
        %v2782 = vld [vmem:[#allocation3 + $0x130] sm:$0xff]
        %v2783 = vld [vmem:[#allocation3 + $0x138] sm:$0xff]
        %v2784 = vld [vmem:[#allocation3 + $0x140] sm:$0xff]
        %v2785 = vld [vmem:[#allocation3 + $0x148] sm:$0xff]
        %v2786 = vld [vmem:[#allocation3 + $0x150] sm:$0xff]
        %v2787 = vld [vmem:[#allocation3 + $0x158] sm:$0xff]
        %v2788 = vld [vmem:[#allocation3 + $0x160] sm:$0xff]
        %v2789 = vld [vmem:[#allocation3 + $0x168] sm:$0xff]
        %v2790 = vld [vmem:[#allocation3 + $0x170] sm:$0xff]
        %v2791 = vld [vmem:[#allocation3 + $0x178] sm:$0xff]
        %v2792 = vld [vmem:[#allocation3 + $0x180] sm:$0xff]
        %v2793 = vld [vmem:[#allocation3 + $0x188] sm:$0xff]
        %v2794 = vld [vmem:[#allocation3 + $0x190] sm:$0xff]
        %v2795 = vld [vmem:[#allocation3 + $0x198] sm:$0xff]
        %v2796 = vld [vmem:[#allocation3 + $0x1a0] sm:$0xff]
        %v2797 = vld [vmem:[#allocation3 + $0x1a8] sm:$0xff]
        %v2798 = vld [vmem:[#allocation3 + $0x1b0] sm:$0xff]
        %v2799 = vld [vmem:[#allocation3 + $0x1b8] sm:$0xff]
        %v2800 = vld [vmem:[#allocation3 + $0x1c0] sm:$0xff]
        %v2801 = vld [vmem:[#allocation3 + $0x1c8] sm:$0xff]
        %v2802 = vld [vmem:[#allocation3 + $0x1d0] sm:$0xff]
        %v2803 = vld [vmem:[#allocation3 + $0x1d8] sm:$0xff]
        %v2804 = vld [vmem:[#allocation3 + $0x1e0] sm:$0xff]
        %v2805 = vld [vmem:[#allocation3 + $0x1e8] sm:$0xff]
        %v2806 = vld [vmem:[#allocation3 + $0x1f0] sm:$0xff]
        %v2807 = vld [vmem:[#allocation3 + $0x1f8] sm:$0xff]
        %2808 = vmatprep.subr.mxu0 %v2805
        %2809 = vmatpush1.msra.mxu0 %v2804
        %2810 = vmatprep.subr.mxu0 %v2801
        %2811 = vmatpush1.msra.mxu0 %v2800
        %2812 = vmatprep.subr.mxu0 %v2797
        %2813 = vmatpush1.msra.mxu0 %v2796
        %2814 = vmatprep.subr.mxu0 %v2793
        %2815 = vmatpush1.msra.mxu0 %v2792
        %2816 = vmatprep.subr.mxu0 %v2789
        %2817 = vmatpush1.msra.mxu0 %v2788
        %2818 = vmatprep.subr.mxu0 %v2785
        %2819 = vmatpush1.msra.mxu0 %v2784
        %2820 = vmatprep.subr.mxu0 %v2781
        %2821 = vmatpush1.msra.mxu0 %v2780
        %2822 = vmatprep.subr.mxu0 %v2777
        %2823 = vmatpush1.msra.mxu0 %v2776
        %2824 = vmatprep.subr.mxu0 %v2773
        %2825 = vmatpush1.msra.mxu0 %v2772
        %2826 = vmatprep.subr.mxu0 %v2769
        %2827 = vmatpush1.msra.mxu0 %v2768
        %2828 = vmatprep.subr.mxu0 %v2765
        %2829 = vmatpush1.msra.mxu0 %v2764
        %2830 = vmatprep.subr.mxu0 %v2761
        %2831 = vmatpush1.msra.mxu0 %v2760
        %2832 = vmatprep.subr.mxu0 %v2757
        %2833 = vmatpush1.msra.mxu0 %v2756
        %2834 = vmatprep.subr.mxu0 %v2753
        %2835 = vmatpush1.msra.mxu0 %v2752
        %2836 = vmatprep.subr.mxu0 %v2749
        %2837 = vmatpush1.msra.mxu0 %v2748
        %2838 = vmatprep.subr.mxu0 %v2745
        %2839 = vmatpush1.msra.mxu0 %v2744
        %2840 = vmatprep.subr.mxu0 0.0
        %2841 = vmatpush2.msra.mxu0 0.0
        %2842 = vmatprep.subr.mxu0 0.0
        %2843 = vmatpush2.msra.mxu0 0.0
        %2844 = vmatprep.subr.mxu0 0.0
        %2845 = vmatpush2.msra.mxu0 0.0
        %2846 = vmatprep.subr.mxu0 0.0
        %2847 = vmatpush2.msra.mxu0 0.0
        %2848 = vmatprep.subr.mxu0 0.0
        %2849 = vmatpush2.msra.mxu0 0.0
        %2850 = vmatprep.subr.mxu0 0.0
        %2851 = vmatpush2.msra.mxu0 0.0
        %2852 = vmatprep.subr.mxu0 0.0
        %2853 = vmatpush2.msra.mxu0 0.0
        %2854 = vmatprep.subr.mxu0 0.0
        %2855 = vmatpush2.msra.mxu0 0.0
        %2856 = vmatprep.subr.mxu0 0.0
        %2857 = vmatpush2.msra.mxu0 0.0
        %2858 = vmatprep.subr.mxu0 0.0
        %2859 = vmatpush2.msra.mxu0 0.0
        %2860 = vmatprep.subr.mxu0 0.0
        %2861 = vmatpush2.msra.mxu0 0.0
        %2862 = vmatprep.subr.mxu0 0.0
        %2863 = vmatpush2.msra.mxu0 0.0
        %2864 = vmatprep.subr.mxu0 0.0
        %2865 = vmatpush2.msra.mxu0 0.0
        %2866 = vmatprep.subr.mxu0 0.0
        %2867 = vmatpush2.msra.mxu0 0.0
        %2868 = vmatprep.subr.mxu0 0.0
        %2869 = vmatpush2.msra.mxu0 0.0
        %2870 = vmatprep.subr.mxu0 0.0
        %2871 = vmatpush2.msra.mxu0 0.0
        %2872 = vmatprep.mubr.f32.mxu0 0.0
        %2873 = vmatmul.mubr.f32.gmra.mxu0 %v2735
        %v2874 = vpop.f32.mrf.mxu0
        %v2875 = vadd.f32 0.0, %v2874
        %v2876 = vpop.f32.mrf.mxu0
        %v2877 = vadd.f32 0.0, %v2876
        %2878 = vdwg.mxu0
        %2879 = vmatprep.subr.mxu0 %v2807
        %2880 = vmatpush1.msra.mxu0 %v2806
        %2881 = vmatprep.subr.mxu0 %v2803
        %2882 = vmatpush1.msra.mxu0 %v2802
        %2883 = vmatprep.subr.mxu0 %v2799
        %2884 = vmatpush1.msra.mxu0 %v2798
        %2885 = vmatprep.subr.mxu0 %v2795
        %2886 = vmatpush1.msra.mxu0 %v2794
        %2887 = vmatprep.subr.mxu0 %v2791
        %2888 = vmatpush1.msra.mxu0 %v2790
        %2889 = vmatprep.subr.mxu0 %v2787
        %2890 = vmatpush1.msra.mxu0 %v2786
        %2891 = vmatprep.subr.mxu0 %v2783
        %2892 = vmatpush1.msra.mxu0 %v2782
        %2893 = vmatprep.subr.mxu0 %v2779
        %2894 = vmatpush1.msra.mxu0 %v2778
        %2895 = vmatprep.subr.mxu0 %v2775
        %2896 = vmatpush1.msra.mxu0 %v2774
        %2897 = vmatprep.subr.mxu0 %v2771
        %2898 = vmatpush1.msra.mxu0 %v2770
        %2899 = vmatprep.subr.mxu0 %v2767
        %2900 = vmatpush1.msra.mxu0 %v2766
        %2901 = vmatprep.subr.mxu0 %v2763
        %2902 = vmatpush1.msra.mxu0 %v2762
        %2903 = vmatprep.subr.mxu0 %v2759
        %2904 = vmatpush1.msra.mxu0 %v2758
        %2905 = vmatprep.subr.mxu0 %v2755
        %2906 = vmatpush1.msra.mxu0 %v2754
        %2907 = vmatprep.subr.mxu0 %v2751
        %2908 = vmatpush1.msra.mxu0 %v2750
        %2909 = vmatprep.subr.mxu0 %v2747
        %2910 = vmatpush1.msra.mxu0 %v2746
        %2911 = vmatprep.subr.mxu0 0.0
        %2912 = vmatpush2.msra.mxu0 0.0
        %2913 = vmatprep.subr.mxu0 0.0
        %2914 = vmatpush2.msra.mxu0 0.0
        %2915 = vmatprep.subr.mxu0 0.0
        %2916 = vmatpush2.msra.mxu0 0.0
        %2917 = vmatprep.subr.mxu0 0.0
        %2918 = vmatpush2.msra.mxu0 0.0
        %2919 = vmatprep.subr.mxu0 0.0
        %2920 = vmatpush2.msra.mxu0 0.0
        %2921 = vmatprep.subr.mxu0 0.0
        %2922 = vmatpush2.msra.mxu0 0.0
        %2923 = vmatprep.subr.mxu0 0.0
        %2924 = vmatpush2.msra.mxu0 0.0
        %2925 = vmatprep.subr.mxu0 0.0
        %2926 = vmatpush2.msra.mxu0 0.0
        %2927 = vmatprep.subr.mxu0 0.0
        %2928 = vmatpush2.msra.mxu0 0.0
        %2929 = vmatprep.subr.mxu0 0.0
        %2930 = vmatpush2.msra.mxu0 0.0
        %2931 = vmatprep.subr.mxu0 0.0
        %2932 = vmatpush2.msra.mxu0 0.0
        %2933 = vmatprep.subr.mxu0 0.0
        %2934 = vmatpush2.msra.mxu0 0.0
        %2935 = vmatprep.subr.mxu0 0.0
        %2936 = vmatpush2.msra.mxu0 0.0
        %2937 = vmatprep.subr.mxu0 0.0
        %2938 = vmatpush2.msra.mxu0 0.0
        %2939 = vmatprep.subr.mxu0 0.0
        %2940 = vmatpush2.msra.mxu0 0.0
        %2941 = vmatprep.subr.mxu0 0.0
        %2942 = vmatpush2.msra.mxu0 0.0
        %2943 = vmatprep.mubr.f32.mxu0 0.0
        %2944 = vmatmul.mubr.f32.gmra.mxu0 %v2735
        %v2945 = vpop.f32.mrf.mxu0
        %v2946 = vadd.f32 0.0, %v2945
        %v2947 = vpop.f32.mrf.mxu0
        %v2948 = vadd.f32 0.0, %v2947
        %2949 = vdwg.mxu0
        %v2950 = vadd.f32 %v2740, %v2875
        %v2951 = vadd.f32 %v2741, %v2877
        %v2952 = vadd.f32 %v2742, %v2946
        %v2953 = vadd.f32 %v2743, %v2948
        %v2954 = vxor.u32 %v2950, 2147483648
        %v2955 = vmul.f32 %v2954, 1.442695
        %v2956 = vpow.pop %v2955
        %v2957 = vadd.f32 %v2956, 1.0
        %v2958 = vrcp.pop %v2957
        %v2959 = vmul.f32 1.0, %v2958
        %v2960 = vxor.u32 %v2951, 2147483648
        %v2961 = vmul.f32 %v2960, 1.442695
        %v2962 = vpow.pop %v2961
        %v2963 = vadd.f32 %v2962, 1.0
        %v2964 = vrcp.pop %v2963
        %v2965 = vmul.f32 1.0, %v2964
        %v2966 = vtanh.pop %v2952
        %v2967 = vxor.u32 %v2953, 2147483648
        %v2968 = vmul.f32 %v2967, 1.442695
        %v2969 = vpow.pop %v2968
        %v2970 = vadd.f32 %v2969, 1.0
        %v2971 = vrcp.pop %v2970
        %v2972 = vmul.f32 1.0, %v2971
        %v2973 = vmul.f32 %v2965, %v2736
        %v2974 = vmul.f32 %v2959, %v2966
        %v2975 = vadd.f32 %v2973, %v2974
        %v2976 = vtanh.pop %v2975
        %v2977 = vmul.f32 %v2972, %v2976
        %s2978 = scalar_lea.vmem [#allocation8], 56
        %2979 = vst [vmem:[%s2978] sm:$0xff] %v2977
        %s2980 = sadd.s32 %s1216, 7
        %p2981 = scmp.lt.s32.totalorder %s2980, 20
        // Predicated region
        $region240: #{char_lstm_forward.1} parent=31 // pred_check
          %p2982 = pneg %p2981
        $region241: #{char_lstm_forward.1} parent=31 // pred_check_branch
          %2984 = sbr.rel (%p2982) target = $region243
        $region242: #{char_lstm_forward.1} parent=31 // pred_region
          %2985 = vst [vmem:[#allocation5] sm:$0xff] %v2977
          %2986 = vst [vmem:[#allocation6] sm:$0xff] %v2975
        $region243: #{char_lstm_forward.1} parent=31 // pred_fallthru
          _
        %v2987 = vld [vmem:[#allocation8] sm:$0xff]
        %v2988 = vld [vmem:[#allocation8 + $0x8] sm:$0xff]
        %v2989 = vld [vmem:[#allocation8 + $0x10] sm:$0xff]
        %v2990 = vld [vmem:[#allocation8 + $0x18] sm:$0xff]
        %v2991 = vld [vmem:[#allocation8 + $0x20] sm:$0xff]
        %v2992 = vld [vmem:[#allocation8 + $0x28] sm:$0xff]
        %v2993 = vld [vmem:[#allocation8 + $0x30] sm:$0xff]
        %v2994 = vld [vmem:[#allocation8 + $0x38] sm:$0xff]
        %v2995 = vld [vmem:[#allocation4] sm:$0xff]
        %v2996 = vld [vmem:[#allocation4 + $0x8] sm:$0xff]
        %v2997 = vld [vmem:[#allocation4 + $0x10] sm:$0xff]
        %v2998 = vld [vmem:[#allocation4 + $0x18] sm:$0xff]
        %v2999 = vld [vmem:[#allocation4 + $0x20] sm:$0xff]
        %v3000 = vld [vmem:[#allocation4 + $0x28] sm:$0xff]
        %v3001 = vld [vmem:[#allocation4 + $0x30] sm:$0xff]
        %v3002 = vld [vmem:[#allocation4 + $0x38] sm:$0xff]
        %v3003 = vld [vmem:[#allocation4 + $0x40] sm:$0xff]
        %v3004 = vld [vmem:[#allocation4 + $0x48] sm:$0xff]
        %v3005 = vld [vmem:[#allocation4 + $0x50] sm:$0xff]
        %v3006 = vld [vmem:[#allocation4 + $0x58] sm:$0xff]
        %v3007 = vld [vmem:[#allocation4 + $0x60] sm:$0xff]
        %v3008 = vld [vmem:[#allocation4 + $0x68] sm:$0xff]
        %v3009 = vld [vmem:[#allocation4 + $0x70] sm:$0xff]
        %v3010 = vld [vmem:[#allocation4 + $0x78] sm:$0xff]
        %v3011 = vld [vmem:[%s5] sm:$0x1]
        %v3013 = vlaneseq
        %v3014 = vshrl.u32 %v3013, 7
        %v3015 = vsub.s32 0, %v3014
        %v3016 = vrot.slane %v3011, %v3015
        %3018 = vmatprep.subr.mxu0 0.0
        %3019 = vmatpush1.msra.mxu0 %v3010
        %3020 = vmatprep.subr.mxu0 0.0
        %3021 = vmatpush1.msra.mxu0 %v3009
        %3022 = vmatprep.subr.mxu0 0.0
        %3023 = vmatpush1.msra.mxu0 %v3008
        %3024 = vmatprep.subr.mxu0 0.0
        %3025 = vmatpush1.msra.mxu0 %v3007
        %3026 = vmatprep.subr.mxu0 0.0
        %3027 = vmatpush1.msra.mxu0 %v3006
        %3028 = vmatprep.subr.mxu0 0.0
        %3029 = vmatpush1.msra.mxu0 %v3005
        %3030 = vmatprep.subr.mxu0 0.0
        %3031 = vmatpush1.msra.mxu0 %v3004
        %3032 = vmatprep.subr.mxu0 0.0
        %3033 = vmatpush1.msra.mxu0 %v3003
        %3034 = vmatprep.subr.mxu0 0.0
        %3035 = vmatpush1.msra.mxu0 %v3002
        %3036 = vmatprep.subr.mxu0 0.0
        %3037 = vmatpush1.msra.mxu0 %v3001
        %3038 = vmatprep.subr.mxu0 0.0
        %3039 = vmatpush1.msra.mxu0 %v3000
        %3040 = vmatprep.subr.mxu0 0.0
        %3041 = vmatpush1.msra.mxu0 %v2999
        %3042 = vmatprep.subr.mxu0 0.0
        %3043 = vmatpush1.msra.mxu0 %v2998
        %3044 = vmatprep.subr.mxu0 0.0
        %3045 = vmatpush1.msra.mxu0 %v2997
        %3046 = vmatprep.subr.mxu0 0.0
        %3047 = vmatpush1.msra.mxu0 %v2996
        %3048 = vmatprep.subr.mxu0 0.0
        %3049 = vmatpush1.msra.mxu0 %v2995
        %3050 = vmatprep.subr.mxu0 0.0
        %3051 = vmatpush2.msra.mxu0 0.0
        %3052 = vmatprep.subr.mxu0 0.0
        %3053 = vmatpush2.msra.mxu0 0.0
        %3054 = vmatprep.subr.mxu0 0.0
        %3055 = vmatpush2.msra.mxu0 0.0
        %3056 = vmatprep.subr.mxu0 0.0
        %3057 = vmatpush2.msra.mxu0 0.0
        %3058 = vmatprep.subr.mxu0 0.0
        %3059 = vmatpush2.msra.mxu0 0.0
        %3060 = vmatprep.subr.mxu0 0.0
        %3061 = vmatpush2.msra.mxu0 0.0
        %3062 = vmatprep.subr.mxu0 0.0
        %3063 = vmatpush2.msra.mxu0 0.0
        %3064 = vmatprep.subr.mxu0 0.0
        %3065 = vmatpush2.msra.mxu0 0.0
        %3066 = vmatprep.subr.mxu0 0.0
        %3067 = vmatpush2.msra.mxu0 0.0
        %3068 = vmatprep.subr.mxu0 0.0
        %3069 = vmatpush2.msra.mxu0 0.0
        %3070 = vmatprep.subr.mxu0 0.0
        %3071 = vmatpush2.msra.mxu0 0.0
        %3072 = vmatprep.subr.mxu0 0.0
        %3073 = vmatpush2.msra.mxu0 0.0
        %3074 = vmatprep.subr.mxu0 0.0
        %3075 = vmatpush2.msra.mxu0 0.0
        %3076 = vmatprep.subr.mxu0 0.0
        %3077 = vmatpush2.msra.mxu0 0.0
        %3078 = vmatprep.subr.mxu0 0.0
        %3079 = vmatpush2.msra.mxu0 0.0
        %3080 = vmatprep.subr.mxu0 0.0
        %3081 = vmatpush2.msra.mxu0 0.0
        %3082 = vmatprep.mubr.f32.mxu0 0.0
        %3083 = vmatmul.mubr.f32.gmra.mxu0 %v2987
        %v3084 = vpop.f32.mrf.mxu0
        %v3085 = vadd.f32 %v3016, %v3084
        %v3086 = vpop.f32.mrf.mxu0
        %3087 = vmatprep.mubr.f32.mxu0 0.0
        %3088 = vmatmul.mubr.f32.gmra.mxu0 %v2988
        %v3089 = vpop.f32.mrf.mxu0
        %v3090 = vadd.f32 %v3016, %v3089
        %v3091 = vpop.f32.mrf.mxu0
        %3092 = vmatprep.mubr.f32.mxu0 0.0
        %3093 = vmatmul.mubr.f32.gmra.mxu0 %v2989
        %v3094 = vpop.f32.mrf.mxu0
        %v3095 = vadd.f32 %v3016, %v3094
        %v3096 = vpop.f32.mrf.mxu0
        %3097 = vmatprep.mubr.f32.mxu0 0.0
        %3098 = vmatmul.mubr.f32.gmra.mxu0 %v2990
        %v3099 = vpop.f32.mrf.mxu0
        %v3100 = vadd.f32 %v3016, %v3099
        %v3101 = vpop.f32.mrf.mxu0
        %3102 = vmatprep.mubr.f32.mxu0 0.0
        %3103 = vmatmul.mubr.f32.gmra.mxu0 %v2991
        %v3104 = vpop.f32.mrf.mxu0
        %v3105 = vadd.f32 %v3016, %v3104
        %v3106 = vpop.f32.mrf.mxu0
        %3107 = vmatprep.mubr.f32.mxu0 0.0
        %3108 = vmatmul.mubr.f32.gmra.mxu0 %v2992
        %v3109 = vpop.f32.mrf.mxu0
        %v3110 = vadd.f32 %v3016, %v3109
        %v3111 = vpop.f32.mrf.mxu0
        %3112 = vmatprep.mubr.f32.mxu0 0.0
        %3113 = vmatmul.mubr.f32.gmra.mxu0 %v2993
        %v3114 = vpop.f32.mrf.mxu0
        %v3115 = vadd.f32 %v3016, %v3114
        %v3116 = vpop.f32.mrf.mxu0
        %3117 = vmatprep.mubr.f32.mxu0 0.0
        %3118 = vmatmul.mubr.f32.gmra.mxu0 %v2994
        %v3119 = vpop.f32.mrf.mxu0
        %v3120 = vadd.f32 %v3016, %v3119
        %v3121 = vpop.f32.mrf.mxu0
        %3122 = vdwg.mxu0
        %v3124 = vcombine.high %v3085, %v3085
        %v3126 = vunpack.c.l.s4 1966171168
        %v3127 = vunpack.c.0.s8 %v3126
        %v3128 = vlaneseq
        %v3129 = vshrl.u32 %v3128, 7
        %v3130 = vsub.s32 %v3127, %v3129
        %v3131 = vrot.slane %v3085, %v3130
        %v3133 = vunpack.c.l.s4 1966171168
        %v3134 = vunpack.c.0.s8 %v3133
        %v3135 = vlaneseq
        %v3136 = vshrl.u32 %v3135, 7
        %v3137 = vsub.s32 %v3134, %v3136
        %v3138 = vrot.slane %v3124, %v3137
        %v3139 = vcombine.high %v3131, %v3131
        %v3140 = vcombine.high %v3138, %v3138
        %v3142 = vunpack.c.l.s4 1966171168
        %v3143 = vunpack.c.0.s8 %v3142
        %v3144 = vlaneseq
        %v3145 = vshrl.u32 %v3144, 7
        %v3146 = vsub.s32 %v3143, %v3145
        %v3147 = vrot.slane %v3131, %v3146
        %v3149 = vunpack.c.l.s4 1966171168
        %v3150 = vunpack.c.0.s8 %v3149
        %v3151 = vlaneseq
        %v3152 = vshrl.u32 %v3151, 7
        %v3153 = vsub.s32 %v3150, %v3152
        %v3154 = vrot.slane %v3138, %v3153
        %v3156 = vunpack.c.l.s4 1966171168
        %v3157 = vunpack.c.0.s8 %v3156
        %v3158 = vlaneseq
        %v3159 = vshrl.u32 %v3158, 7
        %v3160 = vsub.s32 %v3157, %v3159
        %v3161 = vrot.slane %v3139, %v3160
        %v3163 = vunpack.c.l.s4 1966171168
        %v3164 = vunpack.c.0.s8 %v3163
        %v3165 = vlaneseq
        %v3166 = vshrl.u32 %v3165, 7
        %v3167 = vsub.s32 %v3164, %v3166
        %v3168 = vrot.slane %v3140, %v3167
        %v3169 = vcombine.high %v3147, %v3147
        %v3170 = vcombine.high %v3154, %v3154
        %v3171 = vcombine.high %v3161, %v3161
        %v3172 = vcombine.high %v3168, %v3168
        %3181 = vst [vmem:[%s210] sm:$0x1] %v3147
        %3182 = vst [vmem:[%s210 + $0x8] sm:$0x1] %v3161
        %3183 = vst [vmem:[%s210 + $0x10] sm:$0x1] %v3169
        %3184 = vst [vmem:[%s210 + $0x18] sm:$0x1] %v3171
        %3185 = vst [vmem:[%s210 + $0x20] sm:$0x1] %v3154
        %3186 = vst [vmem:[%s210 + $0x28] sm:$0x1] %v3168
        %3187 = vst [vmem:[%s210 + $0x30] sm:$0x1] %v3170
        %3188 = vst [vmem:[%s210 + $0x38] sm:$0x1] %v3172
        %v3190 = vcombine.high %v3090, %v3090
        %v3192 = vunpack.c.l.s4 1966171168
        %v3193 = vunpack.c.0.s8 %v3192
        %v3194 = vlaneseq
        %v3195 = vshrl.u32 %v3194, 7
        %v3196 = vsub.s32 %v3193, %v3195
        %v3197 = vrot.slane %v3090, %v3196
        %v3199 = vunpack.c.l.s4 1966171168
        %v3200 = vunpack.c.0.s8 %v3199
        %v3201 = vlaneseq
        %v3202 = vshrl.u32 %v3201, 7
        %v3203 = vsub.s32 %v3200, %v3202
        %v3204 = vrot.slane %v3190, %v3203
        %v3205 = vcombine.high %v3197, %v3197
        %v3206 = vcombine.high %v3204, %v3204
        %v3208 = vunpack.c.l.s4 1966171168
        %v3209 = vunpack.c.0.s8 %v3208
        %v3210 = vlaneseq
        %v3211 = vshrl.u32 %v3210, 7
        %v3212 = vsub.s32 %v3209, %v3211
        %v3213 = vrot.slane %v3197, %v3212
        %v3215 = vunpack.c.l.s4 1966171168
        %v3216 = vunpack.c.0.s8 %v3215
        %v3217 = vlaneseq
        %v3218 = vshrl.u32 %v3217, 7
        %v3219 = vsub.s32 %v3216, %v3218
        %v3220 = vrot.slane %v3204, %v3219
        %v3222 = vunpack.c.l.s4 1966171168
        %v3223 = vunpack.c.0.s8 %v3222
        %v3224 = vlaneseq
        %v3225 = vshrl.u32 %v3224, 7
        %v3226 = vsub.s32 %v3223, %v3225
        %v3227 = vrot.slane %v3205, %v3226
        %v3229 = vunpack.c.l.s4 1966171168
        %v3230 = vunpack.c.0.s8 %v3229
        %v3231 = vlaneseq
        %v3232 = vshrl.u32 %v3231, 7
        %v3233 = vsub.s32 %v3230, %v3232
        %v3234 = vrot.slane %v3206, %v3233
        %v3235 = vcombine.high %v3213, %v3213
        %v3236 = vcombine.high %v3220, %v3220
        %v3237 = vcombine.high %v3227, %v3227
        %v3238 = vcombine.high %v3234, %v3234
        %3247 = vst [vmem:[%s210 + $0x1] sm:$0x1] %v3213
        %3248 = vst [vmem:[%s210 + $0x9] sm:$0x1] %v3227
        %3249 = vst [vmem:[%s210 + $0x11] sm:$0x1] %v3235
        %3250 = vst [vmem:[%s210 + $0x19] sm:$0x1] %v3237
        %3251 = vst [vmem:[%s210 + $0x21] sm:$0x1] %v3220
        %3252 = vst [vmem:[%s210 + $0x29] sm:$0x1] %v3234
        %3253 = vst [vmem:[%s210 + $0x31] sm:$0x1] %v3236
        %3254 = vst [vmem:[%s210 + $0x39] sm:$0x1] %v3238
        %v3256 = vcombine.high %v3095, %v3095
        %v3258 = vunpack.c.l.s4 1966171168
        %v3259 = vunpack.c.0.s8 %v3258
        %v3260 = vlaneseq
        %v3261 = vshrl.u32 %v3260, 7
        %v3262 = vsub.s32 %v3259, %v3261
        %v3263 = vrot.slane %v3095, %v3262
        %v3265 = vunpack.c.l.s4 1966171168
        %v3266 = vunpack.c.0.s8 %v3265
        %v3267 = vlaneseq
        %v3268 = vshrl.u32 %v3267, 7
        %v3269 = vsub.s32 %v3266, %v3268
        %v3270 = vrot.slane %v3256, %v3269
        %v3271 = vcombine.high %v3263, %v3263
        %v3272 = vcombine.high %v3270, %v3270
        %v3274 = vunpack.c.l.s4 1966171168
        %v3275 = vunpack.c.0.s8 %v3274
        %v3276 = vlaneseq
        %v3277 = vshrl.u32 %v3276, 7
        %v3278 = vsub.s32 %v3275, %v3277
        %v3279 = vrot.slane %v3263, %v3278
        %v3281 = vunpack.c.l.s4 1966171168
        %v3282 = vunpack.c.0.s8 %v3281
        %v3283 = vlaneseq
        %v3284 = vshrl.u32 %v3283, 7
        %v3285 = vsub.s32 %v3282, %v3284
        %v3286 = vrot.slane %v3270, %v3285
        %v3288 = vunpack.c.l.s4 1966171168
        %v3289 = vunpack.c.0.s8 %v3288
        %v3290 = vlaneseq
        %v3291 = vshrl.u32 %v3290, 7
        %v3292 = vsub.s32 %v3289, %v3291
        %v3293 = vrot.slane %v3271, %v3292
        %v3295 = vunpack.c.l.s4 1966171168
        %v3296 = vunpack.c.0.s8 %v3295
        %v3297 = vlaneseq
        %v3298 = vshrl.u32 %v3297, 7
        %v3299 = vsub.s32 %v3296, %v3298
        %v3300 = vrot.slane %v3272, %v3299
        %v3301 = vcombine.high %v3279, %v3279
        %v3302 = vcombine.high %v3286, %v3286
        %v3303 = vcombine.high %v3293, %v3293
        %v3304 = vcombine.high %v3300, %v3300
        %3313 = vst [vmem:[%s210 + $0x2] sm:$0x1] %v3279
        %3314 = vst [vmem:[%s210 + $0xa] sm:$0x1] %v3293
        %3315 = vst [vmem:[%s210 + $0x12] sm:$0x1] %v3301
        %3316 = vst [vmem:[%s210 + $0x1a] sm:$0x1] %v3303
        %3317 = vst [vmem:[%s210 + $0x22] sm:$0x1] %v3286
        %3318 = vst [vmem:[%s210 + $0x2a] sm:$0x1] %v3300
        %3319 = vst [vmem:[%s210 + $0x32] sm:$0x1] %v3302
        %3320 = vst [vmem:[%s210 + $0x3a] sm:$0x1] %v3304
        %v3322 = vcombine.high %v3100, %v3100
        %v3324 = vunpack.c.l.s4 1966171168
        %v3325 = vunpack.c.0.s8 %v3324
        %v3326 = vlaneseq
        %v3327 = vshrl.u32 %v3326, 7
        %v3328 = vsub.s32 %v3325, %v3327
        %v3329 = vrot.slane %v3100, %v3328
        %v3331 = vunpack.c.l.s4 1966171168
        %v3332 = vunpack.c.0.s8 %v3331
        %v3333 = vlaneseq
        %v3334 = vshrl.u32 %v3333, 7
        %v3335 = vsub.s32 %v3332, %v3334
        %v3336 = vrot.slane %v3322, %v3335
        %v3337 = vcombine.high %v3329, %v3329
        %v3338 = vcombine.high %v3336, %v3336
        %v3340 = vunpack.c.l.s4 1966171168
        %v3341 = vunpack.c.0.s8 %v3340
        %v3342 = vlaneseq
        %v3343 = vshrl.u32 %v3342, 7
        %v3344 = vsub.s32 %v3341, %v3343
        %v3345 = vrot.slane %v3329, %v3344
        %v3347 = vunpack.c.l.s4 1966171168
        %v3348 = vunpack.c.0.s8 %v3347
        %v3349 = vlaneseq
        %v3350 = vshrl.u32 %v3349, 7
        %v3351 = vsub.s32 %v3348, %v3350
        %v3352 = vrot.slane %v3336, %v3351
        %v3354 = vunpack.c.l.s4 1966171168
        %v3355 = vunpack.c.0.s8 %v3354
        %v3356 = vlaneseq
        %v3357 = vshrl.u32 %v3356, 7
        %v3358 = vsub.s32 %v3355, %v3357
        %v3359 = vrot.slane %v3337, %v3358
        %v3361 = vunpack.c.l.s4 1966171168
        %v3362 = vunpack.c.0.s8 %v3361
        %v3363 = vlaneseq
        %v3364 = vshrl.u32 %v3363, 7
        %v3365 = vsub.s32 %v3362, %v3364
        %v3366 = vrot.slane %v3338, %v3365
        %v3367 = vcombine.high %v3345, %v3345
        %v3368 = vcombine.high %v3352, %v3352
        %v3369 = vcombine.high %v3359, %v3359
        %v3370 = vcombine.high %v3366, %v3366
        %3379 = vst [vmem:[%s210 + $0x3] sm:$0x1] %v3345
        %3380 = vst [vmem:[%s210 + $0xb] sm:$0x1] %v3359
        %3381 = vst [vmem:[%s210 + $0x13] sm:$0x1] %v3367
        %3382 = vst [vmem:[%s210 + $0x1b] sm:$0x1] %v3369
        %3383 = vst [vmem:[%s210 + $0x23] sm:$0x1] %v3352
        %3384 = vst [vmem:[%s210 + $0x2b] sm:$0x1] %v3366
        %3385 = vst [vmem:[%s210 + $0x33] sm:$0x1] %v3368
        %3386 = vst [vmem:[%s210 + $0x3b] sm:$0x1] %v3370
        %v3388 = vcombine.high %v3105, %v3105
        %v3390 = vunpack.c.l.s4 1966171168
        %v3391 = vunpack.c.0.s8 %v3390
        %v3392 = vlaneseq
        %v3393 = vshrl.u32 %v3392, 7
        %v3394 = vsub.s32 %v3391, %v3393
        %v3395 = vrot.slane %v3105, %v3394
        %v3397 = vunpack.c.l.s4 1966171168
        %v3398 = vunpack.c.0.s8 %v3397
        %v3399 = vlaneseq
        %v3400 = vshrl.u32 %v3399, 7
        %v3401 = vsub.s32 %v3398, %v3400
        %v3402 = vrot.slane %v3388, %v3401
        %v3403 = vcombine.high %v3395, %v3395
        %v3404 = vcombine.high %v3402, %v3402
        %v3406 = vunpack.c.l.s4 1966171168
        %v3407 = vunpack.c.0.s8 %v3406
        %v3408 = vlaneseq
        %v3409 = vshrl.u32 %v3408, 7
        %v3410 = vsub.s32 %v3407, %v3409
        %v3411 = vrot.slane %v3395, %v3410
        %v3413 = vunpack.c.l.s4 1966171168
        %v3414 = vunpack.c.0.s8 %v3413
        %v3415 = vlaneseq
        %v3416 = vshrl.u32 %v3415, 7
        %v3417 = vsub.s32 %v3414, %v3416
        %v3418 = vrot.slane %v3402, %v3417
        %v3420 = vunpack.c.l.s4 1966171168
        %v3421 = vunpack.c.0.s8 %v3420
        %v3422 = vlaneseq
        %v3423 = vshrl.u32 %v3422, 7
        %v3424 = vsub.s32 %v3421, %v3423
        %v3425 = vrot.slane %v3403, %v3424
        %v3427 = vunpack.c.l.s4 1966171168
        %v3428 = vunpack.c.0.s8 %v3427
        %v3429 = vlaneseq
        %v3430 = vshrl.u32 %v3429, 7
        %v3431 = vsub.s32 %v3428, %v3430
        %v3432 = vrot.slane %v3404, %v3431
        %v3433 = vcombine.high %v3411, %v3411
        %v3434 = vcombine.high %v3418, %v3418
        %v3435 = vcombine.high %v3425, %v3425
        %v3436 = vcombine.high %v3432, %v3432
        %3445 = vst [vmem:[%s210 + $0x4] sm:$0x1] %v3411
        %3446 = vst [vmem:[%s210 + $0xc] sm:$0x1] %v3425
        %3447 = vst [vmem:[%s210 + $0x14] sm:$0x1] %v3433
        %3448 = vst [vmem:[%s210 + $0x1c] sm:$0x1] %v3435
        %3449 = vst [vmem:[%s210 + $0x24] sm:$0x1] %v3418
        %3450 = vst [vmem:[%s210 + $0x2c] sm:$0x1] %v3432
        %3451 = vst [vmem:[%s210 + $0x34] sm:$0x1] %v3434
        %3452 = vst [vmem:[%s210 + $0x3c] sm:$0x1] %v3436
        %v3454 = vcombine.high %v3110, %v3110
        %v3456 = vunpack.c.l.s4 1966171168
        %v3457 = vunpack.c.0.s8 %v3456
        %v3458 = vlaneseq
        %v3459 = vshrl.u32 %v3458, 7
        %v3460 = vsub.s32 %v3457, %v3459
        %v3461 = vrot.slane %v3110, %v3460
        %v3463 = vunpack.c.l.s4 1966171168
        %v3464 = vunpack.c.0.s8 %v3463
        %v3465 = vlaneseq
        %v3466 = vshrl.u32 %v3465, 7
        %v3467 = vsub.s32 %v3464, %v3466
        %v3468 = vrot.slane %v3454, %v3467
        %v3469 = vcombine.high %v3461, %v3461
        %v3470 = vcombine.high %v3468, %v3468
        %v3472 = vunpack.c.l.s4 1966171168
        %v3473 = vunpack.c.0.s8 %v3472
        %v3474 = vlaneseq
        %v3475 = vshrl.u32 %v3474, 7
        %v3476 = vsub.s32 %v3473, %v3475
        %v3477 = vrot.slane %v3461, %v3476
        %v3479 = vunpack.c.l.s4 1966171168
        %v3480 = vunpack.c.0.s8 %v3479
        %v3481 = vlaneseq
        %v3482 = vshrl.u32 %v3481, 7
        %v3483 = vsub.s32 %v3480, %v3482
        %v3484 = vrot.slane %v3468, %v3483
        %v3486 = vunpack.c.l.s4 1966171168
        %v3487 = vunpack.c.0.s8 %v3486
        %v3488 = vlaneseq
        %v3489 = vshrl.u32 %v3488, 7
        %v3490 = vsub.s32 %v3487, %v3489
        %v3491 = vrot.slane %v3469, %v3490
        %v3493 = vunpack.c.l.s4 1966171168
        %v3494 = vunpack.c.0.s8 %v3493
        %v3495 = vlaneseq
        %v3496 = vshrl.u32 %v3495, 7
        %v3497 = vsub.s32 %v3494, %v3496
        %v3498 = vrot.slane %v3470, %v3497
        %v3499 = vcombine.high %v3477, %v3477
        %v3500 = vcombine.high %v3484, %v3484
        %v3501 = vcombine.high %v3491, %v3491
        %v3502 = vcombine.high %v3498, %v3498
        %3511 = vst [vmem:[%s210 + $0x5] sm:$0x1] %v3477
        %3512 = vst [vmem:[%s210 + $0xd] sm:$0x1] %v3491
        %3513 = vst [vmem:[%s210 + $0x15] sm:$0x1] %v3499
        %3514 = vst [vmem:[%s210 + $0x1d] sm:$0x1] %v3501
        %3515 = vst [vmem:[%s210 + $0x25] sm:$0x1] %v3484
        %3516 = vst [vmem:[%s210 + $0x2d] sm:$0x1] %v3498
        %3517 = vst [vmem:[%s210 + $0x35] sm:$0x1] %v3500
        %3518 = vst [vmem:[%s210 + $0x3d] sm:$0x1] %v3502
        %v3520 = vcombine.high %v3115, %v3115
        %v3522 = vunpack.c.l.s4 1966171168
        %v3523 = vunpack.c.0.s8 %v3522
        %v3524 = vlaneseq
        %v3525 = vshrl.u32 %v3524, 7
        %v3526 = vsub.s32 %v3523, %v3525
        %v3527 = vrot.slane %v3115, %v3526
        %v3529 = vunpack.c.l.s4 1966171168
        %v3530 = vunpack.c.0.s8 %v3529
        %v3531 = vlaneseq
        %v3532 = vshrl.u32 %v3531, 7
        %v3533 = vsub.s32 %v3530, %v3532
        %v3534 = vrot.slane %v3520, %v3533
        %v3535 = vcombine.high %v3527, %v3527
        %v3536 = vcombine.high %v3534, %v3534
        %v3538 = vunpack.c.l.s4 1966171168
        %v3539 = vunpack.c.0.s8 %v3538
        %v3540 = vlaneseq
        %v3541 = vshrl.u32 %v3540, 7
        %v3542 = vsub.s32 %v3539, %v3541
        %v3543 = vrot.slane %v3527, %v3542
        %v3545 = vunpack.c.l.s4 1966171168
        %v3546 = vunpack.c.0.s8 %v3545
        %v3547 = vlaneseq
        %v3548 = vshrl.u32 %v3547, 7
        %v3549 = vsub.s32 %v3546, %v3548
        %v3550 = vrot.slane %v3534, %v3549
        %v3552 = vunpack.c.l.s4 1966171168
        %v3553 = vunpack.c.0.s8 %v3552
        %v3554 = vlaneseq
        %v3555 = vshrl.u32 %v3554, 7
        %v3556 = vsub.s32 %v3553, %v3555
        %v3557 = vrot.slane %v3535, %v3556
        %v3559 = vunpack.c.l.s4 1966171168
        %v3560 = vunpack.c.0.s8 %v3559
        %v3561 = vlaneseq
        %v3562 = vshrl.u32 %v3561, 7
        %v3563 = vsub.s32 %v3560, %v3562
        %v3564 = vrot.slane %v3536, %v3563
        %v3565 = vcombine.high %v3543, %v3543
        %v3566 = vcombine.high %v3550, %v3550
        %v3567 = vcombine.high %v3557, %v3557
        %v3568 = vcombine.high %v3564, %v3564
        %3577 = vst [vmem:[%s210 + $0x6] sm:$0x1] %v3543
        %3578 = vst [vmem:[%s210 + $0xe] sm:$0x1] %v3557
        %3579 = vst [vmem:[%s210 + $0x16] sm:$0x1] %v3565
        %3580 = vst [vmem:[%s210 + $0x1e] sm:$0x1] %v3567
        %3581 = vst [vmem:[%s210 + $0x26] sm:$0x1] %v3550
        %3582 = vst [vmem:[%s210 + $0x2e] sm:$0x1] %v3564
        %3583 = vst [vmem:[%s210 + $0x36] sm:$0x1] %v3566
        %3584 = vst [vmem:[%s210 + $0x3e] sm:$0x1] %v3568
        %v3586 = vcombine.high %v3120, %v3120
        %v3588 = vunpack.c.l.s4 1966171168
        %v3589 = vunpack.c.0.s8 %v3588
        %v3590 = vlaneseq
        %v3591 = vshrl.u32 %v3590, 7
        %v3592 = vsub.s32 %v3589, %v3591
        %v3593 = vrot.slane %v3120, %v3592
        %v3595 = vunpack.c.l.s4 1966171168
        %v3596 = vunpack.c.0.s8 %v3595
        %v3597 = vlaneseq
        %v3598 = vshrl.u32 %v3597, 7
        %v3599 = vsub.s32 %v3596, %v3598
        %v3600 = vrot.slane %v3586, %v3599
        %v3601 = vcombine.high %v3593, %v3593
        %v3602 = vcombine.high %v3600, %v3600
        %v3604 = vunpack.c.l.s4 1966171168
        %v3605 = vunpack.c.0.s8 %v3604
        %v3606 = vlaneseq
        %v3607 = vshrl.u32 %v3606, 7
        %v3608 = vsub.s32 %v3605, %v3607
        %v3609 = vrot.slane %v3593, %v3608
        %v3611 = vunpack.c.l.s4 1966171168
        %v3612 = vunpack.c.0.s8 %v3611
        %v3613 = vlaneseq
        %v3614 = vshrl.u32 %v3613, 7
        %v3615 = vsub.s32 %v3612, %v3614
        %v3616 = vrot.slane %v3600, %v3615
        %v3618 = vunpack.c.l.s4 1966171168
        %v3619 = vunpack.c.0.s8 %v3618
        %v3620 = vlaneseq
        %v3621 = vshrl.u32 %v3620, 7
        %v3622 = vsub.s32 %v3619, %v3621
        %v3623 = vrot.slane %v3601, %v3622
        %v3625 = vunpack.c.l.s4 1966171168
        %v3626 = vunpack.c.0.s8 %v3625
        %v3627 = vlaneseq
        %v3628 = vshrl.u32 %v3627, 7
        %v3629 = vsub.s32 %v3626, %v3628
        %v3630 = vrot.slane %v3602, %v3629
        %v3631 = vcombine.high %v3609, %v3609
        %v3632 = vcombine.high %v3616, %v3616
        %v3633 = vcombine.high %v3623, %v3623
        %v3634 = vcombine.high %v3630, %v3630
        %3643 = vst [vmem:[%s210 + $0x7] sm:$0x1] %v3609
        %3644 = vst [vmem:[%s210 + $0xf] sm:$0x1] %v3623
        %3645 = vst [vmem:[%s210 + $0x17] sm:$0x1] %v3631
        %3646 = vst [vmem:[%s210 + $0x1f] sm:$0x1] %v3633
        %3647 = vst [vmem:[%s210 + $0x27] sm:$0x1] %v3616
        %3648 = vst [vmem:[%s210 + $0x2f] sm:$0x1] %v3630
        %3649 = vst [vmem:[%s210 + $0x37] sm:$0x1] %v3632
        %3650 = vst [vmem:[%s210 + $0x3f] sm:$0x1] %v3634
        %p3651 = scmp.eq.s32.totalorder %s22, 2
        // Predicated region
        $region244: #{char_lstm_forward.1} parent=31 // pred_check
          %p3652 = pneg %p3651
        $region245: #{char_lstm_forward.1} parent=31 // pred_check_branch
          %3654 = sbr.rel (%p3652) target = $region247
        $region246: #{char_lstm_forward.1} parent=31 // pred_region
          %v3655 = vld [vmem:[#allocation5] sm:$0xff]
          %3656 = vst [vmem:[%s9] sm:$0xff] %v3655
          %v3657 = vld [vmem:[#allocation6] sm:$0xff]
          %3658 = vst [vmem:[%s10] sm:$0xff] %v3657
        $region247: #{char_lstm_forward.1} parent=31 // pred_fallthru
          _
        %s3659 = sand.u32 %s98, 1
        %s3660 = sand.u32 %s98, 1
        %s3661 = smul.addr %s3660, 64
        %s3662 = scalar_lea.vmem [#allocation9], %s3661
        // Predicated region
        $region248: #{char_lstm_forward.1} parent=31 // pred_check
          %p3663 = pneg %p108
        $region249: #{char_lstm_forward.1} parent=31 // pred_check_branch
          %3665 = sbr.rel (%p3663) target = $region251
        $region250: #{char_lstm_forward.1} parent=31 // pred_region
          %s3666 = smul.addr %s22, 8
          %s3667 = scalar_lea.vmem %s8, %s3666
          // Predicated region
          $region252: #{char_lstm_forward.1} parent=250 // pred_check
            _
          $region253: #{char_lstm_forward.1} parent=250 // pred_check_branch
            %3669 = sbr.rel (0) target = $region255
          $region254: #{char_lstm_forward.1} parent=250 // pred_region
            // Predicated region
            $region256: #{char_lstm_forward.1} parent=254 // pred_check
              _
            $region257: #{char_lstm_forward.1} parent=254 // pred_check_branch
              %3671 = sbr.rel (0) target = $region259
            $region258: #{char_lstm_forward.1} parent=254 // pred_region
              // Predicated region
              $region271: #{char_lstm_forward.1} parent=258 // pred_check
                _
              $region272: #{char_lstm_forward.1} parent=258 // pred_check_branch
                %3701 = sbr.rel (0) target = $region274
              $region273: #{char_lstm_forward.1} parent=258 // pred_region
                loop: start=0, step=1, limit=1
                $region275: #{char_lstm_forward.1} parent=273 // loop_pre_header
                  _
                $region276: #{char_lstm_forward.1} parent=273 // loop_header
                  %s3703 = sphi 0, %s3707
                  %p3704 = scmp.ge.s32.totalorder %s3703, 1
                  %s3708 = sphi %s3662, %s3662
                  %s3709 = sphi %s3667, %s3667
                $region277: #{char_lstm_forward.1} parent=273 // loop_header_branch
                  %3706 = sbr.rel (%p3704) target = $region281
                $region278: #{char_lstm_forward.1} parent=273 // loop_body
                  %v3710 = vld [vmem:[%s3708] sm:$0xff]
                  %3711 = vst [vmem:[%s3709] sm:$0xff] %v3710
                  %v3712 = vld [vmem:[%s3708 + $0x8] sm:$0xff]
                  %3713 = vst [vmem:[%s3709 + $0x18] sm:$0xff] %v3712
                  %v3714 = vld [vmem:[%s3708 + $0x10] sm:$0xff]
                  %3715 = vst [vmem:[%s3709 + $0x30] sm:$0xff] %v3714
                  %v3716 = vld [vmem:[%s3708 + $0x18] sm:$0xff]
                  %3717 = vst [vmem:[%s3709 + $0x48] sm:$0xff] %v3716
                  %v3718 = vld [vmem:[%s3708 + $0x20] sm:$0xff]
                  %3719 = vst [vmem:[%s3709 + $0x60] sm:$0xff] %v3718
                  %v3720 = vld [vmem:[%s3708 + $0x28] sm:$0xff]
                  %3721 = vst [vmem:[%s3709 + $0x78] sm:$0xff] %v3720
                  %v3722 = vld [vmem:[%s3708 + $0x30] sm:$0xff]
                  %3723 = vst [vmem:[%s3709 + $0x90] sm:$0xff] %v3722
                  %v3724 = vld [vmem:[%s3708 + $0x38] sm:$0xff]
                  %3725 = vst [vmem:[%s3709 + $0xa8] sm:$0xff] %v3724
                $region279: #{char_lstm_forward.1} parent=273 // loop_footer
                  %s3707 = sadd.s32 1, %s3703
                $region280: #{char_lstm_forward.1} parent=273 // loop_footer_branch
                  %3702 = sbr.rel target = $region276
                $region281: #{char_lstm_forward.1} parent=273 // loop_exit
                  _
              $region274: #{char_lstm_forward.1} parent=258 // pred_fallthru
                _
              // Predicated region
              $region282: #{char_lstm_forward.1} parent=258 // pred_check
                _
              $region283: #{char_lstm_forward.1} parent=258 // pred_check_branch
                %3727 = sbr.rel target = $region285
              $region284: #{char_lstm_forward.1} parent=258 // pred_region
                _
              $region285: #{char_lstm_forward.1} parent=258 // pred_fallthru
                _
            $region259: #{char_lstm_forward.1} parent=254 // pred_fallthru
              _
            // Predicated region
            $region260: #{char_lstm_forward.1} parent=254 // pred_check
              _
            $region261: #{char_lstm_forward.1} parent=254 // pred_check_branch
              %3673 = sbr.rel target = $region263
            $region262: #{char_lstm_forward.1} parent=254 // pred_region
              %s3675 = ssub.s32 256, 1
              loop: start=0, step=1, limit=1
              $region264: #{char_lstm_forward.1} parent=262 // loop_pre_header
                _
              $region265: #{char_lstm_forward.1} parent=262 // loop_header
                %s3677 = sphi 0, %s3681
                %p3678 = scmp.ge.s32.totalorder %s3677, 1
                %s3682 = sphi %s3662, %s3662
                %s3683 = sphi %s3667, %s3667
              $region266: #{char_lstm_forward.1} parent=262 // loop_header_branch
                %3680 = sbr.rel (%p3678) target = $region270
              $region267: #{char_lstm_forward.1} parent=262 // loop_body
                %v3684 = vld [vmem:[%s3682] sm:%s3675]
                %3685 = vst [vmem:[%s3683] sm:%s3675] %v3684
                %v3686 = vld [vmem:[%s3682 + $0x8] sm:%s3675]
                %3687 = vst [vmem:[%s3683 + $0x18] sm:%s3675] %v3686
                %v3688 = vld [vmem:[%s3682 + $0x10] sm:%s3675]
                %3689 = vst [vmem:[%s3683 + $0x30] sm:%s3675] %v3688
                %v3690 = vld [vmem:[%s3682 + $0x18] sm:%s3675]
                %3691 = vst [vmem:[%s3683 + $0x48] sm:%s3675] %v3690
                %v3692 = vld [vmem:[%s3682 + $0x20] sm:%s3675]
                %3693 = vst [vmem:[%s3683 + $0x60] sm:%s3675] %v3692
                %v3694 = vld [vmem:[%s3682 + $0x28] sm:%s3675]
                %3695 = vst [vmem:[%s3683 + $0x78] sm:%s3675] %v3694
                %v3696 = vld [vmem:[%s3682 + $0x30] sm:%s3675]
                %3697 = vst [vmem:[%s3683 + $0x90] sm:%s3675] %v3696
                %v3698 = vld [vmem:[%s3682 + $0x38] sm:%s3675]
                %3699 = vst [vmem:[%s3683 + $0xa8] sm:%s3675] %v3698
              $region268: #{char_lstm_forward.1} parent=262 // loop_footer
                %s3681 = sadd.s32 1, %s3677
              $region269: #{char_lstm_forward.1} parent=262 // loop_footer_branch
                %3676 = sbr.rel target = $region265
              $region270: #{char_lstm_forward.1} parent=262 // loop_exit
                _
            $region263: #{char_lstm_forward.1} parent=254 // pred_fallthru
              _
          $region255: #{char_lstm_forward.1} parent=250 // pred_fallthru
            _
          %3728 = vnop
        $region251: #{char_lstm_forward.1} parent=31 // pred_fallthru
          _
        // Predicated region
        $region286: #{char_lstm_forward.1} parent=31 // pred_check
          %p3729 = pneg %p129
        $region287: #{char_lstm_forward.1} parent=31 // pred_check_branch
          %3731 = sbr.rel (%p3729) target = $region289
        $region288: #{char_lstm_forward.1} parent=31 // pred_region
          _
        $region289: #{char_lstm_forward.1} parent=31 // pred_fallthru
          _
        // Predicated region
        $region290: #{char_lstm_forward.1} parent=31 // pred_check
          %p3732 = pneg %p150
        $region291: #{char_lstm_forward.1} parent=31 // pred_check_branch
          %3734 = sbr.rel (%p3732) target = $region293
        $region292: #{char_lstm_forward.1} parent=31 // pred_region
          _
        $region293: #{char_lstm_forward.1} parent=31 // pred_fallthru
          _
        // Predicated region
        $region294: #{char_lstm_forward.1} parent=31 // pred_check
          %p3735 = pneg %p129
        $region295: #{char_lstm_forward.1} parent=31 // pred_check_branch
          %3737 = sbr.rel (%p3735) target = $region297
        $region296: #{char_lstm_forward.1} parent=31 // pred_region
          _
        $region297: #{char_lstm_forward.1} parent=31 // pred_fallthru
          _
        // Predicated region
        $region298: #{char_lstm_forward.1} parent=31 // pred_check
          %p3738 = pneg %p150
        $region299: #{char_lstm_forward.1} parent=31 // pred_check_branch
          %3740 = sbr.rel (%p3738) target = $region301
        $region300: #{char_lstm_forward.1} parent=31 // pred_region
          _
        $region301: #{char_lstm_forward.1} parent=31 // pred_fallthru
          _
      $region32: #{char_lstm_forward.1} parent=5 // pred_fallthru
        _
      %p3741 = scmp.le.s32.totalorder 2, %s17
      // Predicated region
      $region302: #{char_lstm_forward.1} parent=5 // pred_check
        %p3742 = pneg %p3741
      $region303: #{char_lstm_forward.1} parent=5 // pred_check_branch
        %3744 = sbr.rel (%p3742) target = $region305
      $region304: #{char_lstm_forward.1} parent=5 // pred_region
        %s3745 = ssub.s32 %s17, 2
        // Predicated region
        $region306: #{char_lstm_forward.1} parent=304 // pred_check
          %p3746 = pneg %p114
        $region307: #{char_lstm_forward.1} parent=304 // pred_check_branch
          %3748 = sbr.rel (%p3746) target = $region309
        $region308: #{char_lstm_forward.1} parent=304 // pred_region
          %s3749 = sand.u32 %s99, 1
          %s3750 = sand.u32 %s99, 1
          %s3751 = smul.addr %s3750, 64
          %s3752 = scalar_lea.vmem [#allocation9], %s3751
        $region309: #{char_lstm_forward.1} parent=304 // pred_fallthru
          _
      $region305: #{char_lstm_forward.1} parent=5 // pred_fallthru
        _
    $region6: #{char_lstm_forward.1} parent=1 // loop_footer
      %s21 = sadd.s32 1, %s17
    $region7: #{char_lstm_forward.1} parent=1 // loop_footer_branch
      %16 = sbr.rel target = $region3
    $region8: #{char_lstm_forward.1} parent=1 // loop_exit
      _

</llo_original>
